<compile_context>
chip_gen: v6e
topology: v6e:2x2x1
jax: 0.10.0
libtpu: 0.0.40
codegen_flags: <defaults>
</compile_context>

<pallas_src>
import jax
import jax.numpy as jnp
from jax.experimental import pallas as pl
from jax.experimental.pallas import tpu as pltpu

D = 32            # embedding dim            (module default: 100)
HID = 64          # logical-op hidden dim    (module default: 200)
DP = 128          # padded embedding dim  (lane-aligned)
HP = 256          # padded hidden dim     (lane-aligned)
NE = 16           # number of entities
NR = 8            # number of relations
R = 16            # number of rules (each with exactly 2 body relations)
P = 16            # grounded (h, t) entity pairs per rule
RB = 16           # rules per kernel block; RB == R -> grid of 1 at toy size
OUT_LANES = 128   # lane-dense output width (raw weight broadcast across lanes)


def _xavier(key, shape):
    fan_out, fan_in = shape
    bound = (6.0 / (fan_in + fan_out)) ** 0.5
    return jax.random.uniform(key, shape, jnp.float32, -bound, bound)


def rule_weight_kernel(head_idx_ref, body1_idx_ref, body2_idx_ref,
                       ph_ref, pt_ref,
                       ent_ref, head_tbl_ref, body_tbl_ref,
                       w1t_ref, w2t_ref, w3t_ref, bias_ref,
                       out_ref):
    f32 = jnp.float32
    RPB = RB * P

    # ---- fused head gather: one-hot (RB, NR) @ [norm|trans] (NR, 2*DP) ------
    iota_rel = jax.lax.broadcasted_iota(jnp.int32, (RB, NR), 1)
    hd = jnp.minimum(head_idx_ref[...], NR - 1)           # torch: min(rel, max_idx)
    oh_head = (hd == iota_rel).astype(f32)                # (RB, NR)
    hnt = jnp.dot(oh_head, head_tbl_ref[...], preferred_element_type=f32)
    hn = hnt[:, :DP]                                      # head normal vec
    ht = hnt[:, DP:]                                      # head translation vec

    # ---- fused body gather: two-hot (RB, 2*NR) @ stacked table (2*NR, 4*DP) -
    # rows [0, NR)  of the table hold [n|t|0|0]; rows [NR, 2*NR) hold [0|0|n|t],
    # so x = [n1 | t1 | n2 | t2] falls out of ONE matmul.
    iota2 = jax.lax.broadcasted_iota(jnp.int32, (RB, 2 * NR), 1)
    b1i = jnp.minimum(body1_idx_ref[...], NR - 1)
    b2i = jnp.minimum(body2_idx_ref[...], NR - 1)
    oh_body = (b1i == iota2).astype(f32) + (b2i == iota2 - NR).astype(f32)
    x = jnp.dot(oh_body, body_tbl_ref[...], preferred_element_type=f32)  # (RB, 4*DP)

    # ---- logical operator (double_layer MLP), plain (M,K)x(K,N) matmuls -----
    b1v = bias_ref[:, :HP]
    b2v = bias_ref[:, HP:2 * HP]
    b3v = bias_ref[:, 2 * HP:]
    h1 = jnp.maximum(
        jnp.dot(x, w1t_ref[...], preferred_element_type=f32) + b1v, 0.0)
    h2 = jnp.maximum(
        jnp.dot(h1, w2t_ref[...], preferred_element_type=f32) + b2v, 0.0)
    nt = jnp.dot(h2, w3t_ref[...], preferred_element_type=f32) + b3v     # (RB, 2*DP)
    n_raw = nt[:, :DP]
    t_raw = nt[:, DP:]

    # EUP normalizations (rsqrt / reciprocal) instead of VPU divides.
    n_ss = jnp.sum(n_raw * n_raw, axis=-1, keepdims=True)
    bn = n_raw * jax.lax.rsqrt(jnp.maximum(n_ss, 1e-24))   # == n / max(||n||, 1e-12)
    t_ss = jnp.sum(t_raw * t_raw, axis=-1, keepdims=True)
    bt = t_raw * pl.reciprocal(jnp.sqrt(t_ss) + 1e-10)     # == t / (||t|| + 1e-10)
    c = ht - bt                                            # (RB, DP)

    # ---- entity-pair differences: d = he - te via ONE one-hot-diff matmul ---
    iota_ent = jax.lax.broadcasted_iota(jnp.int32, (RPB, NE), 1)
    ph = jnp.minimum(ph_ref[...], NE - 1)
    pt = jnp.minimum(pt_ref[...], NE - 1)
    doh = (ph == iota_ent).astype(f32) - (pt == iota_ent).astype(f32)    # (RPB, NE)
    d = jnp.dot(doh, ent_ref[...], preferred_element_type=f32)           # (RPB, DP)

    # ---- per-rule -> per-pair broadcast: ONE matmul on stacked [bn|hn|c] ----
    pair_i = jax.lax.broadcasted_iota(jnp.int32, (RPB, RB), 0)
    lo = jax.lax.broadcasted_iota(jnp.int32, (RPB, RB), 1) * P
    rep = jnp.logical_and(pair_i >= lo, pair_i < lo + P).astype(f32)     # (RPB, RB)
    bhc = jnp.concatenate([bn, hn, c], axis=-1)                          # (RB, 3*DP)
    bhc_p = jnp.dot(rep, bhc, preferred_element_type=f32)                # (RPB, 3*DP)
    bn_p = bhc_p[:, :DP]
    hn_p = bhc_p[:, DP:2 * DP]
    c_p = bhc_p[:, 2 * DP:]

    # p_head - p_body == (d.bn) bn - (d.hn) hn + (ht - bt)
    a = jnp.sum(d * bn_p, axis=-1, keepdims=True)
    b = jnp.sum(d * hn_p, axis=-1, keepdims=True)
    v = a * bn_p - b * hn_p + c_p                                        # (RPB, DP)

    # ---- per-rule mean over the P pairs of squared-L2 distance --------------
    pair_j = jax.lax.broadcasted_iota(jnp.int32, (RB, RPB), 1)
    lo2 = jax.lax.broadcasted_iota(jnp.int32, (RB, RPB), 0) * P
    repT = jnp.logical_and(pair_j >= lo2, pair_j < lo2 + P).astype(f32)  # (RB, RPB)
    per_rule = jnp.dot(repT, v * v, preferred_element_type=f32)          # (RB, DP)
    w = -jnp.sum(per_rule, axis=-1, keepdims=True) * (1.0 / P)           # (RB, 1)

    # Lane-dense unmasked store; softmax over ALL rules happens in the wrapper.
    out_ref[...] = jnp.broadcast_to(w, (RB, OUT_LANES))


def relation_rule_embedding_forward(params, rules_head, rules_body,
                                    pair_heads, pair_tails):
    (ent_emb, rel_norm, rel_trans, w1, b1, w2, b2, w3, b3) = params
    f32 = jnp.float32

    # ---- parameter-only layout plumbing (data-independent) -----------------
    def pad_last(a, target):
        return jnp.pad(a, ((0, 0), (0, target - a.shape[-1])))

    ent_p = pad_last(ent_emb, DP)                                 # (NE, DP)
    rn_p = pad_last(rel_norm, DP)                                 # (NR, DP)
    rt_p = pad_last(rel_trans, DP)                                # (NR, DP)

    head_tbl = jnp.concatenate([rn_p, rt_p], axis=-1)             # (NR, 2*DP)
    z2 = jnp.zeros((NR, 2 * DP), f32)
    body_tbl = jnp.concatenate([
        jnp.concatenate([rn_p, rt_p, z2], axis=-1),               # body relation 1 rows
        jnp.concatenate([z2, rn_p, rt_p], axis=-1),               # body relation 2 rows
    ], axis=0)                                                    # (2*NR, 4*DP)

    # Pre-transposed, zero-padded MLP weights: real columns of w1 scatter into
    # the 4 lane-aligned DP segments of the padded [n1|t1|n2|t2] input.
    w1t = jnp.zeros((4 * DP, HP), f32)
    for s in range(4):
        w1t = w1t.at[s * DP:s * DP + D, :HID].set(w1[:, s * D:(s + 1) * D].T)
    w2t = jnp.zeros((HP, HP), f32).at[:HID, :HID].set(w2.T)
    w3t = jnp.zeros((HP, 2 * DP), f32)
    w3t = w3t.at[:HID, :D].set(w3[:D].T)                          # n-part columns
    w3t = w3t.at[:HID, DP:DP + D].set(w3[D:].T)                   # t-part columns

    # Packed biases: [b1(HP) | b2(HP) | b3 laid out as [n(DP) | t(DP)]].
    biases = jnp.zeros((1, 2 * HP + 2 * DP), f32)
    biases = biases.at[0, :HID].set(b1)
    biases = biases.at[0, HP:HP + HID].set(b2)
    biases = biases.at[0, 2 * HP:2 * HP + D].set(b3[:D])
    biases = biases.at[0, 2 * HP + DP:2 * HP + DP + D].set(b3[D:])

    head_idx = rules_head.astype(jnp.int32).reshape(R, 1)
    body1_idx = rules_body[:, 0].astype(jnp.int32).reshape(R, 1)
    body2_idx = rules_body[:, 1].astype(jnp.int32).reshape(R, 1)
    ph = pair_heads.astype(jnp.int32).reshape(R * P, 1)
    pt = pair_tails.astype(jnp.int32).reshape(R * P, 1)

    n_blocks = R // RB
    RPB = RB * P
    full = lambda shape: pl.BlockSpec(shape, lambda i: (0, 0))
    grid_spec = pltpu.PrefetchScalarGridSpec(
        num_scalar_prefetch=0,
        grid=(n_blocks,),
        in_specs=[
            pl.BlockSpec((RB, 1), lambda i: (i, 0)),        # head_idx
            pl.BlockSpec((RB, 1), lambda i: (i, 0)),        # body1_idx
            pl.BlockSpec((RB, 1), lambda i: (i, 0)),        # body2_idx
            pl.BlockSpec((RB * P, 1), lambda i: (i, 0)),    # pair head ids
            pl.BlockSpec((RB * P, 1), lambda i: (i, 0)),    # pair tail ids
            full((NE, DP)),                                 # ent_p
            full((NR, 2 * DP)),                             # head_tbl
            full((2 * NR, 4 * DP)),                         # body_tbl
            full((4 * DP, HP)),                             # w1t
            full((HP, HP)),                                 # w2t
            full((HP, 2 * DP)),                             # w3t
            full((1, 2 * HP + 2 * DP)),                     # packed biases
        ],
        out_specs=pl.BlockSpec((RB, OUT_LANES), lambda i: (i, 0)),
    )

    inputs = (head_idx, body1_idx, body2_idx, ph, pt,
              ent_p, head_tbl, body_tbl, w1t, w2t, w3t, biases)

    flops_per_block = 2 * (
        RB * NR * 2 * DP +        # head gather matmul
        RB * (2 * NR) * 4 * DP +  # body gather matmul
        RB * 4 * DP * HP +        # MLP layer 1
        RB * HP * HP +            # MLP layer 2
        RB * HP * 2 * DP +        # MLP layer 3
        RPB * NE * DP +           # entity-diff gather matmul
        RPB * RB * 3 * DP +       # per-rule -> per-pair broadcast matmul
        RB * RPB * DP             # segment-sum of v*v
    )
    bytes_accessed = sum(int(a.size) * a.dtype.itemsize for a in inputs) \
        + R * OUT_LANES * 4
    cost = pl.CostEstimate(flops=flops_per_block * n_blocks,
                           transcendentals=3 * R,
                           bytes_accessed=bytes_accessed)

    out = pl.pallas_call(
        rule_weight_kernel,
        out_shape=jax.ShapeDtypeStruct((R, OUT_LANES), jnp.float32),
        grid_spec=grid_spec,
        compiler_params=pltpu.CompilerParams(
            dimension_semantics=("parallel",)),
        cost_estimate=cost,
    )(*inputs)

    raw = out[:, 0]                  # (R,) raw rule weights
    return jax.nn.softmax(raw)       # softmax over all rules (wrapper-side)


def reference_forward(params, rules_head, rules_body, pair_heads, pair_tails):
    """Pure-JAX reference mirroring the PyTorch semantics."""
    (ent_emb, rel_norm, rel_trans, w1, b1, w2, b2, w3, b3) = params
    n1 = rel_norm[rules_body[:, 0]]
    t1 = rel_trans[rules_body[:, 0]]
    n2 = rel_norm[rules_body[:, 1]]
    t2 = rel_trans[rules_body[:, 1]]
    x = jnp.concatenate([n1, t1, n2, t2], axis=-1)
    h1 = jax.nn.relu(x @ w1.T + b1)
    h2 = jax.nn.relu(h1 @ w2.T + b2)
    out = h2 @ w3.T + b3
    n_raw, t_raw = out[:, :D], out[:, D:]
    body_norm = n_raw / jnp.maximum(
        jnp.linalg.norm(n_raw, axis=-1, keepdims=True), 1e-12)
    body_trans = t_raw / (jnp.linalg.norm(t_raw, axis=-1, keepdims=True) + 1e-10)

    hn = rel_norm[rules_head][:, None, :]
    ht = rel_trans[rules_head][:, None, :]
    bn = body_norm[:, None, :]
    bt = body_trans[:, None, :]
    he = ent_emb[pair_heads]
    te = ent_emb[pair_tails]

    def proj(e, n):
        return e - jnp.sum(e * n, axis=-1, keepdims=True) * n

    p_head = proj(he, hn) + ht - proj(te, hn)
    p_body = proj(he, bn) + bt - proj(te, bn)
    dist = jnp.sum((p_head - p_body) ** 2, axis=-1)
    weights = -jnp.mean(dist, axis=-1)
    return jax.nn.softmax(weights)


if __name__ == "__main__":
    key = jax.random.PRNGKey(0)
    keys = jax.random.split(key, 12)

    # TransH-style embedding tables.
    ent_emb = jax.random.normal(keys[0], (NE, D), jnp.float32)
    rel_norm = jax.random.normal(keys[1], (NR, D), jnp.float32)
    rel_norm = rel_norm / jnp.linalg.norm(rel_norm, axis=-1, keepdims=True)
    rel_trans = jax.random.normal(keys[2], (NR, D), jnp.float32)

    # Logical-operator MLP parameters (xavier_uniform weights, uniform biases,
    # matching nn.Linear shapes: W is (out_features, in_features)).
    w1 = _xavier(keys[3], (HID, 4 * D))
    w2 = _xavier(keys[4], (HID, HID))
    w3 = _xavier(keys[5], (2 * D, HID))
    b1 = jax.random.uniform(keys[6], (HID,), jnp.float32,
                            -1.0 / (4 * D) ** 0.5, 1.0 / (4 * D) ** 0.5)
    b2 = jax.random.uniform(keys[7], (HID,), jnp.float32,
                            -1.0 / HID ** 0.5, 1.0 / HID ** 0.5)
    b3 = jax.random.uniform(keys[8], (2 * D,), jnp.float32,
                            -1.0 / HID ** 0.5, 1.0 / HID ** 0.5)
    params = (ent_emb, rel_norm, rel_trans, w1, b1, w2, b2, w3, b3)

    # Rules: (head_relation, (body_relation1, body_relation2)); groundings as
    # (h, t) entity pairs per rule.
    rules_head = jax.random.randint(keys[9], (R,), 0, NR)
    rules_body = jax.random.randint(keys[10], (R, 2), 0, NR)
    pair_idx = jax.random.randint(keys[11], (R, P, 2), 0, NE)
    pair_heads = pair_idx[..., 0]
    pair_tails = pair_idx[..., 1]

    result = relation_rule_embedding_forward(
        params, rules_head, rules_body, pair_heads, pair_tails)
    result = jax.block_until_ready(result)

    expected = reference_forward(
        params, rules_head, rules_body, pair_heads, pair_tails)
    assert result.shape == (R,)
    # The fused TransH identity is exact algebra but reassociates float ops vs
    # the naive reference, hence the slightly looser f32 tolerance.
    assert jnp.allclose(result, expected, rtol=1e-3, atol=1e-3), (result, expected)
    assert jnp.allclose(jnp.sum(result), 1.0, atol=1e-5)

    print("KERNEL_OK")
</pallas_src>

<mosaic_0001>
module attributes {stable_mosaic.version = 11 : i64} {
  func.func @rule_weight_kernel(%arg0: i32, %arg1: memref<16x1xi32, #tpu.memory_space<vmem>>, %arg2: memref<16x1xi32, #tpu.memory_space<vmem>>, %arg3: memref<16x1xi32, #tpu.memory_space<vmem>>, %arg4: memref<256x1xi32, #tpu.memory_space<vmem>>, %arg5: memref<256x1xi32, #tpu.memory_space<vmem>>, %arg6: memref<16x128xf32, #tpu.memory_space<vmem>>, %arg7: memref<8x256xf32, #tpu.memory_space<vmem>>, %arg8: memref<16x512xf32, #tpu.memory_space<vmem>>, %arg9: memref<512x256xf32, #tpu.memory_space<vmem>>, %arg10: memref<256x256xf32, #tpu.memory_space<vmem>>, %arg11: memref<256x256xf32, #tpu.memory_space<vmem>>, %arg12: memref<1x768xf32, #tpu.memory_space<vmem>>, %arg13: memref<16x128xf32, #tpu.memory_space<vmem>>) attributes {dimension_semantics = [#tpu.dimension_semantics<parallel>], iteration_bounds = array<i64: 1>, scalar_prefetch = 0 : i64, scratch_operands = 0 : i64, tpu.core_type = #tpu.core_type<tc>, window_params = [{transform_indices = @transform_0, window_bounds = array<i64: 16, 1>}, {transform_indices = @transform_1, window_bounds = array<i64: 16, 1>}, {transform_indices = @transform_2, window_bounds = array<i64: 16, 1>}, {transform_indices = @transform_3, window_bounds = array<i64: 256, 1>}, {transform_indices = @transform_4, window_bounds = array<i64: 256, 1>}, {pipeline_mode = #tpu.pipeline_mode<synchronous>, transform_indices = @transform_5, window_bounds = array<i64: 16, 128>}, {pipeline_mode = #tpu.pipeline_mode<synchronous>, transform_indices = @transform_6, window_bounds = array<i64: 8, 256>}, {pipeline_mode = #tpu.pipeline_mode<synchronous>, transform_indices = @transform_7, window_bounds = array<i64: 16, 512>}, {pipeline_mode = #tpu.pipeline_mode<synchronous>, transform_indices = @transform_8, window_bounds = array<i64: 512, 256>}, {pipeline_mode = #tpu.pipeline_mode<synchronous>, transform_indices = @transform_9, window_bounds = array<i64: 256, 256>}, {pipeline_mode = #tpu.pipeline_mode<synchronous>, transform_indices = @transform_10, window_bounds = array<i64: 256, 256>}, {pipeline_mode = #tpu.pipeline_mode<synchronous>, transform_indices = @transform_11, window_bounds = array<i64: 1, 768>}, {transform_indices = @transform_12, window_bounds = array<i64: 16, 128>}]} {
    %0 = tpu.iota {dimensions = array<i32: 1>} : vector<16x8xi32>
    %c0 = arith.constant 0 : index
    %c0_0 = arith.constant 0 : index
    %1 = vector.load %arg1[%c0, %c0_0] : memref<16x1xi32, #tpu.memory_space<vmem>>, vector<16x1xi32>
    %c7_i32 = arith.constant 7 : i32
    %2 = vector.broadcast %c7_i32 : i32 to vector<16x1xi32>
    %3 = arith.minsi %1, %2 : vector<16x1xi32>
    %4 = vector.broadcast %3 : vector<16x1xi32> to vector<16x8xi32>
    %5 = arith.cmpi eq, %4, %0 : vector<16x8xi32>
    %6 = arith.extui %5 : vector<16x8xi1> to vector<16x8xi32>
    %7 = arith.sitofp %6 : vector<16x8xi32> to vector<16x8xf32>
    %c0_1 = arith.constant 0 : index
    %c0_2 = arith.constant 0 : index
    %8 = vector.load %arg7[%c0_1, %c0_2] : memref<8x256xf32, #tpu.memory_space<vmem>>, vector<8x256xf32>
    %cst = arith.constant dense<0.000000e+00> : vector<16x256xf32>
    %9 = tpu.matmul %7, %8, %cst {dimension_numbers = #tpu.dot_dimension_numbers<[1], [0], [0], [1], [0, 0, 1, 1], [], []>} : vector<16x8xf32>, vector<8x256xf32>, vector<16x256xf32> -> vector<16x256xf32>
    %10 = vector.extract_strided_slice %9 {offsets = [0, 0], sizes = [16, 128], strides = [1, 1]} : vector<16x256xf32> to vector<16x128xf32>
    %11 = vector.extract_strided_slice %9 {offsets = [0, 128], sizes = [16, 128], strides = [1, 1]} : vector<16x256xf32> to vector<16x128xf32>
    %12 = tpu.iota {dimensions = array<i32: 1>} : vector<16x16xi32>
    %c0_3 = arith.constant 0 : index
    %c0_4 = arith.constant 0 : index
    %13 = vector.load %arg2[%c0_3, %c0_4] : memref<16x1xi32, #tpu.memory_space<vmem>>, vector<16x1xi32>
    %c7_i32_5 = arith.constant 7 : i32
    %14 = vector.broadcast %c7_i32_5 : i32 to vector<16x1xi32>
    %15 = arith.minsi %13, %14 : vector<16x1xi32>
    %c0_6 = arith.constant 0 : index
    %c0_7 = arith.constant 0 : index
    %16 = vector.load %arg3[%c0_6, %c0_7] : memref<16x1xi32, #tpu.memory_space<vmem>>, vector<16x1xi32>
    %c7_i32_8 = arith.constant 7 : i32
    %17 = vector.broadcast %c7_i32_8 : i32 to vector<16x1xi32>
    %18 = arith.minsi %16, %17 : vector<16x1xi32>
    %19 = vector.broadcast %15 : vector<16x1xi32> to vector<16x16xi32>
    %20 = arith.cmpi eq, %19, %12 : vector<16x16xi32>
    %21 = arith.extui %20 : vector<16x16xi1> to vector<16x16xi32>
    %22 = arith.sitofp %21 : vector<16x16xi32> to vector<16x16xf32>
    %c8_i32 = arith.constant 8 : i32
    %23 = vector.broadcast %c8_i32 : i32 to vector<16x16xi32>
    %24 = arith.subi %12, %23 : vector<16x16xi32>
    %25 = vector.broadcast %18 : vector<16x1xi32> to vector<16x16xi32>
    %26 = arith.cmpi eq, %25, %24 : vector<16x16xi32>
    %27 = arith.extui %26 : vector<16x16xi1> to vector<16x16xi32>
    %28 = arith.sitofp %27 : vector<16x16xi32> to vector<16x16xf32>
    %29 = arith.addf %22, %28 : vector<16x16xf32>
    %c0_9 = arith.constant 0 : index
    %c0_10 = arith.constant 0 : index
    %30 = vector.load %arg8[%c0_9, %c0_10] : memref<16x512xf32, #tpu.memory_space<vmem>>, vector<16x512xf32>
    %cst_11 = arith.constant dense<0.000000e+00> : vector<16x512xf32>
    %31 = tpu.matmul %29, %30, %cst_11 {dimension_numbers = #tpu.dot_dimension_numbers<[1], [0], [0], [1], [0, 0, 1, 1], [], []>} : vector<16x16xf32>, vector<16x512xf32>, vector<16x512xf32> -> vector<16x512xf32>
    %c0_12 = arith.constant 0 : index
    %c0_13 = arith.constant 0 : index
    %32 = vector.load %arg12[%c0_12, %c0_13] : memref<1x768xf32, #tpu.memory_space<vmem>>, vector<1x256xf32>
    %c0_14 = arith.constant 0 : index
    %c256 = arith.constant 256 : index
    %33 = vector.load %arg12[%c0_14, %c256] : memref<1x768xf32, #tpu.memory_space<vmem>>, vector<1x256xf32>
    %c0_15 = arith.constant 0 : index
    %c512 = arith.constant 512 : index
    %34 = vector.load %arg12[%c0_15, %c512] : memref<1x768xf32, #tpu.memory_space<vmem>>, vector<1x256xf32>
    %c0_16 = arith.constant 0 : index
    %c0_17 = arith.constant 0 : index
    %35 = vector.load %arg9[%c0_16, %c0_17] : memref<512x256xf32, #tpu.memory_space<vmem>>, vector<512x256xf32>
    %cst_18 = arith.constant dense<0.000000e+00> : vector<16x256xf32>
    %36 = tpu.matmul %31, %35, %cst_18 {dimension_numbers = #tpu.dot_dimension_numbers<[1], [0], [0], [1], [0, 0, 1, 1], [], []>} : vector<16x512xf32>, vector<512x256xf32>, vector<16x256xf32> -> vector<16x256xf32>
    %37 = vector.broadcast %32 : vector<1x256xf32> to vector<16x256xf32>
    %38 = arith.addf %36, %37 : vector<16x256xf32>
    %cst_19 = arith.constant 0.000000e+00 : f32
    %39 = vector.broadcast %cst_19 : f32 to vector<16x256xf32>
    %40 = arith.maximumf %38, %39 : vector<16x256xf32>
    %c0_20 = arith.constant 0 : index
    %c0_21 = arith.constant 0 : index
    %41 = vector.load %arg10[%c0_20, %c0_21] : memref<256x256xf32, #tpu.memory_space<vmem>>, vector<256x256xf32>
    %cst_22 = arith.constant dense<0.000000e+00> : vector<16x256xf32>
    %42 = tpu.matmul %40, %41, %cst_22 {dimension_numbers = #tpu.dot_dimension_numbers<[1], [0], [0], [1], [0, 0, 1, 1], [], []>} : vector<16x256xf32>, vector<256x256xf32>, vector<16x256xf32> -> vector<16x256xf32>
    %43 = vector.broadcast %33 : vector<1x256xf32> to vector<16x256xf32>
    %44 = arith.addf %42, %43 : vector<16x256xf32>
    %cst_23 = arith.constant 0.000000e+00 : f32
    %45 = vector.broadcast %cst_23 : f32 to vector<16x256xf32>
    %46 = arith.maximumf %44, %45 : vector<16x256xf32>
    %c0_24 = arith.constant 0 : index
    %c0_25 = arith.constant 0 : index
    %47 = vector.load %arg11[%c0_24, %c0_25] : memref<256x256xf32, #tpu.memory_space<vmem>>, vector<256x256xf32>
    %cst_26 = arith.constant dense<0.000000e+00> : vector<16x256xf32>
    %48 = tpu.matmul %46, %47, %cst_26 {dimension_numbers = #tpu.dot_dimension_numbers<[1], [0], [0], [1], [0, 0, 1, 1], [], []>} : vector<16x256xf32>, vector<256x256xf32>, vector<16x256xf32> -> vector<16x256xf32>
    %49 = vector.broadcast %34 : vector<1x256xf32> to vector<16x256xf32>
    %50 = arith.addf %48, %49 : vector<16x256xf32>
    %51 = vector.extract_strided_slice %50 {offsets = [0, 0], sizes = [16, 128], strides = [1, 1]} : vector<16x256xf32> to vector<16x128xf32>
    %52 = vector.extract_strided_slice %50 {offsets = [0, 128], sizes = [16, 128], strides = [1, 1]} : vector<16x256xf32> to vector<16x128xf32>
    %53 = arith.mulf %51, %51 : vector<16x128xf32>
    %cst_27 = arith.constant dense<0.000000e+00> : vector<16xf32>
    %54 = vector.multi_reduction <add>, %53, %cst_27 [1] : vector<16x128xf32> to vector<16xf32>
    %55 = vector.shape_cast %54 : vector<16xf32> to vector<16x1xf32>
    %cst_28 = arith.constant 1.000000e-24 : f32
    %56 = vector.broadcast %cst_28 : f32 to vector<16x1xf32>
    %57 = arith.maximumf %55, %56 : vector<16x1xf32>
    %58 = math.rsqrt %57 : vector<16x1xf32>
    %59 = vector.broadcast %58 : vector<16x1xf32> to vector<16x128xf32>
    %60 = arith.mulf %51, %59 : vector<16x128xf32>
    %61 = arith.mulf %52, %52 : vector<16x128xf32>
    %cst_29 = arith.constant dense<0.000000e+00> : vector<16xf32>
    %62 = vector.multi_reduction <add>, %61, %cst_29 [1] : vector<16x128xf32> to vector<16xf32>
    %63 = vector.shape_cast %62 : vector<16xf32> to vector<16x1xf32>
    %64 = math.sqrt %63 : vector<16x1xf32>
    %cst_30 = arith.constant 1.000000e-10 : f32
    %65 = vector.broadcast %cst_30 : f32 to vector<16x1xf32>
    %66 = arith.addf %64, %65 : vector<16x1xf32>
    %67 = tpu.reciprocal %66 : vector<16x1xf32> -> vector<16x1xf32>
    %68 = vector.broadcast %67 : vector<16x1xf32> to vector<16x128xf32>
    %69 = arith.mulf %52, %68 : vector<16x128xf32>
    %70 = arith.subf %11, %69 : vector<16x128xf32>
    %71 = tpu.iota {dimensions = array<i32: 1>} : vector<256x16xi32>
    %c0_31 = arith.constant 0 : index
    %c0_32 = arith.constant 0 : index
    %72 = vector.load %arg4[%c0_31, %c0_32] : memref<256x1xi32, #tpu.memory_space<vmem>>, vector<256x1xi32>
    %c15_i32 = arith.constant 15 : i32
    %73 = vector.broadcast %c15_i32 : i32 to vector<256x1xi32>
    %74 = arith.minsi %72, %73 : vector<256x1xi32>
    %c0_33 = arith.constant 0 : index
    %c0_34 = arith.constant 0 : index
    %75 = vector.load %arg5[%c0_33, %c0_34] : memref<256x1xi32, #tpu.memory_space<vmem>>, vector<256x1xi32>
    %c15_i32_35 = arith.constant 15 : i32
    %76 = vector.broadcast %c15_i32_35 : i32 to vector<256x1xi32>
    %77 = arith.minsi %75, %76 : vector<256x1xi32>
    %78 = vector.broadcast %74 : vector<256x1xi32> to vector<256x16xi32>
    %79 = arith.cmpi eq, %78, %71 : vector<256x16xi32>
    %80 = arith.extui %79 : vector<256x16xi1> to vector<256x16xi32>
    %81 = arith.sitofp %80 : vector<256x16xi32> to vector<256x16xf32>
    %82 = vector.broadcast %77 : vector<256x1xi32> to vector<256x16xi32>
    %83 = arith.cmpi eq, %82, %71 : vector<256x16xi32>
    %84 = arith.extui %83 : vector<256x16xi1> to vector<256x16xi32>
    %85 = arith.sitofp %84 : vector<256x16xi32> to vector<256x16xf32>
    %86 = arith.subf %81, %85 : vector<256x16xf32>
    %c0_36 = arith.constant 0 : index
    %c0_37 = arith.constant 0 : index
    %87 = vector.load %arg6[%c0_36, %c0_37] : memref<16x128xf32, #tpu.memory_space<vmem>>, vector<16x128xf32>
    %cst_38 = arith.constant dense<0.000000e+00> : vector<256x128xf32>
    %88 = tpu.matmul %86, %87, %cst_38 {dimension_numbers = #tpu.dot_dimension_numbers<[1], [0], [0], [1], [0, 0, 1, 1], [], []>} : vector<256x16xf32>, vector<16x128xf32>, vector<256x128xf32> -> vector<256x128xf32>
    %89 = tpu.iota {dimensions = array<i32: 0>} : vector<256x16xi32>
    %90 = tpu.iota {dimensions = array<i32: 1>} : vector<256x16xi32>
    %c16_i32 = arith.constant 16 : i32
    %91 = vector.broadcast %c16_i32 : i32 to vector<256x16xi32>
    %92 = arith.muli %90, %91 : vector<256x16xi32>
    %93 = arith.cmpi sge, %89, %92 : vector<256x16xi32>
    %c16_i32_39 = arith.constant 16 : i32
    %94 = vector.broadcast %c16_i32_39 : i32 to vector<256x16xi32>
    %95 = arith.addi %92, %94 : vector<256x16xi32>
    %96 = arith.cmpi slt, %89, %95 : vector<256x16xi32>
    %97 = arith.andi %93, %96 : vector<256x16xi1>
    %98 = arith.extui %97 : vector<256x16xi1> to vector<256x16xi32>
    %99 = arith.sitofp %98 : vector<256x16xi32> to vector<256x16xf32>
    %100 = tpu.concatenate %60, %10, %70 in 1 : vector<16x128xf32>, vector<16x128xf32>, vector<16x128xf32> -> vector<16x384xf32>
    %cst_40 = arith.constant dense<0.000000e+00> : vector<256x384xf32>
    %101 = tpu.matmul %99, %100, %cst_40 {dimension_numbers = #tpu.dot_dimension_numbers<[1], [0], [0], [1], [0, 0, 1, 1], [], []>} : vector<256x16xf32>, vector<16x384xf32>, vector<256x384xf32> -> vector<256x384xf32>
    %102 = vector.extract_strided_slice %101 {offsets = [0, 0], sizes = [256, 128], strides = [1, 1]} : vector<256x384xf32> to vector<256x128xf32>
    %103 = vector.extract_strided_slice %101 {offsets = [0, 128], sizes = [256, 128], strides = [1, 1]} : vector<256x384xf32> to vector<256x128xf32>
    %104 = vector.extract_strided_slice %101 {offsets = [0, 256], sizes = [256, 128], strides = [1, 1]} : vector<256x384xf32> to vector<256x128xf32>
    %105 = arith.mulf %88, %102 : vector<256x128xf32>
    %cst_41 = arith.constant dense<0.000000e+00> : vector<256xf32>
    %106 = vector.multi_reduction <add>, %105, %cst_41 [1] : vector<256x128xf32> to vector<256xf32>
    %107 = vector.shape_cast %106 : vector<256xf32> to vector<256x1xf32>
    %108 = arith.mulf %88, %103 : vector<256x128xf32>
    %cst_42 = arith.constant dense<0.000000e+00> : vector<256xf32>
    %109 = vector.multi_reduction <add>, %108, %cst_42 [1] : vector<256x128xf32> to vector<256xf32>
    %110 = vector.shape_cast %109 : vector<256xf32> to vector<256x1xf32>
    %111 = vector.broadcast %107 : vector<256x1xf32> to vector<256x128xf32>
    %112 = arith.mulf %111, %102 : vector<256x128xf32>
    %113 = vector.broadcast %110 : vector<256x1xf32> to vector<256x128xf32>
    %114 = arith.mulf %113, %103 : vector<256x128xf32>
    %115 = arith.subf %112, %114 : vector<256x128xf32>
    %116 = arith.addf %115, %104 : vector<256x128xf32>
    %117 = tpu.iota {dimensions = array<i32: 1>} : vector<16x256xi32>
    %118 = tpu.iota {dimensions = array<i32: 0>} : vector<16x256xi32>
    %c16_i32_43 = arith.constant 16 : i32
    %119 = vector.broadcast %c16_i32_43 : i32 to vector<16x256xi32>
    %120 = arith.muli %118, %119 : vector<16x256xi32>
    %121 = arith.cmpi sge, %117, %120 : vector<16x256xi32>
    %c16_i32_44 = arith.constant 16 : i32
    %122 = vector.broadcast %c16_i32_44 : i32 to vector<16x256xi32>
    %123 = arith.addi %120, %122 : vector<16x256xi32>
    %124 = arith.cmpi slt, %117, %123 : vector<16x256xi32>
    %125 = arith.andi %121, %124 : vector<16x256xi1>
    %126 = arith.extui %125 : vector<16x256xi1> to vector<16x256xi32>
    %127 = arith.sitofp %126 : vector<16x256xi32> to vector<16x256xf32>
    %128 = arith.mulf %116, %116 : vector<256x128xf32>
    %cst_45 = arith.constant dense<0.000000e+00> : vector<16x128xf32>
    %129 = tpu.matmul %127, %128, %cst_45 {dimension_numbers = #tpu.dot_dimension_numbers<[1], [0], [0], [1], [0, 0, 1, 1], [], []>} : vector<16x256xf32>, vector<256x128xf32>, vector<16x128xf32> -> vector<16x128xf32>
    %cst_46 = arith.constant dense<0.000000e+00> : vector<16xf32>
    %130 = vector.multi_reduction <add>, %129, %cst_46 [1] : vector<16x128xf32> to vector<16xf32>
    %131 = vector.shape_cast %130 : vector<16xf32> to vector<16x1xf32>
    %cst_47 = arith.constant 0.000000e+00 : f32
    %132 = vector.broadcast %cst_47 : f32 to vector<16x1xf32>
    %133 = arith.subf %132, %131 : vector<16x1xf32>
    %cst_48 = arith.constant 6.250000e-02 : f32
    %134 = vector.broadcast %cst_48 : f32 to vector<16x1xf32>
    %135 = arith.mulf %133, %134 : vector<16x1xf32>
    %136 = vector.shape_cast %135 : vector<16x1xf32> to vector<16x1xf32>
    %137 = vector.broadcast %136 : vector<16x1xf32> to vector<16x128xf32>
    %c0_49 = arith.constant 0 : index
    %c0_50 = arith.constant 0 : index
    %138 = vector.load %arg13[%c0_49, %c0_50] : memref<16x128xf32, #tpu.memory_space<vmem>>, vector<16x128xf32>
    tpu.vector_store %arg13[%c0_49, %c0_50], %137 {strides = array<i32>} : memref<16x128xf32, #tpu.memory_space<vmem>>, vector<16x128xf32>,
    return
  }
  func.func @transform_0(%arg0: i32) -> (i32, i32) {
    %c0_i32 = arith.constant 0 : i32
    %c0_i32_0 = arith.constant 0 : i32
    return %arg0, %c0_i32 : i32, i32
  }
  func.func @transform_1(%arg0: i32) -> (i32, i32) {
    %c0_i32 = arith.constant 0 : i32
    %c0_i32_0 = arith.constant 0 : i32
    return %arg0, %c0_i32 : i32, i32
  }
  func.func @transform_2(%arg0: i32) -> (i32, i32) {
    %c0_i32 = arith.constant 0 : i32
    %c0_i32_0 = arith.constant 0 : i32
    return %arg0, %c0_i32 : i32, i32
  }
  func.func @transform_3(%arg0: i32) -> (i32, i32) {
    %c0_i32 = arith.constant 0 : i32
    %c0_i32_0 = arith.constant 0 : i32
    return %arg0, %c0_i32 : i32, i32
  }
  func.func @transform_4(%arg0: i32) -> (i32, i32) {
    %c0_i32 = arith.constant 0 : i32
    %c0_i32_0 = arith.constant 0 : i32
    return %arg0, %c0_i32 : i32, i32
  }
  func.func @transform_5(%arg0: i32) -> (i32, i32) {
    %c0_i32 = arith.constant 0 : i32
    %c0_i32_0 = arith.constant 0 : i32
    %c0_i32_1 = arith.constant 0 : i32
    return %c0_i32, %c0_i32_0 : i32, i32
  }
  func.func @transform_6(%arg0: i32) -> (i32, i32) {
    %c0_i32 = arith.constant 0 : i32
    %c0_i32_0 = arith.constant 0 : i32
    %c0_i32_1 = arith.constant 0 : i32
    return %c0_i32, %c0_i32_0 : i32, i32
  }
  func.func @transform_7(%arg0: i32) -> (i32, i32) {
    %c0_i32 = arith.constant 0 : i32
    %c0_i32_0 = arith.constant 0 : i32
    %c0_i32_1 = arith.constant 0 : i32
    return %c0_i32, %c0_i32_0 : i32, i32
  }
  func.func @transform_8(%arg0: i32) -> (i32, i32) {
    %c0_i32 = arith.constant 0 : i32
    %c0_i32_0 = arith.constant 0 : i32
    %c0_i32_1 = arith.constant 0 : i32
    return %c0_i32, %c0_i32_0 : i32, i32
  }
  func.func @transform_9(%arg0: i32) -> (i32, i32) {
    %c0_i32 = arith.constant 0 : i32
    %c0_i32_0 = arith.constant 0 : i32
    %c0_i32_1 = arith.constant 0 : i32
    return %c0_i32, %c0_i32_0 : i32, i32
  }
  func.func @transform_10(%arg0: i32) -> (i32, i32) {
    %c0_i32 = arith.constant 0 : i32
    %c0_i32_0 = arith.constant 0 : i32
    %c0_i32_1 = arith.constant 0 : i32
    return %c0_i32, %c0_i32_0 : i32, i32
  }
  func.func @transform_11(%arg0: i32) -> (i32, i32) {
    %c0_i32 = arith.constant 0 : i32
    %c0_i32_0 = arith.constant 0 : i32
    %c0_i32_1 = arith.constant 0 : i32
    return %c0_i32, %c0_i32_0 : i32, i32
  }
  func.func @transform_12(%arg0: i32) -> (i32, i32) {
    %c0_i32 = arith.constant 0 : i32
    %c0_i32_0 = arith.constant 0 : i32
    return %arg0, %c0_i32 : i32, i32
  }
}

</mosaic_0001>

<llo_original>
// kernel: tpu_custom_call.1
$region0: #{tpu_custom_call.1}
  #allocation0 [shape = 'u32[]', space=smem, size = 0x4, offset = 0x4, fixed_abs, tag = 'smem constant byte address 0x4 - core index']
  #allocation1 [shape = 'u32[144,128]{1,0:T(1,128)}', space=vmem, size = 0x12000, scoped, tag = 'internal scratch']
  %s0 = inlined_call_operand.vmem [shape: s32[16,1], index: 0, kind: input, shape index: {}]
  %s1 = inlined_call_operand.vmem [shape: s32[16,1], index: 1, kind: input, shape index: {}]
  %s2 = inlined_call_operand.vmem [shape: s32[16,1], index: 2, kind: input, shape index: {}]
  %s3 = inlined_call_operand.vmem [shape: s32[256,1], index: 3, kind: input, shape index: {}]
  %s4 = inlined_call_operand.vmem [shape: s32[256,1], index: 4, kind: input, shape index: {}]
  %s5 = inlined_call_operand.hbm [shape: f32[16,128], index: 5, kind: input, shape index: {}]
  %s6 = inlined_call_operand.hbm [shape: f32[8,256], index: 6, kind: input, shape index: {}]
  %s7 = inlined_call_operand.vmem [shape: f32[16,512], index: 7, kind: input, shape index: {}]
  %s8 = inlined_call_operand.hbm [shape: f32[512,256], index: 8, kind: input, shape index: {}]
  %s9 = inlined_call_operand.vmem [shape: f32[256,256], index: 9, kind: input, shape index: {}]
  %s10 = inlined_call_operand.hbm [shape: f32[256,256], index: 10, kind: input, shape index: {}]
  %s11 = inlined_call_operand.vmem [shape: f32[1,768], index: 11, kind: input, shape index: {}]
  %s12 = inlined_call_operand.hbm [shape: f32[16,128], index: 12, kind: output, shape index: {}]
  %s13 = sld [smem:[#allocation0]]
  $region74: #{tpu_custom_call.1} parent=0
    _
  %s15 = ssub.s32 1, %s13
  %s16 = scalar_select 0, %s15, %s13
  $region1: #{tpu_custom_call.1} parent=0
    #allocation2 [shape = 'u8[8192]{0}', space=vmem, size = 0x2000, scoped, tag = 'input window, operand 5, single buffered']
    #allocation3 [shape = 's32[1]{0}', space=sflag, size = 0x4, scoped, tag = 'scoped memory for tpu_custom_call.1']
    #allocation4 [shape = 's32[1]{0}', space=sflag, size = 0x4, scoped, tag = 'scoped memory for tpu_custom_call.1']
    #allocation5 [shape = 'u8[8192]{0}', space=vmem, size = 0x2000, scoped, tag = 'input window, operand 6, single buffered']
    #allocation6 [shape = 's32[1]{0}', space=sflag, size = 0x4, scoped, tag = 'scoped memory for tpu_custom_call.1']
    #allocation7 [shape = 'u8[524288]{0}', space=vmem, size = 0x80000, scoped, tag = 'input window, operand 8, single buffered']
    #allocation8 [shape = 'u8[262144]{0}', space=vmem, size = 0x40000, scoped, tag = 'input window, operand 10, single buffered']
    #allocation9 [shape = 's32[1]{0}', space=sflag, size = 0x4, scoped, tag = 'scoped memory for tpu_custom_call.1']
    #allocation10 [shape = 'u8[8192]{0}', space=vmem, size = 0x2000, scoped, tag = 'output window, operand 0, single buffered']
    %17 = vsyncpa [#allocation3], 0
    %18 = vsyncpa [#allocation6], 0
    %19 = vsyncpa [#allocation9], 0
    %20 = vsyncpa [#allocation4], 0
    // Predicated region
    $region2: #{tpu_custom_call.1} parent=1 // pred_check
      _
    $region3: #{tpu_custom_call.1} parent=1 // pred_check_branch
      %22 = sbr.rel (0) target = $region5
    $region4: #{tpu_custom_call.1} parent=1 // pred_region
      _
    $region5: #{tpu_custom_call.1} parent=1 // pred_fallthru
      _
    // Predicated region
    $region6: #{tpu_custom_call.1} parent=1 // pred_check
      _
    $region7: #{tpu_custom_call.1} parent=1 // pred_check_branch
      %24 = sbr.rel (0) target = $region9
    $region8: #{tpu_custom_call.1} parent=1 // pred_region
      _
    $region9: #{tpu_custom_call.1} parent=1 // pred_fallthru
      _
    // Predicated region
    $region10: #{tpu_custom_call.1} parent=1 // pred_check
      _
    $region11: #{tpu_custom_call.1} parent=1 // pred_check_branch
      %26 = sbr.rel (0) target = $region13
    $region12: #{tpu_custom_call.1} parent=1 // pred_region
      _
    $region13: #{tpu_custom_call.1} parent=1 // pred_fallthru
      _
    // Predicated region
    $region14: #{tpu_custom_call.1} parent=1 // pred_check
      _
    $region15: #{tpu_custom_call.1} parent=1 // pred_check_branch
      %28 = sbr.rel (0) target = $region17
    $region16: #{tpu_custom_call.1} parent=1 // pred_region
      _
    $region17: #{tpu_custom_call.1} parent=1 // pred_fallthru
      _
    // Predicated region
    $region18: #{tpu_custom_call.1} parent=1 // pred_check
      _
    $region19: #{tpu_custom_call.1} parent=1 // pred_check_branch
      %30 = sbr.rel (0) target = $region21
    $region20: #{tpu_custom_call.1} parent=1 // pred_region
      _
    $region21: #{tpu_custom_call.1} parent=1 // pred_fallthru
      _
    // Predicated region
    $region22: #{tpu_custom_call.1} parent=1 // pred_check
      _
    $region23: #{tpu_custom_call.1} parent=1 // pred_check_branch
      %32 = sbr.rel (0) target = $region25
    $region24: #{tpu_custom_call.1} parent=1 // pred_region
      %s34 = ssub.s32 256, 256
      %35 = vsyncadd [#allocation3], %s34
      %s36 = sshll.u32 [#allocation2], 4
      %s37 = int_to_ptr.vmem [resolvable:$true] %s36
      %42 = dma.hbm_to_vmem [thread:$0]  %s5, 256, %s37, [#allocation3], 128, 128, 8
    $region25: #{tpu_custom_call.1} parent=1 // pred_fallthru
      _
    // Predicated region
    $region26: #{tpu_custom_call.1} parent=1 // pred_check
      _
    $region27: #{tpu_custom_call.1} parent=1 // pred_check_branch
      %44 = sbr.rel (0) target = $region29
    $region28: #{tpu_custom_call.1} parent=1 // pred_region
      %s46 = ssub.s32 256, 256
      %47 = vsyncadd [#allocation6], %s46
      %s49 = sshll.u32 [#allocation5], 4
      %s50 = int_to_ptr.vmem [resolvable:$true] %s49
      %52 = dma.hbm_to_vmem [thread:$0]  %s6, 256, %s50, [#allocation6]
    $region29: #{tpu_custom_call.1} parent=1 // pred_fallthru
      _
    // Predicated region
    $region30: #{tpu_custom_call.1} parent=1 // pred_check
      _
    $region31: #{tpu_custom_call.1} parent=1 // pred_check_branch
      %54 = sbr.rel (0) target = $region33
    $region32: #{tpu_custom_call.1} parent=1 // pred_region
      _
    $region33: #{tpu_custom_call.1} parent=1 // pred_fallthru
      _
    // Predicated region
    $region34: #{tpu_custom_call.1} parent=1 // pred_check
      _
    $region35: #{tpu_custom_call.1} parent=1 // pred_check_branch
      %56 = sbr.rel (0) target = $region37
    $region36: #{tpu_custom_call.1} parent=1 // pred_region
      %s58 = ssub.s32 16384, 16384
      %59 = vsyncadd [#allocation6], %s58
      %s60 = sshll.u32 [#allocation7], 4
      %s61 = int_to_ptr.vmem [resolvable:$true] %s60
      %66 = dma.hbm_to_vmem [thread:$0]  %s8, 16384, %s61, [#allocation6], 256, 256, 16
    $region37: #{tpu_custom_call.1} parent=1 // pred_fallthru
      _
    // Predicated region
    $region38: #{tpu_custom_call.1} parent=1 // pred_check
      _
    $region39: #{tpu_custom_call.1} parent=1 // pred_check_branch
      %68 = sbr.rel (0) target = $region41
    $region40: #{tpu_custom_call.1} parent=1 // pred_region
      _
    $region41: #{tpu_custom_call.1} parent=1 // pred_fallthru
      _
    // Predicated region
    $region42: #{tpu_custom_call.1} parent=1 // pred_check
      _
    $region43: #{tpu_custom_call.1} parent=1 // pred_check_branch
      %70 = sbr.rel (0) target = $region45
    $region44: #{tpu_custom_call.1} parent=1 // pred_region
      %s72 = ssub.s32 8192, 8192
      %73 = vsyncadd [#allocation9], %s72
      %s74 = sshll.u32 [#allocation8], 4
      %s75 = int_to_ptr.vmem [resolvable:$true] %s74
      %80 = dma.hbm_to_vmem [thread:$0]  %s10, 8192, %s75, [#allocation9], 256, 256, 16
    $region45: #{tpu_custom_call.1} parent=1 // pred_fallthru
      _
    // Predicated region
    $region46: #{tpu_custom_call.1} parent=1 // pred_check
      _
    $region47: #{tpu_custom_call.1} parent=1 // pred_check_branch
      %82 = sbr.rel (0) target = $region49
    $region48: #{tpu_custom_call.1} parent=1 // pred_region
      _
    $region49: #{tpu_custom_call.1} parent=1 // pred_fallthru
      _
    // Predicated region
    $region50: #{tpu_custom_call.1} parent=1 // pred_check
      _
    $region51: #{tpu_custom_call.1} parent=1 // pred_check_branch
      %84 = sbr.rel (0) target = $region53
    $region52: #{tpu_custom_call.1} parent=1 // pred_region
      %85 = dma.done [#allocation3], 256
    $region53: #{tpu_custom_call.1} parent=1 // pred_fallthru
      _
    // Predicated region
    $region54: #{tpu_custom_call.1} parent=1 // pred_check
      _
    $region55: #{tpu_custom_call.1} parent=1 // pred_check_branch
      %87 = sbr.rel (0) target = $region57
    $region56: #{tpu_custom_call.1} parent=1 // pred_region
      %88 = dma.done [#allocation6], 256
    $region57: #{tpu_custom_call.1} parent=1 // pred_fallthru
      _
    // Predicated region
    $region58: #{tpu_custom_call.1} parent=1 // pred_check
      _
    $region59: #{tpu_custom_call.1} parent=1 // pred_check_branch
      %90 = sbr.rel (0) target = $region61
    $region60: #{tpu_custom_call.1} parent=1 // pred_region
      %91 = dma.done [#allocation6], 16384
    $region61: #{tpu_custom_call.1} parent=1 // pred_fallthru
      _
    // Predicated region
    $region62: #{tpu_custom_call.1} parent=1 // pred_check
      _
    $region63: #{tpu_custom_call.1} parent=1 // pred_check_branch
      %93 = sbr.rel (0) target = $region65
    $region64: #{tpu_custom_call.1} parent=1 // pred_region
      %94 = dma.done [#allocation9], 8192
    $region65: #{tpu_custom_call.1} parent=1 // pred_fallthru
      _
    %v95 = vlaneseq
    %v96 = vand.u32 %v95, 127
    %v97 = vld [vmem:[%s0] sm:$0xff]
    %v98 = vld [vmem:[%s0 + $0x8] sm:$0xff]
    %vm99 = vcmp.lt.s32.totalorder %v97, 7
    %v100 = vsel %vm99, %v97, 7
    %vm101 = vcmp.lt.s32.totalorder %v98, 7
    %v102 = vsel %vm101, %v98, 7
    %103 = vset.pattern.permute.xlu0 0
    %104 = vperm.xlu0 %103, %v100
    %v105 = vpop.permute.xlu0 %104
    %106 = vset.pattern.permute.xlu0 0
    %107 = vperm.xlu0 %106, %v102
    %v108 = vpop.permute.xlu0 %107
    %vm109 = vcmp.eq.s32.totalorder %v105, %v96
    %vm110 = vcmp.eq.s32.totalorder %v108, %v96
    %v111 = vsel %vm109, 1, 0
    %v112 = vsel %vm110, 1, 0
    %v113 = vcvt.s32.f32 %v111
    %v114 = vcvt.s32.f32 %v112
    %v115 = vld [vmem:[#allocation5] sm:$0xff]
    %v116 = vld [vmem:[#allocation5 + $0x8] sm:$0xff]
    %vm117 = vcmask 64512
    %v119 = vsel %vm117, %v113, 0
    %v122 = vsel %vm117, %v114, 0
    %124 = vmatprep.subr.mxu0 0.0
    %125 = vmatpush1.msra.mxu0 0.0
    %126 = vmatprep.subr.mxu0 0.0
    %127 = vmatpush1.msra.mxu0 0.0
    %128 = vmatprep.subr.mxu0 0.0
    %129 = vmatpush1.msra.mxu0 0.0
    %130 = vmatprep.subr.mxu0 0.0
    %131 = vmatpush1.msra.mxu0 0.0
    %132 = vmatprep.subr.mxu0 0.0
    %133 = vmatpush1.msra.mxu0 0.0
    %134 = vmatprep.subr.mxu0 0.0
    %135 = vmatpush1.msra.mxu0 0.0
    %136 = vmatprep.subr.mxu0 0.0
    %137 = vmatpush1.msra.mxu0 0.0
    %138 = vmatprep.subr.mxu0 0.0
    %139 = vmatpush1.msra.mxu0 0.0
    %140 = vmatprep.subr.mxu0 0.0
    %141 = vmatpush1.msra.mxu0 0.0
    %142 = vmatprep.subr.mxu0 0.0
    %143 = vmatpush1.msra.mxu0 0.0
    %144 = vmatprep.subr.mxu0 0.0
    %145 = vmatpush1.msra.mxu0 0.0
    %146 = vmatprep.subr.mxu0 0.0
    %147 = vmatpush1.msra.mxu0 0.0
    %148 = vmatprep.subr.mxu0 0.0
    %149 = vmatpush1.msra.mxu0 0.0
    %150 = vmatprep.subr.mxu0 0.0
    %151 = vmatpush1.msra.mxu0 0.0
    %152 = vmatprep.subr.mxu0 0.0
    %153 = vmatpush1.msra.mxu0 0.0
    %154 = vmatprep.subr.mxu0 %v116
    %155 = vmatpush1.msra.mxu0 %v115
    %156 = vmatprep.subr.mxu0 0.0
    %157 = vmatpush2.msra.mxu0 0.0
    %158 = vmatprep.subr.mxu0 0.0
    %159 = vmatpush2.msra.mxu0 0.0
    %160 = vmatprep.subr.mxu0 0.0
    %161 = vmatpush2.msra.mxu0 0.0
    %162 = vmatprep.subr.mxu0 0.0
    %163 = vmatpush2.msra.mxu0 0.0
    %164 = vmatprep.subr.mxu0 0.0
    %165 = vmatpush2.msra.mxu0 0.0
    %166 = vmatprep.subr.mxu0 0.0
    %167 = vmatpush2.msra.mxu0 0.0
    %168 = vmatprep.subr.mxu0 0.0
    %169 = vmatpush2.msra.mxu0 0.0
    %170 = vmatprep.subr.mxu0 0.0
    %171 = vmatpush2.msra.mxu0 0.0
    %172 = vmatprep.subr.mxu0 0.0
    %173 = vmatpush2.msra.mxu0 0.0
    %174 = vmatprep.subr.mxu0 0.0
    %175 = vmatpush2.msra.mxu0 0.0
    %176 = vmatprep.subr.mxu0 0.0
    %177 = vmatpush2.msra.mxu0 0.0
    %178 = vmatprep.subr.mxu0 0.0
    %179 = vmatpush2.msra.mxu0 0.0
    %180 = vmatprep.subr.mxu0 0.0
    %181 = vmatpush2.msra.mxu0 0.0
    %182 = vmatprep.subr.mxu0 0.0
    %183 = vmatpush2.msra.mxu0 0.0
    %184 = vmatprep.subr.mxu0 0.0
    %185 = vmatpush2.msra.mxu0 0.0
    %186 = vmatprep.subr.mxu0 0.0
    %187 = vmatpush2.msra.mxu0 0.0
    %188 = vmatprep.mubr.f32.mxu0 0.0
    %189 = vmatmul.mubr.f32.gmra.mxu0 %v119
    %v190 = vpop.f32.mrf.mxu0
    %v191 = vadd.f32 0.0, %v190
    %v192 = vpop.f32.mrf.mxu0
    %v193 = vadd.f32 0.0, %v192
    %194 = vmatprep.mubr.f32.mxu0 0.0
    %195 = vmatmul.mubr.f32.gmra.mxu0 %v122
    %v196 = vpop.f32.mrf.mxu0
    %v197 = vadd.f32 0.0, %v196
    %v198 = vpop.f32.mrf.mxu0
    %v199 = vadd.f32 0.0, %v198
    %200 = vdwg.mxu0
    %v201 = vld [vmem:[%s1] sm:$0xff]
    %v202 = vld [vmem:[%s1 + $0x8] sm:$0xff]
    %vm203 = vcmp.lt.s32.totalorder %v201, 7
    %v204 = vsel %vm203, %v201, 7
    %vm205 = vcmp.lt.s32.totalorder %v202, 7
    %v206 = vsel %vm205, %v202, 7
    %v207 = vld [vmem:[%s2] sm:$0xff]
    %v208 = vld [vmem:[%s2 + $0x8] sm:$0xff]
    %vm209 = vcmp.lt.s32.totalorder %v207, 7
    %v210 = vsel %vm209, %v207, 7
    %vm211 = vcmp.lt.s32.totalorder %v208, 7
    %v212 = vsel %vm211, %v208, 7
    %213 = vset.pattern.permute.xlu0 0
    %214 = vperm.xlu0 %213, %v204
    %v215 = vpop.permute.xlu0 %214
    %216 = vset.pattern.permute.xlu0 0
    %217 = vperm.xlu0 %216, %v206
    %v218 = vpop.permute.xlu0 %217
    %vm219 = vcmp.eq.s32.totalorder %v215, %v96
    %vm220 = vcmp.eq.s32.totalorder %v218, %v96
    %v221 = vsel %vm219, 1, 0
    %v222 = vsel %vm220, 1, 0
    %v223 = vcvt.s32.f32 %v221
    %v224 = vcvt.s32.f32 %v222
    %v225 = vsub.s32 %v96, 8
    %226 = vset.pattern.permute.xlu0 0
    %227 = vperm.xlu0 %226, %v210
    %v228 = vpop.permute.xlu0 %227
    %229 = vset.pattern.permute.xlu0 0
    %230 = vperm.xlu0 %229, %v212
    %v231 = vpop.permute.xlu0 %230
    %vm232 = vcmp.eq.s32.totalorder %v228, %v225
    %vm233 = vcmp.eq.s32.totalorder %v231, %v225
    %v234 = vsel %vm232, 1, 0
    %v235 = vsel %vm233, 1, 0
    %v236 = vcvt.s32.f32 %v234
    %v237 = vcvt.s32.f32 %v235
    %v238 = vadd.f32 %v223, %v236
    %v239 = vadd.f32 %v224, %v237
    %v240 = vld [vmem:[%s7] sm:$0xff]
    %v241 = vld [vmem:[%s7 + $0x8] sm:$0xff]
    %v242 = vld [vmem:[%s7 + $0x10] sm:$0xff]
    %v243 = vld [vmem:[%s7 + $0x18] sm:$0xff]
    %v244 = vld [vmem:[%s7 + $0x20] sm:$0xff]
    %v245 = vld [vmem:[%s7 + $0x28] sm:$0xff]
    %v246 = vld [vmem:[%s7 + $0x30] sm:$0xff]
    %v247 = vld [vmem:[%s7 + $0x38] sm:$0xff]
    %vm248 = vcmask 130048
    %v250 = vsel %vm248, %v238, 0
    %v253 = vsel %vm248, %v239, 0
    %255 = vmatprep.subr.mxu0 0.0
    %256 = vmatpush1.msra.mxu0 0.0
    %257 = vmatprep.subr.mxu0 0.0
    %258 = vmatpush1.msra.mxu0 0.0
    %259 = vmatprep.subr.mxu0 0.0
    %260 = vmatpush1.msra.mxu0 0.0
    %261 = vmatprep.subr.mxu0 0.0
    %262 = vmatpush1.msra.mxu0 0.0
    %263 = vmatprep.subr.mxu0 0.0
    %264 = vmatpush1.msra.mxu0 0.0
    %265 = vmatprep.subr.mxu0 0.0
    %266 = vmatpush1.msra.mxu0 0.0
    %267 = vmatprep.subr.mxu0 0.0
    %268 = vmatpush1.msra.mxu0 0.0
    %269 = vmatprep.subr.mxu0 0.0
    %270 = vmatpush1.msra.mxu0 0.0
    %271 = vmatprep.subr.mxu0 0.0
    %272 = vmatpush1.msra.mxu0 0.0
    %273 = vmatprep.subr.mxu0 0.0
    %274 = vmatpush1.msra.mxu0 0.0
    %275 = vmatprep.subr.mxu0 0.0
    %276 = vmatpush1.msra.mxu0 0.0
    %277 = vmatprep.subr.mxu0 0.0
    %278 = vmatpush1.msra.mxu0 0.0
    %279 = vmatprep.subr.mxu0 0.0
    %280 = vmatpush1.msra.mxu0 0.0
    %281 = vmatprep.subr.mxu0 0.0
    %282 = vmatpush1.msra.mxu0 0.0
    %283 = vmatprep.subr.mxu0 %v245
    %284 = vmatpush1.msra.mxu0 %v244
    %285 = vmatprep.subr.mxu0 %v241
    %286 = vmatpush1.msra.mxu0 %v240
    %287 = vmatprep.subr.mxu0 0.0
    %288 = vmatpush2.msra.mxu0 0.0
    %289 = vmatprep.subr.mxu0 0.0
    %290 = vmatpush2.msra.mxu0 0.0
    %291 = vmatprep.subr.mxu0 0.0
    %292 = vmatpush2.msra.mxu0 0.0
    %293 = vmatprep.subr.mxu0 0.0
    %294 = vmatpush2.msra.mxu0 0.0
    %295 = vmatprep.subr.mxu0 0.0
    %296 = vmatpush2.msra.mxu0 0.0
    %297 = vmatprep.subr.mxu0 0.0
    %298 = vmatpush2.msra.mxu0 0.0
    %299 = vmatprep.subr.mxu0 0.0
    %300 = vmatpush2.msra.mxu0 0.0
    %301 = vmatprep.subr.mxu0 0.0
    %302 = vmatpush2.msra.mxu0 0.0
    %303 = vmatprep.subr.mxu0 0.0
    %304 = vmatpush2.msra.mxu0 0.0
    %305 = vmatprep.subr.mxu0 0.0
    %306 = vmatpush2.msra.mxu0 0.0
    %307 = vmatprep.subr.mxu0 0.0
    %308 = vmatpush2.msra.mxu0 0.0
    %309 = vmatprep.subr.mxu0 0.0
    %310 = vmatpush2.msra.mxu0 0.0
    %311 = vmatprep.subr.mxu0 0.0
    %312 = vmatpush2.msra.mxu0 0.0
    %313 = vmatprep.subr.mxu0 0.0
    %314 = vmatpush2.msra.mxu0 0.0
    %315 = vmatprep.subr.mxu0 0.0
    %316 = vmatpush2.msra.mxu0 0.0
    %317 = vmatprep.subr.mxu0 0.0
    %318 = vmatpush2.msra.mxu0 0.0
    %319 = vmatprep.mubr.f32.mxu0 0.0
    %320 = vmatmul.mubr.f32.gmra.mxu0 %v250
    %v321 = vpop.f32.mrf.mxu0
    %v322 = vadd.f32 0.0, %v321
    %v323 = vpop.f32.mrf.mxu0
    %v324 = vadd.f32 0.0, %v323
    %325 = vmatprep.mubr.f32.mxu0 0.0
    %326 = vmatmul.mubr.f32.gmra.mxu0 %v253
    %v327 = vpop.f32.mrf.mxu0
    %v328 = vadd.f32 0.0, %v327
    %v329 = vpop.f32.mrf.mxu0
    %v330 = vadd.f32 0.0, %v329
    %331 = vdwg.mxu0
    %332 = vmatprep.subr.mxu0 0.0
    %333 = vmatpush1.msra.mxu0 0.0
    %334 = vmatprep.subr.mxu0 0.0
    %335 = vmatpush1.msra.mxu0 0.0
    %336 = vmatprep.subr.mxu0 0.0
    %337 = vmatpush1.msra.mxu0 0.0
    %338 = vmatprep.subr.mxu0 0.0
    %339 = vmatpush1.msra.mxu0 0.0
    %340 = vmatprep.subr.mxu0 0.0
    %341 = vmatpush1.msra.mxu0 0.0
    %342 = vmatprep.subr.mxu0 0.0
    %343 = vmatpush1.msra.mxu0 0.0
    %344 = vmatprep.subr.mxu0 0.0
    %345 = vmatpush1.msra.mxu0 0.0
    %346 = vmatprep.subr.mxu0 0.0
    %347 = vmatpush1.msra.mxu0 0.0
    %348 = vmatprep.subr.mxu0 0.0
    %349 = vmatpush1.msra.mxu0 0.0
    %350 = vmatprep.subr.mxu0 0.0
    %351 = vmatpush1.msra.mxu0 0.0
    %352 = vmatprep.subr.mxu0 0.0
    %353 = vmatpush1.msra.mxu0 0.0
    %354 = vmatprep.subr.mxu0 0.0
    %355 = vmatpush1.msra.mxu0 0.0
    %356 = vmatprep.subr.mxu0 0.0
    %357 = vmatpush1.msra.mxu0 0.0
    %358 = vmatprep.subr.mxu0 0.0
    %359 = vmatpush1.msra.mxu0 0.0
    %360 = vmatprep.subr.mxu0 %v247
    %361 = vmatpush1.msra.mxu0 %v246
    %362 = vmatprep.subr.mxu0 %v243
    %363 = vmatpush1.msra.mxu0 %v242
    %364 = vmatprep.subr.mxu0 0.0
    %365 = vmatpush2.msra.mxu0 0.0
    %366 = vmatprep.subr.mxu0 0.0
    %367 = vmatpush2.msra.mxu0 0.0
    %368 = vmatprep.subr.mxu0 0.0
    %369 = vmatpush2.msra.mxu0 0.0
    %370 = vmatprep.subr.mxu0 0.0
    %371 = vmatpush2.msra.mxu0 0.0
    %372 = vmatprep.subr.mxu0 0.0
    %373 = vmatpush2.msra.mxu0 0.0
    %374 = vmatprep.subr.mxu0 0.0
    %375 = vmatpush2.msra.mxu0 0.0
    %376 = vmatprep.subr.mxu0 0.0
    %377 = vmatpush2.msra.mxu0 0.0
    %378 = vmatprep.subr.mxu0 0.0
    %379 = vmatpush2.msra.mxu0 0.0
    %380 = vmatprep.subr.mxu0 0.0
    %381 = vmatpush2.msra.mxu0 0.0
    %382 = vmatprep.subr.mxu0 0.0
    %383 = vmatpush2.msra.mxu0 0.0
    %384 = vmatprep.subr.mxu0 0.0
    %385 = vmatpush2.msra.mxu0 0.0
    %386 = vmatprep.subr.mxu0 0.0
    %387 = vmatpush2.msra.mxu0 0.0
    %388 = vmatprep.subr.mxu0 0.0
    %389 = vmatpush2.msra.mxu0 0.0
    %390 = vmatprep.subr.mxu0 0.0
    %391 = vmatpush2.msra.mxu0 0.0
    %392 = vmatprep.subr.mxu0 0.0
    %393 = vmatpush2.msra.mxu0 0.0
    %394 = vmatprep.subr.mxu0 0.0
    %395 = vmatpush2.msra.mxu0 0.0
    %396 = vmatprep.mubr.f32.mxu0 0.0
    %397 = vmatmul.mubr.f32.gmra.mxu0 %v250
    %v398 = vpop.f32.mrf.mxu0
    %v399 = vadd.f32 0.0, %v398
    %v400 = vpop.f32.mrf.mxu0
    %v401 = vadd.f32 0.0, %v400
    %402 = vmatprep.mubr.f32.mxu0 0.0
    %403 = vmatmul.mubr.f32.gmra.mxu0 %v253
    %v404 = vpop.f32.mrf.mxu0
    %v405 = vadd.f32 0.0, %v404
    %v406 = vpop.f32.mrf.mxu0
    %v407 = vadd.f32 0.0, %v406
    %408 = vdwg.mxu0
    %v409 = vld [vmem:[%s11] sm:$0x3]
    %v410 = vld [vmem:[%s11 + $0x2] sm:$0x3]
    %v411 = vld [vmem:[%s11 + $0x4] sm:$0x3]
    %v412 = vld [vmem:[#allocation7] sm:$0xff]
    %v413 = vld [vmem:[#allocation7 + $0x8] sm:$0xff]
    %v414 = vld [vmem:[#allocation7 + $0x10] sm:$0xff]
    %v415 = vld [vmem:[#allocation7 + $0x18] sm:$0xff]
    %v416 = vld [vmem:[#allocation7 + $0x20] sm:$0xff]
    %v417 = vld [vmem:[#allocation7 + $0x28] sm:$0xff]
    %v418 = vld [vmem:[#allocation7 + $0x30] sm:$0xff]
    %v419 = vld [vmem:[#allocation7 + $0x38] sm:$0xff]
    %v420 = vld [vmem:[#allocation7 + $0x40] sm:$0xff]
    %v421 = vld [vmem:[#allocation7 + $0x48] sm:$0xff]
    %v422 = vld [vmem:[#allocation7 + $0x50] sm:$0xff]
    %v423 = vld [vmem:[#allocation7 + $0x58] sm:$0xff]
    %v424 = vld [vmem:[#allocation7 + $0x60] sm:$0xff]
    %v425 = vld [vmem:[#allocation7 + $0x68] sm:$0xff]
    %v426 = vld [vmem:[#allocation7 + $0x70] sm:$0xff]
    %v427 = vld [vmem:[#allocation7 + $0x78] sm:$0xff]
    %v428 = vld [vmem:[#allocation7 + $0x80] sm:$0xff]
    %v429 = vld [vmem:[#allocation7 + $0x88] sm:$0xff]
    %v430 = vld [vmem:[#allocation7 + $0x90] sm:$0xff]
    %v431 = vld [vmem:[#allocation7 + $0x98] sm:$0xff]
    %v432 = vld [vmem:[#allocation7 + $0xa0] sm:$0xff]
    %v433 = vld [vmem:[#allocation7 + $0xa8] sm:$0xff]
    %v434 = vld [vmem:[#allocation7 + $0xb0] sm:$0xff]
    %v435 = vld [vmem:[#allocation7 + $0xb8] sm:$0xff]
    %v436 = vld [vmem:[#allocation7 + $0xc0] sm:$0xff]
    %v437 = vld [vmem:[#allocation7 + $0xc8] sm:$0xff]
    %v438 = vld [vmem:[#allocation7 + $0xd0] sm:$0xff]
    %v439 = vld [vmem:[#allocation7 + $0xd8] sm:$0xff]
    %v440 = vld [vmem:[#allocation7 + $0xe0] sm:$0xff]
    %v441 = vld [vmem:[#allocation7 + $0xe8] sm:$0xff]
    %v442 = vld [vmem:[#allocation7 + $0xf0] sm:$0xff]
    %v443 = vld [vmem:[#allocation7 + $0xf8] sm:$0xff]
    %v444 = vld [vmem:[#allocation7 + $0x100] sm:$0xff]
    %v445 = vld [vmem:[#allocation7 + $0x108] sm:$0xff]
    %v446 = vld [vmem:[#allocation7 + $0x110] sm:$0xff]
    %v447 = vld [vmem:[#allocation7 + $0x118] sm:$0xff]
    %v448 = vld [vmem:[#allocation7 + $0x120] sm:$0xff]
    %v449 = vld [vmem:[#allocation7 + $0x128] sm:$0xff]
    %v450 = vld [vmem:[#allocation7 + $0x130] sm:$0xff]
    %v451 = vld [vmem:[#allocation7 + $0x138] sm:$0xff]
    %v452 = vld [vmem:[#allocation7 + $0x140] sm:$0xff]
    %v453 = vld [vmem:[#allocation7 + $0x148] sm:$0xff]
    %v454 = vld [vmem:[#allocation7 + $0x150] sm:$0xff]
    %v455 = vld [vmem:[#allocation7 + $0x158] sm:$0xff]
    %v456 = vld [vmem:[#allocation7 + $0x160] sm:$0xff]
    %v457 = vld [vmem:[#allocation7 + $0x168] sm:$0xff]
    %v458 = vld [vmem:[#allocation7 + $0x170] sm:$0xff]
    %v459 = vld [vmem:[#allocation7 + $0x178] sm:$0xff]
    %v460 = vld [vmem:[#allocation7 + $0x180] sm:$0xff]
    %v461 = vld [vmem:[#allocation7 + $0x188] sm:$0xff]
    %v462 = vld [vmem:[#allocation7 + $0x190] sm:$0xff]
    %v463 = vld [vmem:[#allocation7 + $0x198] sm:$0xff]
    %v464 = vld [vmem:[#allocation7 + $0x1a0] sm:$0xff]
    %v465 = vld [vmem:[#allocation7 + $0x1a8] sm:$0xff]
    %v466 = vld [vmem:[#allocation7 + $0x1b0] sm:$0xff]
    %v467 = vld [vmem:[#allocation7 + $0x1b8] sm:$0xff]
    %v468 = vld [vmem:[#allocation7 + $0x1c0] sm:$0xff]
    %v469 = vld [vmem:[#allocation7 + $0x1c8] sm:$0xff]
    %v470 = vld [vmem:[#allocation7 + $0x1d0] sm:$0xff]
    %v471 = vld [vmem:[#allocation7 + $0x1d8] sm:$0xff]
    %v472 = vld [vmem:[#allocation7 + $0x1e0] sm:$0xff]
    %v473 = vld [vmem:[#allocation7 + $0x1e8] sm:$0xff]
    %v474 = vld [vmem:[#allocation7 + $0x1f0] sm:$0xff]
    %v475 = vld [vmem:[#allocation7 + $0x1f8] sm:$0xff]
    %v476 = vld [vmem:[#allocation7 + $0x200] sm:$0xff]
    %v477 = vld [vmem:[#allocation7 + $0x208] sm:$0xff]
    %v478 = vld [vmem:[#allocation7 + $0x210] sm:$0xff]
    %v479 = vld [vmem:[#allocation7 + $0x218] sm:$0xff]
    %v480 = vld [vmem:[#allocation7 + $0x220] sm:$0xff]
    %v481 = vld [vmem:[#allocation7 + $0x228] sm:$0xff]
    %v482 = vld [vmem:[#allocation7 + $0x230] sm:$0xff]
    %v483 = vld [vmem:[#allocation7 + $0x238] sm:$0xff]
    %v484 = vld [vmem:[#allocation7 + $0x240] sm:$0xff]
    %v485 = vld [vmem:[#allocation7 + $0x248] sm:$0xff]
    %v486 = vld [vmem:[#allocation7 + $0x250] sm:$0xff]
    %v487 = vld [vmem:[#allocation7 + $0x258] sm:$0xff]
    %v488 = vld [vmem:[#allocation7 + $0x260] sm:$0xff]
    %v489 = vld [vmem:[#allocation7 + $0x268] sm:$0xff]
    %v490 = vld [vmem:[#allocation7 + $0x270] sm:$0xff]
    %v491 = vld [vmem:[#allocation7 + $0x278] sm:$0xff]
    %v492 = vld [vmem:[#allocation7 + $0x280] sm:$0xff]
    %v493 = vld [vmem:[#allocation7 + $0x288] sm:$0xff]
    %v494 = vld [vmem:[#allocation7 + $0x290] sm:$0xff]
    %v495 = vld [vmem:[#allocation7 + $0x298] sm:$0xff]
    %v496 = vld [vmem:[#allocation7 + $0x2a0] sm:$0xff]
    %v497 = vld [vmem:[#allocation7 + $0x2a8] sm:$0xff]
    %v498 = vld [vmem:[#allocation7 + $0x2b0] sm:$0xff]
    %v499 = vld [vmem:[#allocation7 + $0x2b8] sm:$0xff]
    %v500 = vld [vmem:[#allocation7 + $0x2c0] sm:$0xff]
    %v501 = vld [vmem:[#allocation7 + $0x2c8] sm:$0xff]
    %v502 = vld [vmem:[#allocation7 + $0x2d0] sm:$0xff]
    %v503 = vld [vmem:[#allocation7 + $0x2d8] sm:$0xff]
    %v504 = vld [vmem:[#allocation7 + $0x2e0] sm:$0xff]
    %v505 = vld [vmem:[#allocation7 + $0x2e8] sm:$0xff]
    %v506 = vld [vmem:[#allocation7 + $0x2f0] sm:$0xff]
    %v507 = vld [vmem:[#allocation7 + $0x2f8] sm:$0xff]
    %v508 = vld [vmem:[#allocation7 + $0x300] sm:$0xff]
    %v509 = vld [vmem:[#allocation7 + $0x308] sm:$0xff]
    %v510 = vld [vmem:[#allocation7 + $0x310] sm:$0xff]
    %v511 = vld [vmem:[#allocation7 + $0x318] sm:$0xff]
    %v512 = vld [vmem:[#allocation7 + $0x320] sm:$0xff]
    %v513 = vld [vmem:[#allocation7 + $0x328] sm:$0xff]
    %v514 = vld [vmem:[#allocation7 + $0x330] sm:$0xff]
    %v515 = vld [vmem:[#allocation7 + $0x338] sm:$0xff]
    %v516 = vld [vmem:[#allocation7 + $0x340] sm:$0xff]
    %v517 = vld [vmem:[#allocation7 + $0x348] sm:$0xff]
    %v518 = vld [vmem:[#allocation7 + $0x350] sm:$0xff]
    %v519 = vld [vmem:[#allocation7 + $0x358] sm:$0xff]
    %v520 = vld [vmem:[#allocation7 + $0x360] sm:$0xff]
    %v521 = vld [vmem:[#allocation7 + $0x368] sm:$0xff]
    %v522 = vld [vmem:[#allocation7 + $0x370] sm:$0xff]
    %v523 = vld [vmem:[#allocation7 + $0x378] sm:$0xff]
    %v524 = vld [vmem:[#allocation7 + $0x380] sm:$0xff]
    %v525 = vld [vmem:[#allocation7 + $0x388] sm:$0xff]
    %v526 = vld [vmem:[#allocation7 + $0x390] sm:$0xff]
    %v527 = vld [vmem:[#allocation7 + $0x398] sm:$0xff]
    %v528 = vld [vmem:[#allocation7 + $0x3a0] sm:$0xff]
    %v529 = vld [vmem:[#allocation7 + $0x3a8] sm:$0xff]
    %v530 = vld [vmem:[#allocation7 + $0x3b0] sm:$0xff]
    %v531 = vld [vmem:[#allocation7 + $0x3b8] sm:$0xff]
    %v532 = vld [vmem:[#allocation7 + $0x3c0] sm:$0xff]
    %v533 = vld [vmem:[#allocation7 + $0x3c8] sm:$0xff]
    %v534 = vld [vmem:[#allocation7 + $0x3d0] sm:$0xff]
    %v535 = vld [vmem:[#allocation7 + $0x3d8] sm:$0xff]
    %v536 = vld [vmem:[#allocation7 + $0x3e0] sm:$0xff]
    %v537 = vld [vmem:[#allocation7 + $0x3e8] sm:$0xff]
    %v538 = vld [vmem:[#allocation7 + $0x3f0] sm:$0xff]
    %v539 = vld [vmem:[#allocation7 + $0x3f8] sm:$0xff]
    %v541 = vlaneseq
    %v542 = vshrl.u32 %v541, 7
    %v543 = vsub.s32 0, %v542
    %v544 = vrot.slane %v409, %v543
    %v545 = vlaneseq
    %v546 = vshrl.u32 %v545, 7
    %v547 = vsub.s32 1, %v546
    %v548 = vrot.slane %v409, %v547
    %551 = vmatprep.subr.mxu0 %v443
    %552 = vmatpush1.msra.mxu0 %v442
    %553 = vmatprep.subr.mxu0 %v441
    %554 = vmatpush1.msra.mxu0 %v440
    %555 = vmatprep.subr.mxu0 %v439
    %556 = vmatpush1.msra.mxu0 %v438
    %557 = vmatprep.subr.mxu0 %v437
    %558 = vmatpush1.msra.mxu0 %v436
    %559 = vmatprep.subr.mxu0 %v435
    %560 = vmatpush1.msra.mxu0 %v434
    %561 = vmatprep.subr.mxu0 %v433
    %562 = vmatpush1.msra.mxu0 %v432
    %563 = vmatprep.subr.mxu0 %v431
    %564 = vmatpush1.msra.mxu0 %v430
    %565 = vmatprep.subr.mxu0 %v429
    %566 = vmatpush1.msra.mxu0 %v428
    %567 = vmatprep.subr.mxu0 %v427
    %568 = vmatpush1.msra.mxu0 %v426
    %569 = vmatprep.subr.mxu0 %v425
    %570 = vmatpush1.msra.mxu0 %v424
    %571 = vmatprep.subr.mxu0 %v423
    %572 = vmatpush1.msra.mxu0 %v422
    %573 = vmatprep.subr.mxu0 %v421
    %574 = vmatpush1.msra.mxu0 %v420
    %575 = vmatprep.subr.mxu0 %v419
    %576 = vmatpush1.msra.mxu0 %v418
    %577 = vmatprep.subr.mxu0 %v417
    %578 = vmatpush1.msra.mxu0 %v416
    %579 = vmatprep.subr.mxu0 %v415
    %580 = vmatpush1.msra.mxu0 %v414
    %581 = vmatprep.subr.mxu0 %v413
    %582 = vmatpush1.msra.mxu0 %v412
    %583 = vmatprep.subr.mxu0 %v475
    %584 = vmatpush2.msra.mxu0 %v474
    %585 = vmatprep.subr.mxu0 %v473
    %586 = vmatpush2.msra.mxu0 %v472
    %587 = vmatprep.subr.mxu0 %v471
    %588 = vmatpush2.msra.mxu0 %v470
    %589 = vmatprep.subr.mxu0 %v469
    %590 = vmatpush2.msra.mxu0 %v468
    %591 = vmatprep.subr.mxu0 %v467
    %592 = vmatpush2.msra.mxu0 %v466
    %593 = vmatprep.subr.mxu0 %v465
    %594 = vmatpush2.msra.mxu0 %v464
    %595 = vmatprep.subr.mxu0 %v463
    %596 = vmatpush2.msra.mxu0 %v462
    %597 = vmatprep.subr.mxu0 %v461
    %598 = vmatpush2.msra.mxu0 %v460
    %599 = vmatprep.subr.mxu0 %v459
    %600 = vmatpush2.msra.mxu0 %v458
    %601 = vmatprep.subr.mxu0 %v457
    %602 = vmatpush2.msra.mxu0 %v456
    %603 = vmatprep.subr.mxu0 %v455
    %604 = vmatpush2.msra.mxu0 %v454
    %605 = vmatprep.subr.mxu0 %v453
    %606 = vmatpush2.msra.mxu0 %v452
    %607 = vmatprep.subr.mxu0 %v451
    %608 = vmatpush2.msra.mxu0 %v450
    %609 = vmatprep.subr.mxu0 %v449
    %610 = vmatpush2.msra.mxu0 %v448
    %611 = vmatprep.subr.mxu0 %v447
    %612 = vmatpush2.msra.mxu0 %v446
    %613 = vmatprep.subr.mxu0 %v445
    %614 = vmatpush2.msra.mxu0 %v444
    %615 = vmatprep.mubr.f32.mxu0 %v324
    %616 = vmatmul.mubr.f32.gmra.mxu0 %v322
    %v617 = vpop.f32.mrf.mxu0
    %v618 = vadd.f32 %v544, %v617
    %v619 = vpop.f32.mrf.mxu0
    %v620 = vadd.f32 %v548, %v619
    %621 = vmatprep.mubr.f32.mxu0 %v330
    %622 = vmatmul.mubr.f32.gmra.mxu0 %v328
    %v623 = vpop.f32.mrf.mxu0
    %v624 = vadd.f32 %v544, %v623
    %v625 = vpop.f32.mrf.mxu0
    %v626 = vadd.f32 %v548, %v625
    %627 = vdwg.mxu0
    %628 = vmatprep.subr.mxu0 %v507
    %629 = vmatpush1.msra.mxu0 %v506
    %630 = vmatprep.subr.mxu0 %v505
    %631 = vmatpush1.msra.mxu0 %v504
    %632 = vmatprep.subr.mxu0 %v503
    %633 = vmatpush1.msra.mxu0 %v502
    %634 = vmatprep.subr.mxu0 %v501
    %635 = vmatpush1.msra.mxu0 %v500
    %636 = vmatprep.subr.mxu0 %v499
    %637 = vmatpush1.msra.mxu0 %v498
    %638 = vmatprep.subr.mxu0 %v497
    %639 = vmatpush1.msra.mxu0 %v496
    %640 = vmatprep.subr.mxu0 %v495
    %641 = vmatpush1.msra.mxu0 %v494
    %642 = vmatprep.subr.mxu0 %v493
    %643 = vmatpush1.msra.mxu0 %v492
    %644 = vmatprep.subr.mxu0 %v491
    %645 = vmatpush1.msra.mxu0 %v490
    %646 = vmatprep.subr.mxu0 %v489
    %647 = vmatpush1.msra.mxu0 %v488
    %648 = vmatprep.subr.mxu0 %v487
    %649 = vmatpush1.msra.mxu0 %v486
    %650 = vmatprep.subr.mxu0 %v485
    %651 = vmatpush1.msra.mxu0 %v484
    %652 = vmatprep.subr.mxu0 %v483
    %653 = vmatpush1.msra.mxu0 %v482
    %654 = vmatprep.subr.mxu0 %v481
    %655 = vmatpush1.msra.mxu0 %v480
    %656 = vmatprep.subr.mxu0 %v479
    %657 = vmatpush1.msra.mxu0 %v478
    %658 = vmatprep.subr.mxu0 %v477
    %659 = vmatpush1.msra.mxu0 %v476
    %660 = vmatprep.subr.mxu0 %v539
    %661 = vmatpush2.msra.mxu0 %v538
    %662 = vmatprep.subr.mxu0 %v537
    %663 = vmatpush2.msra.mxu0 %v536
    %664 = vmatprep.subr.mxu0 %v535
    %665 = vmatpush2.msra.mxu0 %v534
    %666 = vmatprep.subr.mxu0 %v533
    %667 = vmatpush2.msra.mxu0 %v532
    %668 = vmatprep.subr.mxu0 %v531
    %669 = vmatpush2.msra.mxu0 %v530
    %670 = vmatprep.subr.mxu0 %v529
    %671 = vmatpush2.msra.mxu0 %v528
    %672 = vmatprep.subr.mxu0 %v527
    %673 = vmatpush2.msra.mxu0 %v526
    %674 = vmatprep.subr.mxu0 %v525
    %675 = vmatpush2.msra.mxu0 %v524
    %676 = vmatprep.subr.mxu0 %v523
    %677 = vmatpush2.msra.mxu0 %v522
    %678 = vmatprep.subr.mxu0 %v521
    %679 = vmatpush2.msra.mxu0 %v520
    %680 = vmatprep.subr.mxu0 %v519
    %681 = vmatpush2.msra.mxu0 %v518
    %682 = vmatprep.subr.mxu0 %v517
    %683 = vmatpush2.msra.mxu0 %v516
    %684 = vmatprep.subr.mxu0 %v515
    %685 = vmatpush2.msra.mxu0 %v514
    %686 = vmatprep.subr.mxu0 %v513
    %687 = vmatpush2.msra.mxu0 %v512
    %688 = vmatprep.subr.mxu0 %v511
    %689 = vmatpush2.msra.mxu0 %v510
    %690 = vmatprep.subr.mxu0 %v509
    %691 = vmatpush2.msra.mxu0 %v508
    %692 = vmatprep.mubr.f32.mxu0 %v401
    %693 = vmatmul.mubr.f32.gmra.mxu0 %v399
    %v694 = vpop.f32.mrf.mxu0
    %v695 = vadd.f32 %v618, %v694
    %v696 = vpop.f32.mrf.mxu0
    %v697 = vadd.f32 %v620, %v696
    %698 = vmatprep.mubr.f32.mxu0 %v407
    %699 = vmatmul.mubr.f32.gmra.mxu0 %v405
    %v700 = vpop.f32.mrf.mxu0
    %v701 = vadd.f32 %v624, %v700
    %v702 = vpop.f32.mrf.mxu0
    %v703 = vadd.f32 %v626, %v702
    %704 = vdwg.mxu0
    %v705 = vmax.f32 %v695, 0.0
    %v706 = vmax.f32 %v697, 0.0
    %v707 = vmax.f32 %v701, 0.0
    %v708 = vmax.f32 %v703, 0.0
    %v709 = vld [vmem:[%s9] sm:$0xff]
    %v710 = vld [vmem:[%s9 + $0x8] sm:$0xff]
    %v711 = vld [vmem:[%s9 + $0x10] sm:$0xff]
    %v712 = vld [vmem:[%s9 + $0x18] sm:$0xff]
    %v713 = vld [vmem:[%s9 + $0x20] sm:$0xff]
    %v714 = vld [vmem:[%s9 + $0x28] sm:$0xff]
    %v715 = vld [vmem:[%s9 + $0x30] sm:$0xff]
    %v716 = vld [vmem:[%s9 + $0x38] sm:$0xff]
    %v717 = vld [vmem:[%s9 + $0x40] sm:$0xff]
    %v718 = vld [vmem:[%s9 + $0x48] sm:$0xff]
    %v719 = vld [vmem:[%s9 + $0x50] sm:$0xff]
    %v720 = vld [vmem:[%s9 + $0x58] sm:$0xff]
    %v721 = vld [vmem:[%s9 + $0x60] sm:$0xff]
    %v722 = vld [vmem:[%s9 + $0x68] sm:$0xff]
    %v723 = vld [vmem:[%s9 + $0x70] sm:$0xff]
    %v724 = vld [vmem:[%s9 + $0x78] sm:$0xff]
    %v725 = vld [vmem:[%s9 + $0x80] sm:$0xff]
    %v726 = vld [vmem:[%s9 + $0x88] sm:$0xff]
    %v727 = vld [vmem:[%s9 + $0x90] sm:$0xff]
    %v728 = vld [vmem:[%s9 + $0x98] sm:$0xff]
    %v729 = vld [vmem:[%s9 + $0xa0] sm:$0xff]
    %v730 = vld [vmem:[%s9 + $0xa8] sm:$0xff]
    %v731 = vld [vmem:[%s9 + $0xb0] sm:$0xff]
    %v732 = vld [vmem:[%s9 + $0xb8] sm:$0xff]
    %v733 = vld [vmem:[%s9 + $0xc0] sm:$0xff]
    %v734 = vld [vmem:[%s9 + $0xc8] sm:$0xff]
    %v735 = vld [vmem:[%s9 + $0xd0] sm:$0xff]
    %v736 = vld [vmem:[%s9 + $0xd8] sm:$0xff]
    %v737 = vld [vmem:[%s9 + $0xe0] sm:$0xff]
    %v738 = vld [vmem:[%s9 + $0xe8] sm:$0xff]
    %v739 = vld [vmem:[%s9 + $0xf0] sm:$0xff]
    %v740 = vld [vmem:[%s9 + $0xf8] sm:$0xff]
    %v741 = vld [vmem:[%s9 + $0x100] sm:$0xff]
    %v742 = vld [vmem:[%s9 + $0x108] sm:$0xff]
    %v743 = vld [vmem:[%s9 + $0x110] sm:$0xff]
    %v744 = vld [vmem:[%s9 + $0x118] sm:$0xff]
    %v745 = vld [vmem:[%s9 + $0x120] sm:$0xff]
    %v746 = vld [vmem:[%s9 + $0x128] sm:$0xff]
    %v747 = vld [vmem:[%s9 + $0x130] sm:$0xff]
    %v748 = vld [vmem:[%s9 + $0x138] sm:$0xff]
    %v749 = vld [vmem:[%s9 + $0x140] sm:$0xff]
    %v750 = vld [vmem:[%s9 + $0x148] sm:$0xff]
    %v751 = vld [vmem:[%s9 + $0x150] sm:$0xff]
    %v752 = vld [vmem:[%s9 + $0x158] sm:$0xff]
    %v753 = vld [vmem:[%s9 + $0x160] sm:$0xff]
    %v754 = vld [vmem:[%s9 + $0x168] sm:$0xff]
    %v755 = vld [vmem:[%s9 + $0x170] sm:$0xff]
    %v756 = vld [vmem:[%s9 + $0x178] sm:$0xff]
    %v757 = vld [vmem:[%s9 + $0x180] sm:$0xff]
    %v758 = vld [vmem:[%s9 + $0x188] sm:$0xff]
    %v759 = vld [vmem:[%s9 + $0x190] sm:$0xff]
    %v760 = vld [vmem:[%s9 + $0x198] sm:$0xff]
    %v761 = vld [vmem:[%s9 + $0x1a0] sm:$0xff]
    %v762 = vld [vmem:[%s9 + $0x1a8] sm:$0xff]
    %v763 = vld [vmem:[%s9 + $0x1b0] sm:$0xff]
    %v764 = vld [vmem:[%s9 + $0x1b8] sm:$0xff]
    %v765 = vld [vmem:[%s9 + $0x1c0] sm:$0xff]
    %v766 = vld [vmem:[%s9 + $0x1c8] sm:$0xff]
    %v767 = vld [vmem:[%s9 + $0x1d0] sm:$0xff]
    %v768 = vld [vmem:[%s9 + $0x1d8] sm:$0xff]
    %v769 = vld [vmem:[%s9 + $0x1e0] sm:$0xff]
    %v770 = vld [vmem:[%s9 + $0x1e8] sm:$0xff]
    %v771 = vld [vmem:[%s9 + $0x1f0] sm:$0xff]
    %v772 = vld [vmem:[%s9 + $0x1f8] sm:$0xff]
    %v774 = vlaneseq
    %v775 = vshrl.u32 %v774, 7
    %v776 = vsub.s32 0, %v775
    %v777 = vrot.slane %v410, %v776
    %v778 = vlaneseq
    %v779 = vshrl.u32 %v778, 7
    %v780 = vsub.s32 1, %v779
    %v781 = vrot.slane %v410, %v780
    %784 = vmatprep.subr.mxu0 %v740
    %785 = vmatpush1.msra.mxu0 %v739
    %786 = vmatprep.subr.mxu0 %v738
    %787 = vmatpush1.msra.mxu0 %v737
    %788 = vmatprep.subr.mxu0 %v736
    %789 = vmatpush1.msra.mxu0 %v735
    %790 = vmatprep.subr.mxu0 %v734
    %791 = vmatpush1.msra.mxu0 %v733
    %792 = vmatprep.subr.mxu0 %v732
    %793 = vmatpush1.msra.mxu0 %v731
    %794 = vmatprep.subr.mxu0 %v730
    %795 = vmatpush1.msra.mxu0 %v729
    %796 = vmatprep.subr.mxu0 %v728
    %797 = vmatpush1.msra.mxu0 %v727
    %798 = vmatprep.subr.mxu0 %v726
    %799 = vmatpush1.msra.mxu0 %v725
    %800 = vmatprep.subr.mxu0 %v724
    %801 = vmatpush1.msra.mxu0 %v723
    %802 = vmatprep.subr.mxu0 %v722
    %803 = vmatpush1.msra.mxu0 %v721
    %804 = vmatprep.subr.mxu0 %v720
    %805 = vmatpush1.msra.mxu0 %v719
    %806 = vmatprep.subr.mxu0 %v718
    %807 = vmatpush1.msra.mxu0 %v717
    %808 = vmatprep.subr.mxu0 %v716
    %809 = vmatpush1.msra.mxu0 %v715
    %810 = vmatprep.subr.mxu0 %v714
    %811 = vmatpush1.msra.mxu0 %v713
    %812 = vmatprep.subr.mxu0 %v712
    %813 = vmatpush1.msra.mxu0 %v711
    %814 = vmatprep.subr.mxu0 %v710
    %815 = vmatpush1.msra.mxu0 %v709
    %816 = vmatprep.subr.mxu0 %v772
    %817 = vmatpush2.msra.mxu0 %v771
    %818 = vmatprep.subr.mxu0 %v770
    %819 = vmatpush2.msra.mxu0 %v769
    %820 = vmatprep.subr.mxu0 %v768
    %821 = vmatpush2.msra.mxu0 %v767
    %822 = vmatprep.subr.mxu0 %v766
    %823 = vmatpush2.msra.mxu0 %v765
    %824 = vmatprep.subr.mxu0 %v764
    %825 = vmatpush2.msra.mxu0 %v763
    %826 = vmatprep.subr.mxu0 %v762
    %827 = vmatpush2.msra.mxu0 %v761
    %828 = vmatprep.subr.mxu0 %v760
    %829 = vmatpush2.msra.mxu0 %v759
    %830 = vmatprep.subr.mxu0 %v758
    %831 = vmatpush2.msra.mxu0 %v757
    %832 = vmatprep.subr.mxu0 %v756
    %833 = vmatpush2.msra.mxu0 %v755
    %834 = vmatprep.subr.mxu0 %v754
    %835 = vmatpush2.msra.mxu0 %v753
    %836 = vmatprep.subr.mxu0 %v752
    %837 = vmatpush2.msra.mxu0 %v751
    %838 = vmatprep.subr.mxu0 %v750
    %839 = vmatpush2.msra.mxu0 %v749
    %840 = vmatprep.subr.mxu0 %v748
    %841 = vmatpush2.msra.mxu0 %v747
    %842 = vmatprep.subr.mxu0 %v746
    %843 = vmatpush2.msra.mxu0 %v745
    %844 = vmatprep.subr.mxu0 %v744
    %845 = vmatpush2.msra.mxu0 %v743
    %846 = vmatprep.subr.mxu0 %v742
    %847 = vmatpush2.msra.mxu0 %v741
    %848 = vmatprep.mubr.f32.mxu0 %v706
    %849 = vmatmul.mubr.f32.gmra.mxu0 %v705
    %v850 = vpop.f32.mrf.mxu0
    %v851 = vadd.f32 %v777, %v850
    %v852 = vpop.f32.mrf.mxu0
    %v853 = vadd.f32 %v781, %v852
    %854 = vmatprep.mubr.f32.mxu0 %v708
    %855 = vmatmul.mubr.f32.gmra.mxu0 %v707
    %v856 = vpop.f32.mrf.mxu0
    %v857 = vadd.f32 %v777, %v856
    %v858 = vpop.f32.mrf.mxu0
    %v859 = vadd.f32 %v781, %v858
    %860 = vdwg.mxu0
    %v861 = vmax.f32 %v851, 0.0
    %v862 = vmax.f32 %v853, 0.0
    %v863 = vmax.f32 %v857, 0.0
    %v864 = vmax.f32 %v859, 0.0
    %v865 = vld [vmem:[#allocation8] sm:$0xff]
    %v866 = vld [vmem:[#allocation8 + $0x8] sm:$0xff]
    %v867 = vld [vmem:[#allocation8 + $0x10] sm:$0xff]
    %v868 = vld [vmem:[#allocation8 + $0x18] sm:$0xff]
    %v869 = vld [vmem:[#allocation8 + $0x20] sm:$0xff]
    %v870 = vld [vmem:[#allocation8 + $0x28] sm:$0xff]
    %v871 = vld [vmem:[#allocation8 + $0x30] sm:$0xff]
    %v872 = vld [vmem:[#allocation8 + $0x38] sm:$0xff]
    %v873 = vld [vmem:[#allocation8 + $0x40] sm:$0xff]
    %v874 = vld [vmem:[#allocation8 + $0x48] sm:$0xff]
    %v875 = vld [vmem:[#allocation8 + $0x50] sm:$0xff]
    %v876 = vld [vmem:[#allocation8 + $0x58] sm:$0xff]
    %v877 = vld [vmem:[#allocation8 + $0x60] sm:$0xff]
    %v878 = vld [vmem:[#allocation8 + $0x68] sm:$0xff]
    %v879 = vld [vmem:[#allocation8 + $0x70] sm:$0xff]
    %v880 = vld [vmem:[#allocation8 + $0x78] sm:$0xff]
    %v881 = vld [vmem:[#allocation8 + $0x80] sm:$0xff]
    %v882 = vld [vmem:[#allocation8 + $0x88] sm:$0xff]
    %v883 = vld [vmem:[#allocation8 + $0x90] sm:$0xff]
    %v884 = vld [vmem:[#allocation8 + $0x98] sm:$0xff]
    %v885 = vld [vmem:[#allocation8 + $0xa0] sm:$0xff]
    %v886 = vld [vmem:[#allocation8 + $0xa8] sm:$0xff]
    %v887 = vld [vmem:[#allocation8 + $0xb0] sm:$0xff]
    %v888 = vld [vmem:[#allocation8 + $0xb8] sm:$0xff]
    %v889 = vld [vmem:[#allocation8 + $0xc0] sm:$0xff]
    %v890 = vld [vmem:[#allocation8 + $0xc8] sm:$0xff]
    %v891 = vld [vmem:[#allocation8 + $0xd0] sm:$0xff]
    %v892 = vld [vmem:[#allocation8 + $0xd8] sm:$0xff]
    %v893 = vld [vmem:[#allocation8 + $0xe0] sm:$0xff]
    %v894 = vld [vmem:[#allocation8 + $0xe8] sm:$0xff]
    %v895 = vld [vmem:[#allocation8 + $0xf0] sm:$0xff]
    %v896 = vld [vmem:[#allocation8 + $0xf8] sm:$0xff]
    %v897 = vld [vmem:[#allocation8 + $0x100] sm:$0xff]
    %v898 = vld [vmem:[#allocation8 + $0x108] sm:$0xff]
    %v899 = vld [vmem:[#allocation8 + $0x110] sm:$0xff]
    %v900 = vld [vmem:[#allocation8 + $0x118] sm:$0xff]
    %v901 = vld [vmem:[#allocation8 + $0x120] sm:$0xff]
    %v902 = vld [vmem:[#allocation8 + $0x128] sm:$0xff]
    %v903 = vld [vmem:[#allocation8 + $0x130] sm:$0xff]
    %v904 = vld [vmem:[#allocation8 + $0x138] sm:$0xff]
    %v905 = vld [vmem:[#allocation8 + $0x140] sm:$0xff]
    %v906 = vld [vmem:[#allocation8 + $0x148] sm:$0xff]
    %v907 = vld [vmem:[#allocation8 + $0x150] sm:$0xff]
    %v908 = vld [vmem:[#allocation8 + $0x158] sm:$0xff]
    %v909 = vld [vmem:[#allocation8 + $0x160] sm:$0xff]
    %v910 = vld [vmem:[#allocation8 + $0x168] sm:$0xff]
    %v911 = vld [vmem:[#allocation8 + $0x170] sm:$0xff]
    %v912 = vld [vmem:[#allocation8 + $0x178] sm:$0xff]
    %v913 = vld [vmem:[#allocation8 + $0x180] sm:$0xff]
    %v914 = vld [vmem:[#allocation8 + $0x188] sm:$0xff]
    %v915 = vld [vmem:[#allocation8 + $0x190] sm:$0xff]
    %v916 = vld [vmem:[#allocation8 + $0x198] sm:$0xff]
    %v917 = vld [vmem:[#allocation8 + $0x1a0] sm:$0xff]
    %v918 = vld [vmem:[#allocation8 + $0x1a8] sm:$0xff]
    %v919 = vld [vmem:[#allocation8 + $0x1b0] sm:$0xff]
    %v920 = vld [vmem:[#allocation8 + $0x1b8] sm:$0xff]
    %v921 = vld [vmem:[#allocation8 + $0x1c0] sm:$0xff]
    %v922 = vld [vmem:[#allocation8 + $0x1c8] sm:$0xff]
    %v923 = vld [vmem:[#allocation8 + $0x1d0] sm:$0xff]
    %v924 = vld [vmem:[#allocation8 + $0x1d8] sm:$0xff]
    %v925 = vld [vmem:[#allocation8 + $0x1e0] sm:$0xff]
    %v926 = vld [vmem:[#allocation8 + $0x1e8] sm:$0xff]
    %v927 = vld [vmem:[#allocation8 + $0x1f0] sm:$0xff]
    %v928 = vld [vmem:[#allocation8 + $0x1f8] sm:$0xff]
    %v930 = vlaneseq
    %v931 = vshrl.u32 %v930, 7
    %v932 = vsub.s32 0, %v931
    %v933 = vrot.slane %v411, %v932
    %v934 = vlaneseq
    %v935 = vshrl.u32 %v934, 7
    %v936 = vsub.s32 1, %v935
    %v937 = vrot.slane %v411, %v936
    %940 = vmatprep.subr.mxu0 %v896
    %941 = vmatpush1.msra.mxu0 %v895
    %942 = vmatprep.subr.mxu0 %v894
    %943 = vmatpush1.msra.mxu0 %v893
    %944 = vmatprep.subr.mxu0 %v892
    %945 = vmatpush1.msra.mxu0 %v891
    %946 = vmatprep.subr.mxu0 %v890
    %947 = vmatpush1.msra.mxu0 %v889
    %948 = vmatprep.subr.mxu0 %v888
    %949 = vmatpush1.msra.mxu0 %v887
    %950 = vmatprep.subr.mxu0 %v886
    %951 = vmatpush1.msra.mxu0 %v885
    %952 = vmatprep.subr.mxu0 %v884
    %953 = vmatpush1.msra.mxu0 %v883
    %954 = vmatprep.subr.mxu0 %v882
    %955 = vmatpush1.msra.mxu0 %v881
    %956 = vmatprep.subr.mxu0 %v880
    %957 = vmatpush1.msra.mxu0 %v879
    %958 = vmatprep.subr.mxu0 %v878
    %959 = vmatpush1.msra.mxu0 %v877
    %960 = vmatprep.subr.mxu0 %v876
    %961 = vmatpush1.msra.mxu0 %v875
    %962 = vmatprep.subr.mxu0 %v874
    %963 = vmatpush1.msra.mxu0 %v873
    %964 = vmatprep.subr.mxu0 %v872
    %965 = vmatpush1.msra.mxu0 %v871
    %966 = vmatprep.subr.mxu0 %v870
    %967 = vmatpush1.msra.mxu0 %v869
    %968 = vmatprep.subr.mxu0 %v868
    %969 = vmatpush1.msra.mxu0 %v867
    %970 = vmatprep.subr.mxu0 %v866
    %971 = vmatpush1.msra.mxu0 %v865
    %972 = vmatprep.subr.mxu0 %v928
    %973 = vmatpush2.msra.mxu0 %v927
    %974 = vmatprep.subr.mxu0 %v926
    %975 = vmatpush2.msra.mxu0 %v925
    %976 = vmatprep.subr.mxu0 %v924
    %977 = vmatpush2.msra.mxu0 %v923
    %978 = vmatprep.subr.mxu0 %v922
    %979 = vmatpush2.msra.mxu0 %v921
    %980 = vmatprep.subr.mxu0 %v920
    %981 = vmatpush2.msra.mxu0 %v919
    %982 = vmatprep.subr.mxu0 %v918
    %983 = vmatpush2.msra.mxu0 %v917
    %984 = vmatprep.subr.mxu0 %v916
    %985 = vmatpush2.msra.mxu0 %v915
    %986 = vmatprep.subr.mxu0 %v914
    %987 = vmatpush2.msra.mxu0 %v913
    %988 = vmatprep.subr.mxu0 %v912
    %989 = vmatpush2.msra.mxu0 %v911
    %990 = vmatprep.subr.mxu0 %v910
    %991 = vmatpush2.msra.mxu0 %v909
    %992 = vmatprep.subr.mxu0 %v908
    %993 = vmatpush2.msra.mxu0 %v907
    %994 = vmatprep.subr.mxu0 %v906
    %995 = vmatpush2.msra.mxu0 %v905
    %996 = vmatprep.subr.mxu0 %v904
    %997 = vmatpush2.msra.mxu0 %v903
    %998 = vmatprep.subr.mxu0 %v902
    %999 = vmatpush2.msra.mxu0 %v901
    %1000 = vmatprep.subr.mxu0 %v900
    %1001 = vmatpush2.msra.mxu0 %v899
    %1002 = vmatprep.subr.mxu0 %v898
    %1003 = vmatpush2.msra.mxu0 %v897
    %1004 = vmatprep.mubr.f32.mxu0 %v862
    %1005 = vmatmul.mubr.f32.gmra.mxu0 %v861
    %v1006 = vpop.f32.mrf.mxu0
    %v1007 = vadd.f32 %v933, %v1006
    %v1008 = vpop.f32.mrf.mxu0
    %v1009 = vadd.f32 %v937, %v1008
    %1010 = vmatprep.mubr.f32.mxu0 %v864
    %1011 = vmatmul.mubr.f32.gmra.mxu0 %v863
    %v1012 = vpop.f32.mrf.mxu0
    %v1013 = vadd.f32 %v933, %v1012
    %v1014 = vpop.f32.mrf.mxu0
    %v1015 = vadd.f32 %v937, %v1014
    %1016 = vdwg.mxu0
    %v1017 = vmul.f32 %v1007, %v1007
    %v1018 = vmul.f32 %v1013, %v1013
    %1019 = vadd.xlane.f32.xlu0 %v1017
    %v1020 = vpop.xlane.xlu0 %1019
    %1021 = vadd.xlane.f32.xlu0 %v1018
    %v1022 = vpop.xlane.xlu0 %1021
    %v1023 = vmax.f32 %v1020, 1e-24
    %v1024 = vmax.f32 %v1022, 1e-24
    %v1025 = vrsqrt.pop %v1023
    %v1026 = vrsqrt.pop %v1024
    %v1027 = vmul.f32 %v1007, %v1025
    %v1028 = vmul.f32 %v1013, %v1026
    %v1029 = vmul.f32 %v1009, %v1009
    %v1030 = vmul.f32 %v1015, %v1015
    %1031 = vadd.xlane.f32.xlu0 %v1029
    %v1032 = vpop.xlane.xlu0 %1031
    %1033 = vadd.xlane.f32.xlu0 %v1030
    %v1034 = vpop.xlane.xlu0 %1033
    %v1035 = vrsqrt.pop %v1032
    %v1036 = vmul.f32 %v1032, %v1035
    %vm1037 = vcmp.eq.f32.partialorder %v1032, inf
    %v1038 = vsel %vm1037, %v1032, %v1036
    %vm1039 = vcmp.eq.f32.partialorder %v1032, 0.0
    %v1040 = vand.u32 %v1032, 2147483648
    %v1041 = vsel %vm1039, %v1040, %v1038
    %v1042 = vrsqrt.pop %v1034
    %v1043 = vmul.f32 %v1034, %v1042
    %vm1044 = vcmp.eq.f32.partialorder %v1034, inf
    %v1045 = vsel %vm1044, %v1034, %v1043
    %vm1046 = vcmp.eq.f32.partialorder %v1034, 0.0
    %v1047 = vand.u32 %v1034, 2147483648
    %v1048 = vsel %vm1046, %v1047, %v1045
    %v1049 = vadd.f32 %v1041, 1e-10
    %v1050 = vadd.f32 %v1048, 1e-10
    %v1051 = vrcp.pop %v1049
    %v1052 = vrcp.pop %v1050
    %v1053 = vmul.f32 %v1009, %v1051
    %v1054 = vmul.f32 %v1015, %v1052
    %v1055 = vsub.f32 %v193, %v1053
    %v1056 = vsub.f32 %v199, %v1054
    %v1057 = vld [vmem:[%s3] sm:$0xff]
    %v1058 = vld [vmem:[%s3 + $0x8] sm:$0xff]
    %v1059 = vld [vmem:[%s3 + $0x10] sm:$0xff]
    %v1060 = vld [vmem:[%s3 + $0x18] sm:$0xff]
    %v1061 = vld [vmem:[%s3 + $0x20] sm:$0xff]
    %v1062 = vld [vmem:[%s3 + $0x28] sm:$0xff]
    %v1063 = vld [vmem:[%s3 + $0x30] sm:$0xff]
    %v1064 = vld [vmem:[%s3 + $0x38] sm:$0xff]
    %v1065 = vld [vmem:[%s3 + $0x40] sm:$0xff]
    %v1066 = vld [vmem:[%s3 + $0x48] sm:$0xff]
    %v1067 = vld [vmem:[%s3 + $0x50] sm:$0xff]
    %v1068 = vld [vmem:[%s3 + $0x58] sm:$0xff]
    %v1069 = vld [vmem:[%s3 + $0x60] sm:$0xff]
    %v1070 = vld [vmem:[%s3 + $0x68] sm:$0xff]
    %v1071 = vld [vmem:[%s3 + $0x70] sm:$0xff]
    %v1072 = vld [vmem:[%s3 + $0x78] sm:$0xff]
    %v1073 = vld [vmem:[%s3 + $0x80] sm:$0xff]
    %v1074 = vld [vmem:[%s3 + $0x88] sm:$0xff]
    %v1075 = vld [vmem:[%s3 + $0x90] sm:$0xff]
    %v1076 = vld [vmem:[%s3 + $0x98] sm:$0xff]
    %v1077 = vld [vmem:[%s3 + $0xa0] sm:$0xff]
    %v1078 = vld [vmem:[%s3 + $0xa8] sm:$0xff]
    %v1079 = vld [vmem:[%s3 + $0xb0] sm:$0xff]
    %v1080 = vld [vmem:[%s3 + $0xb8] sm:$0xff]
    %v1081 = vld [vmem:[%s3 + $0xc0] sm:$0xff]
    %v1082 = vld [vmem:[%s3 + $0xc8] sm:$0xff]
    %v1083 = vld [vmem:[%s3 + $0xd0] sm:$0xff]
    %v1084 = vld [vmem:[%s3 + $0xd8] sm:$0xff]
    %v1085 = vld [vmem:[%s3 + $0xe0] sm:$0xff]
    %v1086 = vld [vmem:[%s3 + $0xe8] sm:$0xff]
    %v1087 = vld [vmem:[%s3 + $0xf0] sm:$0xff]
    %v1088 = vld [vmem:[%s3 + $0xf8] sm:$0xff]
    %vm1089 = vcmp.lt.s32.totalorder %v1057, 15
    %v1090 = vsel %vm1089, %v1057, 15
    %vm1091 = vcmp.lt.s32.totalorder %v1058, 15
    %v1092 = vsel %vm1091, %v1058, 15
    %vm1093 = vcmp.lt.s32.totalorder %v1059, 15
    %v1094 = vsel %vm1093, %v1059, 15
    %vm1095 = vcmp.lt.s32.totalorder %v1060, 15
    %v1096 = vsel %vm1095, %v1060, 15
    %vm1097 = vcmp.lt.s32.totalorder %v1061, 15
    %v1098 = vsel %vm1097, %v1061, 15
    %vm1099 = vcmp.lt.s32.totalorder %v1062, 15
    %v1100 = vsel %vm1099, %v1062, 15
    %vm1101 = vcmp.lt.s32.totalorder %v1063, 15
    %v1102 = vsel %vm1101, %v1063, 15
    %vm1103 = vcmp.lt.s32.totalorder %v1064, 15
    %v1104 = vsel %vm1103, %v1064, 15
    %vm1105 = vcmp.lt.s32.totalorder %v1065, 15
    %v1106 = vsel %vm1105, %v1065, 15
    %vm1107 = vcmp.lt.s32.totalorder %v1066, 15
    %v1108 = vsel %vm1107, %v1066, 15
    %vm1109 = vcmp.lt.s32.totalorder %v1067, 15
    %v1110 = vsel %vm1109, %v1067, 15
    %vm1111 = vcmp.lt.s32.totalorder %v1068, 15
    %v1112 = vsel %vm1111, %v1068, 15
    %vm1113 = vcmp.lt.s32.totalorder %v1069, 15
    %v1114 = vsel %vm1113, %v1069, 15
    %vm1115 = vcmp.lt.s32.totalorder %v1070, 15
    %v1116 = vsel %vm1115, %v1070, 15
    %vm1117 = vcmp.lt.s32.totalorder %v1071, 15
    %v1118 = vsel %vm1117, %v1071, 15
    %vm1119 = vcmp.lt.s32.totalorder %v1072, 15
    %v1120 = vsel %vm1119, %v1072, 15
    %vm1121 = vcmp.lt.s32.totalorder %v1073, 15
    %v1122 = vsel %vm1121, %v1073, 15
    %vm1123 = vcmp.lt.s32.totalorder %v1074, 15
    %v1124 = vsel %vm1123, %v1074, 15
    %vm1125 = vcmp.lt.s32.totalorder %v1075, 15
    %v1126 = vsel %vm1125, %v1075, 15
    %vm1127 = vcmp.lt.s32.totalorder %v1076, 15
    %v1128 = vsel %vm1127, %v1076, 15
    %vm1129 = vcmp.lt.s32.totalorder %v1077, 15
    %v1130 = vsel %vm1129, %v1077, 15
    %vm1131 = vcmp.lt.s32.totalorder %v1078, 15
    %v1132 = vsel %vm1131, %v1078, 15
    %vm1133 = vcmp.lt.s32.totalorder %v1079, 15
    %v1134 = vsel %vm1133, %v1079, 15
    %vm1135 = vcmp.lt.s32.totalorder %v1080, 15
    %v1136 = vsel %vm1135, %v1080, 15
    %vm1137 = vcmp.lt.s32.totalorder %v1081, 15
    %v1138 = vsel %vm1137, %v1081, 15
    %vm1139 = vcmp.lt.s32.totalorder %v1082, 15
    %v1140 = vsel %vm1139, %v1082, 15
    %vm1141 = vcmp.lt.s32.totalorder %v1083, 15
    %v1142 = vsel %vm1141, %v1083, 15
    %vm1143 = vcmp.lt.s32.totalorder %v1084, 15
    %v1144 = vsel %vm1143, %v1084, 15
    %vm1145 = vcmp.lt.s32.totalorder %v1085, 15
    %v1146 = vsel %vm1145, %v1085, 15
    %vm1147 = vcmp.lt.s32.totalorder %v1086, 15
    %v1148 = vsel %vm1147, %v1086, 15
    %vm1149 = vcmp.lt.s32.totalorder %v1087, 15
    %v1150 = vsel %vm1149, %v1087, 15
    %vm1151 = vcmp.lt.s32.totalorder %v1088, 15
    %v1152 = vsel %vm1151, %v1088, 15
    %v1153 = vld [vmem:[%s4] sm:$0xff]
    %v1154 = vld [vmem:[%s4 + $0x8] sm:$0xff]
    %v1155 = vld [vmem:[%s4 + $0x10] sm:$0xff]
    %v1156 = vld [vmem:[%s4 + $0x18] sm:$0xff]
    %v1157 = vld [vmem:[%s4 + $0x20] sm:$0xff]
    %v1158 = vld [vmem:[%s4 + $0x28] sm:$0xff]
    %v1159 = vld [vmem:[%s4 + $0x30] sm:$0xff]
    %v1160 = vld [vmem:[%s4 + $0x38] sm:$0xff]
    %v1161 = vld [vmem:[%s4 + $0x40] sm:$0xff]
    %v1162 = vld [vmem:[%s4 + $0x48] sm:$0xff]
    %v1163 = vld [vmem:[%s4 + $0x50] sm:$0xff]
    %v1164 = vld [vmem:[%s4 + $0x58] sm:$0xff]
    %v1165 = vld [vmem:[%s4 + $0x60] sm:$0xff]
    %v1166 = vld [vmem:[%s4 + $0x68] sm:$0xff]
    %v1167 = vld [vmem:[%s4 + $0x70] sm:$0xff]
    %v1168 = vld [vmem:[%s4 + $0x78] sm:$0xff]
    %v1169 = vld [vmem:[%s4 + $0x80] sm:$0xff]
    %v1170 = vld [vmem:[%s4 + $0x88] sm:$0xff]
    %v1171 = vld [vmem:[%s4 + $0x90] sm:$0xff]
    %v1172 = vld [vmem:[%s4 + $0x98] sm:$0xff]
    %v1173 = vld [vmem:[%s4 + $0xa0] sm:$0xff]
    %v1174 = vld [vmem:[%s4 + $0xa8] sm:$0xff]
    %v1175 = vld [vmem:[%s4 + $0xb0] sm:$0xff]
    %v1176 = vld [vmem:[%s4 + $0xb8] sm:$0xff]
    %v1177 = vld [vmem:[%s4 + $0xc0] sm:$0xff]
    %v1178 = vld [vmem:[%s4 + $0xc8] sm:$0xff]
    %v1179 = vld [vmem:[%s4 + $0xd0] sm:$0xff]
    %v1180 = vld [vmem:[%s4 + $0xd8] sm:$0xff]
    %v1181 = vld [vmem:[%s4 + $0xe0] sm:$0xff]
    %v1182 = vld [vmem:[%s4 + $0xe8] sm:$0xff]
    %v1183 = vld [vmem:[%s4 + $0xf0] sm:$0xff]
    %v1184 = vld [vmem:[%s4 + $0xf8] sm:$0xff]
    %vm1185 = vcmp.lt.s32.totalorder %v1153, 15
    %v1186 = vsel %vm1185, %v1153, 15
    %vm1187 = vcmp.lt.s32.totalorder %v1154, 15
    %v1188 = vsel %vm1187, %v1154, 15
    %vm1189 = vcmp.lt.s32.totalorder %v1155, 15
    %v1190 = vsel %vm1189, %v1155, 15
    %vm1191 = vcmp.lt.s32.totalorder %v1156, 15
    %v1192 = vsel %vm1191, %v1156, 15
    %vm1193 = vcmp.lt.s32.totalorder %v1157, 15
    %v1194 = vsel %vm1193, %v1157, 15
    %vm1195 = vcmp.lt.s32.totalorder %v1158, 15
    %v1196 = vsel %vm1195, %v1158, 15
    %vm1197 = vcmp.lt.s32.totalorder %v1159, 15
    %v1198 = vsel %vm1197, %v1159, 15
    %vm1199 = vcmp.lt.s32.totalorder %v1160, 15
    %v1200 = vsel %vm1199, %v1160, 15
    %vm1201 = vcmp.lt.s32.totalorder %v1161, 15
    %v1202 = vsel %vm1201, %v1161, 15
    %vm1203 = vcmp.lt.s32.totalorder %v1162, 15
    %v1204 = vsel %vm1203, %v1162, 15
    %vm1205 = vcmp.lt.s32.totalorder %v1163, 15
    %v1206 = vsel %vm1205, %v1163, 15
    %vm1207 = vcmp.lt.s32.totalorder %v1164, 15
    %v1208 = vsel %vm1207, %v1164, 15
    %vm1209 = vcmp.lt.s32.totalorder %v1165, 15
    %v1210 = vsel %vm1209, %v1165, 15
    %vm1211 = vcmp.lt.s32.totalorder %v1166, 15
    %v1212 = vsel %vm1211, %v1166, 15
    %vm1213 = vcmp.lt.s32.totalorder %v1167, 15
    %v1214 = vsel %vm1213, %v1167, 15
    %vm1215 = vcmp.lt.s32.totalorder %v1168, 15
    %v1216 = vsel %vm1215, %v1168, 15
    %vm1217 = vcmp.lt.s32.totalorder %v1169, 15
    %v1218 = vsel %vm1217, %v1169, 15
    %vm1219 = vcmp.lt.s32.totalorder %v1170, 15
    %v1220 = vsel %vm1219, %v1170, 15
    %vm1221 = vcmp.lt.s32.totalorder %v1171, 15
    %v1222 = vsel %vm1221, %v1171, 15
    %vm1223 = vcmp.lt.s32.totalorder %v1172, 15
    %v1224 = vsel %vm1223, %v1172, 15
    %vm1225 = vcmp.lt.s32.totalorder %v1173, 15
    %v1226 = vsel %vm1225, %v1173, 15
    %vm1227 = vcmp.lt.s32.totalorder %v1174, 15
    %v1228 = vsel %vm1227, %v1174, 15
    %vm1229 = vcmp.lt.s32.totalorder %v1175, 15
    %v1230 = vsel %vm1229, %v1175, 15
    %vm1231 = vcmp.lt.s32.totalorder %v1176, 15
    %v1232 = vsel %vm1231, %v1176, 15
    %vm1233 = vcmp.lt.s32.totalorder %v1177, 15
    %v1234 = vsel %vm1233, %v1177, 15
    %vm1235 = vcmp.lt.s32.totalorder %v1178, 15
    %v1236 = vsel %vm1235, %v1178, 15
    %vm1237 = vcmp.lt.s32.totalorder %v1179, 15
    %v1238 = vsel %vm1237, %v1179, 15
    %vm1239 = vcmp.lt.s32.totalorder %v1180, 15
    %v1240 = vsel %vm1239, %v1180, 15
    %vm1241 = vcmp.lt.s32.totalorder %v1181, 15
    %v1242 = vsel %vm1241, %v1181, 15
    %vm1243 = vcmp.lt.s32.totalorder %v1182, 15
    %v1244 = vsel %vm1243, %v1182, 15
    %vm1245 = vcmp.lt.s32.totalorder %v1183, 15
    %v1246 = vsel %vm1245, %v1183, 15
    %vm1247 = vcmp.lt.s32.totalorder %v1184, 15
    %v1248 = vsel %vm1247, %v1184, 15
    %1249 = vset.pattern.permute.xlu0 0
    %1250 = vperm.xlu0 %1249, %v1090
    %v1251 = vpop.permute.xlu0 %1250
    %1252 = vset.pattern.permute.xlu0 0
    %1253 = vperm.xlu0 %1252, %v1092
    %v1254 = vpop.permute.xlu0 %1253
    %1255 = vset.pattern.permute.xlu0 0
    %1256 = vperm.xlu0 %1255, %v1094
    %v1257 = vpop.permute.xlu0 %1256
    %1258 = vset.pattern.permute.xlu0 0
    %1259 = vperm.xlu0 %1258, %v1096
    %v1260 = vpop.permute.xlu0 %1259
    %1261 = vset.pattern.permute.xlu0 0
    %1262 = vperm.xlu0 %1261, %v1098
    %v1263 = vpop.permute.xlu0 %1262
    %1264 = vset.pattern.permute.xlu0 0
    %1265 = vperm.xlu0 %1264, %v1100
    %v1266 = vpop.permute.xlu0 %1265
    %1267 = vset.pattern.permute.xlu0 0
    %1268 = vperm.xlu0 %1267, %v1102
    %v1269 = vpop.permute.xlu0 %1268
    %1270 = vset.pattern.permute.xlu0 0
    %1271 = vperm.xlu0 %1270, %v1104
    %v1272 = vpop.permute.xlu0 %1271
    %1273 = vset.pattern.permute.xlu0 0
    %1274 = vperm.xlu0 %1273, %v1106
    %v1275 = vpop.permute.xlu0 %1274
    %1276 = vset.pattern.permute.xlu0 0
    %1277 = vperm.xlu0 %1276, %v1108
    %v1278 = vpop.permute.xlu0 %1277
    %1279 = vset.pattern.permute.xlu0 0
    %1280 = vperm.xlu0 %1279, %v1110
    %v1281 = vpop.permute.xlu0 %1280
    %1282 = vset.pattern.permute.xlu0 0
    %1283 = vperm.xlu0 %1282, %v1112
    %v1284 = vpop.permute.xlu0 %1283
    %1285 = vset.pattern.permute.xlu0 0
    %1286 = vperm.xlu0 %1285, %v1114
    %v1287 = vpop.permute.xlu0 %1286
    %1288 = vset.pattern.permute.xlu0 0
    %1289 = vperm.xlu0 %1288, %v1116
    %v1290 = vpop.permute.xlu0 %1289
    %1291 = vset.pattern.permute.xlu0 0
    %1292 = vperm.xlu0 %1291, %v1118
    %v1293 = vpop.permute.xlu0 %1292
    %1294 = vset.pattern.permute.xlu0 0
    %1295 = vperm.xlu0 %1294, %v1120
    %v1296 = vpop.permute.xlu0 %1295
    %1297 = vset.pattern.permute.xlu0 0
    %1298 = vperm.xlu0 %1297, %v1122
    %v1299 = vpop.permute.xlu0 %1298
    %1300 = vset.pattern.permute.xlu0 0
    %1301 = vperm.xlu0 %1300, %v1124
    %v1302 = vpop.permute.xlu0 %1301
    %1303 = vset.pattern.permute.xlu0 0
    %1304 = vperm.xlu0 %1303, %v1126
    %v1305 = vpop.permute.xlu0 %1304
    %1306 = vset.pattern.permute.xlu0 0
    %1307 = vperm.xlu0 %1306, %v1128
    %v1308 = vpop.permute.xlu0 %1307
    %1309 = vset.pattern.permute.xlu0 0
    %1310 = vperm.xlu0 %1309, %v1130
    %v1311 = vpop.permute.xlu0 %1310
    %1312 = vset.pattern.permute.xlu0 0
    %1313 = vperm.xlu0 %1312, %v1132
    %v1314 = vpop.permute.xlu0 %1313
    %1315 = vset.pattern.permute.xlu0 0
    %1316 = vperm.xlu0 %1315, %v1134
    %v1317 = vpop.permute.xlu0 %1316
    %1318 = vset.pattern.permute.xlu0 0
    %1319 = vperm.xlu0 %1318, %v1136
    %v1320 = vpop.permute.xlu0 %1319
    %1321 = vset.pattern.permute.xlu0 0
    %1322 = vperm.xlu0 %1321, %v1138
    %v1323 = vpop.permute.xlu0 %1322
    %1324 = vset.pattern.permute.xlu0 0
    %1325 = vperm.xlu0 %1324, %v1140
    %v1326 = vpop.permute.xlu0 %1325
    %1327 = vset.pattern.permute.xlu0 0
    %1328 = vperm.xlu0 %1327, %v1142
    %v1329 = vpop.permute.xlu0 %1328
    %1330 = vset.pattern.permute.xlu0 0
    %1331 = vperm.xlu0 %1330, %v1144
    %v1332 = vpop.permute.xlu0 %1331
    %1333 = vset.pattern.permute.xlu0 0
    %1334 = vperm.xlu0 %1333, %v1146
    %v1335 = vpop.permute.xlu0 %1334
    %1336 = vset.pattern.permute.xlu0 0
    %1337 = vperm.xlu0 %1336, %v1148
    %v1338 = vpop.permute.xlu0 %1337
    %1339 = vset.pattern.permute.xlu0 0
    %1340 = vperm.xlu0 %1339, %v1150
    %v1341 = vpop.permute.xlu0 %1340
    %1342 = vset.pattern.permute.xlu0 0
    %1343 = vperm.xlu0 %1342, %v1152
    %v1344 = vpop.permute.xlu0 %1343
    %vm1345 = vcmp.eq.s32.totalorder %v1251, %v96
    %vm1346 = vcmp.eq.s32.totalorder %v1254, %v96
    %vm1347 = vcmp.eq.s32.totalorder %v1257, %v96
    %vm1348 = vcmp.eq.s32.totalorder %v1260, %v96
    %vm1349 = vcmp.eq.s32.totalorder %v1263, %v96
    %vm1350 = vcmp.eq.s32.totalorder %v1266, %v96
    %vm1351 = vcmp.eq.s32.totalorder %v1269, %v96
    %vm1352 = vcmp.eq.s32.totalorder %v1272, %v96
    %vm1353 = vcmp.eq.s32.totalorder %v1275, %v96
    %vm1354 = vcmp.eq.s32.totalorder %v1278, %v96
    %vm1355 = vcmp.eq.s32.totalorder %v1281, %v96
    %vm1356 = vcmp.eq.s32.totalorder %v1284, %v96
    %vm1357 = vcmp.eq.s32.totalorder %v1287, %v96
    %vm1358 = vcmp.eq.s32.totalorder %v1290, %v96
    %vm1359 = vcmp.eq.s32.totalorder %v1293, %v96
    %vm1360 = vcmp.eq.s32.totalorder %v1296, %v96
    %vm1361 = vcmp.eq.s32.totalorder %v1299, %v96
    %vm1362 = vcmp.eq.s32.totalorder %v1302, %v96
    %vm1363 = vcmp.eq.s32.totalorder %v1305, %v96
    %vm1364 = vcmp.eq.s32.totalorder %v1308, %v96
    %vm1365 = vcmp.eq.s32.totalorder %v1311, %v96
    %vm1366 = vcmp.eq.s32.totalorder %v1314, %v96
    %vm1367 = vcmp.eq.s32.totalorder %v1317, %v96
    %vm1368 = vcmp.eq.s32.totalorder %v1320, %v96
    %vm1369 = vcmp.eq.s32.totalorder %v1323, %v96
    %vm1370 = vcmp.eq.s32.totalorder %v1326, %v96
    %vm1371 = vcmp.eq.s32.totalorder %v1329, %v96
    %vm1372 = vcmp.eq.s32.totalorder %v1332, %v96
    %vm1373 = vcmp.eq.s32.totalorder %v1335, %v96
    %vm1374 = vcmp.eq.s32.totalorder %v1338, %v96
    %vm1375 = vcmp.eq.s32.totalorder %v1341, %v96
    %vm1376 = vcmp.eq.s32.totalorder %v1344, %v96
    %v1377 = vsel %vm1345, 1, 0
    %v1378 = vsel %vm1346, 1, 0
    %v1379 = vsel %vm1347, 1, 0
    %v1380 = vsel %vm1348, 1, 0
    %v1381 = vsel %vm1349, 1, 0
    %v1382 = vsel %vm1350, 1, 0
    %v1383 = vsel %vm1351, 1, 0
    %v1384 = vsel %vm1352, 1, 0
    %v1385 = vsel %vm1353, 1, 0
    %v1386 = vsel %vm1354, 1, 0
    %v1387 = vsel %vm1355, 1, 0
    %v1388 = vsel %vm1356, 1, 0
    %v1389 = vsel %vm1357, 1, 0
    %v1390 = vsel %vm1358, 1, 0
    %v1391 = vsel %vm1359, 1, 0
    %v1392 = vsel %vm1360, 1, 0
    %v1393 = vsel %vm1361, 1, 0
    %v1394 = vsel %vm1362, 1, 0
    %v1395 = vsel %vm1363, 1, 0
    %v1396 = vsel %vm1364, 1, 0
    %v1397 = vsel %vm1365, 1, 0
    %v1398 = vsel %vm1366, 1, 0
    %v1399 = vsel %vm1367, 1, 0
    %v1400 = vsel %vm1368, 1, 0
    %v1401 = vsel %vm1369, 1, 0
    %v1402 = vsel %vm1370, 1, 0
    %v1403 = vsel %vm1371, 1, 0
    %v1404 = vsel %vm1372, 1, 0
    %v1405 = vsel %vm1373, 1, 0
    %v1406 = vsel %vm1374, 1, 0
    %v1407 = vsel %vm1375, 1, 0
    %v1408 = vsel %vm1376, 1, 0
    %v1409 = vcvt.s32.f32 %v1377
    %v1410 = vcvt.s32.f32 %v1378
    %v1411 = vcvt.s32.f32 %v1379
    %v1412 = vcvt.s32.f32 %v1380
    %v1413 = vcvt.s32.f32 %v1381
    %v1414 = vcvt.s32.f32 %v1382
    %v1415 = vcvt.s32.f32 %v1383
    %v1416 = vcvt.s32.f32 %v1384
    %v1417 = vcvt.s32.f32 %v1385
    %v1418 = vcvt.s32.f32 %v1386
    %v1419 = vcvt.s32.f32 %v1387
    %v1420 = vcvt.s32.f32 %v1388
    %v1421 = vcvt.s32.f32 %v1389
    %v1422 = vcvt.s32.f32 %v1390
    %v1423 = vcvt.s32.f32 %v1391
    %v1424 = vcvt.s32.f32 %v1392
    %v1425 = vcvt.s32.f32 %v1393
    %v1426 = vcvt.s32.f32 %v1394
    %v1427 = vcvt.s32.f32 %v1395
    %v1428 = vcvt.s32.f32 %v1396
    %v1429 = vcvt.s32.f32 %v1397
    %v1430 = vcvt.s32.f32 %v1398
    %v1431 = vcvt.s32.f32 %v1399
    %v1432 = vcvt.s32.f32 %v1400
    %v1433 = vcvt.s32.f32 %v1401
    %v1434 = vcvt.s32.f32 %v1402
    %v1435 = vcvt.s32.f32 %v1403
    %v1436 = vcvt.s32.f32 %v1404
    %v1437 = vcvt.s32.f32 %v1405
    %v1438 = vcvt.s32.f32 %v1406
    %v1439 = vcvt.s32.f32 %v1407
    %v1440 = vcvt.s32.f32 %v1408
    %1441 = vset.pattern.permute.xlu0 0
    %1442 = vperm.xlu0 %1441, %v1186
    %v1443 = vpop.permute.xlu0 %1442
    %1444 = vset.pattern.permute.xlu0 0
    %1445 = vperm.xlu0 %1444, %v1188
    %v1446 = vpop.permute.xlu0 %1445
    %1447 = vset.pattern.permute.xlu0 0
    %1448 = vperm.xlu0 %1447, %v1190
    %v1449 = vpop.permute.xlu0 %1448
    %1450 = vset.pattern.permute.xlu0 0
    %1451 = vperm.xlu0 %1450, %v1192
    %v1452 = vpop.permute.xlu0 %1451
    %1453 = vset.pattern.permute.xlu0 0
    %1454 = vperm.xlu0 %1453, %v1194
    %v1455 = vpop.permute.xlu0 %1454
    %1456 = vset.pattern.permute.xlu0 0
    %1457 = vperm.xlu0 %1456, %v1196
    %v1458 = vpop.permute.xlu0 %1457
    %1459 = vset.pattern.permute.xlu0 0
    %1460 = vperm.xlu0 %1459, %v1198
    %v1461 = vpop.permute.xlu0 %1460
    %1462 = vset.pattern.permute.xlu0 0
    %1463 = vperm.xlu0 %1462, %v1200
    %v1464 = vpop.permute.xlu0 %1463
    %1465 = vset.pattern.permute.xlu0 0
    %1466 = vperm.xlu0 %1465, %v1202
    %v1467 = vpop.permute.xlu0 %1466
    %1468 = vset.pattern.permute.xlu0 0
    %1469 = vperm.xlu0 %1468, %v1204
    %v1470 = vpop.permute.xlu0 %1469
    %1471 = vset.pattern.permute.xlu0 0
    %1472 = vperm.xlu0 %1471, %v1206
    %v1473 = vpop.permute.xlu0 %1472
    %1474 = vset.pattern.permute.xlu0 0
    %1475 = vperm.xlu0 %1474, %v1208
    %v1476 = vpop.permute.xlu0 %1475
    %1477 = vset.pattern.permute.xlu0 0
    %1478 = vperm.xlu0 %1477, %v1210
    %v1479 = vpop.permute.xlu0 %1478
    %1480 = vset.pattern.permute.xlu0 0
    %1481 = vperm.xlu0 %1480, %v1212
    %v1482 = vpop.permute.xlu0 %1481
    %1483 = vset.pattern.permute.xlu0 0
    %1484 = vperm.xlu0 %1483, %v1214
    %v1485 = vpop.permute.xlu0 %1484
    %1486 = vset.pattern.permute.xlu0 0
    %1487 = vperm.xlu0 %1486, %v1216
    %v1488 = vpop.permute.xlu0 %1487
    %1489 = vset.pattern.permute.xlu0 0
    %1490 = vperm.xlu0 %1489, %v1218
    %v1491 = vpop.permute.xlu0 %1490
    %1492 = vset.pattern.permute.xlu0 0
    %1493 = vperm.xlu0 %1492, %v1220
    %v1494 = vpop.permute.xlu0 %1493
    %1495 = vset.pattern.permute.xlu0 0
    %1496 = vperm.xlu0 %1495, %v1222
    %v1497 = vpop.permute.xlu0 %1496
    %1498 = vset.pattern.permute.xlu0 0
    %1499 = vperm.xlu0 %1498, %v1224
    %v1500 = vpop.permute.xlu0 %1499
    %1501 = vset.pattern.permute.xlu0 0
    %1502 = vperm.xlu0 %1501, %v1226
    %v1503 = vpop.permute.xlu0 %1502
    %1504 = vset.pattern.permute.xlu0 0
    %1505 = vperm.xlu0 %1504, %v1228
    %v1506 = vpop.permute.xlu0 %1505
    %1507 = vset.pattern.permute.xlu0 0
    %1508 = vperm.xlu0 %1507, %v1230
    %v1509 = vpop.permute.xlu0 %1508
    %1510 = vset.pattern.permute.xlu0 0
    %1511 = vperm.xlu0 %1510, %v1232
    %v1512 = vpop.permute.xlu0 %1511
    %1513 = vset.pattern.permute.xlu0 0
    %1514 = vperm.xlu0 %1513, %v1234
    %v1515 = vpop.permute.xlu0 %1514
    %1516 = vset.pattern.permute.xlu0 0
    %1517 = vperm.xlu0 %1516, %v1236
    %v1518 = vpop.permute.xlu0 %1517
    %1519 = vset.pattern.permute.xlu0 0
    %1520 = vperm.xlu0 %1519, %v1238
    %v1521 = vpop.permute.xlu0 %1520
    %1522 = vset.pattern.permute.xlu0 0
    %1523 = vperm.xlu0 %1522, %v1240
    %v1524 = vpop.permute.xlu0 %1523
    %1525 = vset.pattern.permute.xlu0 0
    %1526 = vperm.xlu0 %1525, %v1242
    %v1527 = vpop.permute.xlu0 %1526
    %1528 = vset.pattern.permute.xlu0 0
    %1529 = vperm.xlu0 %1528, %v1244
    %v1530 = vpop.permute.xlu0 %1529
    %1531 = vset.pattern.permute.xlu0 0
    %1532 = vperm.xlu0 %1531, %v1246
    %v1533 = vpop.permute.xlu0 %1532
    %1534 = vset.pattern.permute.xlu0 0
    %1535 = vperm.xlu0 %1534, %v1248
    %v1536 = vpop.permute.xlu0 %1535
    %vm1537 = vcmp.eq.s32.totalorder %v1443, %v96
    %vm1538 = vcmp.eq.s32.totalorder %v1446, %v96
    %vm1539 = vcmp.eq.s32.totalorder %v1449, %v96
    %vm1540 = vcmp.eq.s32.totalorder %v1452, %v96
    %vm1541 = vcmp.eq.s32.totalorder %v1455, %v96
    %vm1542 = vcmp.eq.s32.totalorder %v1458, %v96
    %vm1543 = vcmp.eq.s32.totalorder %v1461, %v96
    %vm1544 = vcmp.eq.s32.totalorder %v1464, %v96
    %vm1545 = vcmp.eq.s32.totalorder %v1467, %v96
    %vm1546 = vcmp.eq.s32.totalorder %v1470, %v96
    %vm1547 = vcmp.eq.s32.totalorder %v1473, %v96
    %vm1548 = vcmp.eq.s32.totalorder %v1476, %v96
    %vm1549 = vcmp.eq.s32.totalorder %v1479, %v96
    %vm1550 = vcmp.eq.s32.totalorder %v1482, %v96
    %vm1551 = vcmp.eq.s32.totalorder %v1485, %v96
    %vm1552 = vcmp.eq.s32.totalorder %v1488, %v96
    %vm1553 = vcmp.eq.s32.totalorder %v1491, %v96
    %vm1554 = vcmp.eq.s32.totalorder %v1494, %v96
    %vm1555 = vcmp.eq.s32.totalorder %v1497, %v96
    %vm1556 = vcmp.eq.s32.totalorder %v1500, %v96
    %vm1557 = vcmp.eq.s32.totalorder %v1503, %v96
    %vm1558 = vcmp.eq.s32.totalorder %v1506, %v96
    %vm1559 = vcmp.eq.s32.totalorder %v1509, %v96
    %vm1560 = vcmp.eq.s32.totalorder %v1512, %v96
    %vm1561 = vcmp.eq.s32.totalorder %v1515, %v96
    %vm1562 = vcmp.eq.s32.totalorder %v1518, %v96
    %vm1563 = vcmp.eq.s32.totalorder %v1521, %v96
    %vm1564 = vcmp.eq.s32.totalorder %v1524, %v96
    %vm1565 = vcmp.eq.s32.totalorder %v1527, %v96
    %vm1566 = vcmp.eq.s32.totalorder %v1530, %v96
    %vm1567 = vcmp.eq.s32.totalorder %v1533, %v96
    %vm1568 = vcmp.eq.s32.totalorder %v1536, %v96
    %v1569 = vsel %vm1537, 1, 0
    %v1570 = vsel %vm1538, 1, 0
    %v1571 = vsel %vm1539, 1, 0
    %v1572 = vsel %vm1540, 1, 0
    %v1573 = vsel %vm1541, 1, 0
    %v1574 = vsel %vm1542, 1, 0
    %v1575 = vsel %vm1543, 1, 0
    %v1576 = vsel %vm1544, 1, 0
    %v1577 = vsel %vm1545, 1, 0
    %v1578 = vsel %vm1546, 1, 0
    %v1579 = vsel %vm1547, 1, 0
    %v1580 = vsel %vm1548, 1, 0
    %v1581 = vsel %vm1549, 1, 0
    %v1582 = vsel %vm1550, 1, 0
    %v1583 = vsel %vm1551, 1, 0
    %v1584 = vsel %vm1552, 1, 0
    %v1585 = vsel %vm1553, 1, 0
    %v1586 = vsel %vm1554, 1, 0
    %v1587 = vsel %vm1555, 1, 0
    %v1588 = vsel %vm1556, 1, 0
    %v1589 = vsel %vm1557, 1, 0
    %v1590 = vsel %vm1558, 1, 0
    %v1591 = vsel %vm1559, 1, 0
    %v1592 = vsel %vm1560, 1, 0
    %v1593 = vsel %vm1561, 1, 0
    %v1594 = vsel %vm1562, 1, 0
    %v1595 = vsel %vm1563, 1, 0
    %v1596 = vsel %vm1564, 1, 0
    %v1597 = vsel %vm1565, 1, 0
    %v1598 = vsel %vm1566, 1, 0
    %v1599 = vsel %vm1567, 1, 0
    %v1600 = vsel %vm1568, 1, 0
    %v1601 = vcvt.s32.f32 %v1569
    %v1602 = vcvt.s32.f32 %v1570
    %v1603 = vcvt.s32.f32 %v1571
    %v1604 = vcvt.s32.f32 %v1572
    %v1605 = vcvt.s32.f32 %v1573
    %v1606 = vcvt.s32.f32 %v1574
    %v1607 = vcvt.s32.f32 %v1575
    %v1608 = vcvt.s32.f32 %v1576
    %v1609 = vcvt.s32.f32 %v1577
    %v1610 = vcvt.s32.f32 %v1578
    %v1611 = vcvt.s32.f32 %v1579
    %v1612 = vcvt.s32.f32 %v1580
    %v1613 = vcvt.s32.f32 %v1581
    %v1614 = vcvt.s32.f32 %v1582
    %v1615 = vcvt.s32.f32 %v1583
    %v1616 = vcvt.s32.f32 %v1584
    %v1617 = vcvt.s32.f32 %v1585
    %v1618 = vcvt.s32.f32 %v1586
    %v1619 = vcvt.s32.f32 %v1587
    %v1620 = vcvt.s32.f32 %v1588
    %v1621 = vcvt.s32.f32 %v1589
    %v1622 = vcvt.s32.f32 %v1590
    %v1623 = vcvt.s32.f32 %v1591
    %v1624 = vcvt.s32.f32 %v1592
    %v1625 = vcvt.s32.f32 %v1593
    %v1626 = vcvt.s32.f32 %v1594
    %v1627 = vcvt.s32.f32 %v1595
    %v1628 = vcvt.s32.f32 %v1596
    %v1629 = vcvt.s32.f32 %v1597
    %v1630 = vcvt.s32.f32 %v1598
    %v1631 = vcvt.s32.f32 %v1599
    %v1632 = vcvt.s32.f32 %v1600
    %v1633 = vsub.f32 %v1409, %v1601
    %v1634 = vsub.f32 %v1410, %v1602
    %v1635 = vsub.f32 %v1411, %v1603
    %v1636 = vsub.f32 %v1412, %v1604
    %v1637 = vsub.f32 %v1413, %v1605
    %v1638 = vsub.f32 %v1414, %v1606
    %v1639 = vsub.f32 %v1415, %v1607
    %v1640 = vsub.f32 %v1416, %v1608
    %v1641 = vsub.f32 %v1417, %v1609
    %v1642 = vsub.f32 %v1418, %v1610
    %v1643 = vsub.f32 %v1419, %v1611
    %v1644 = vsub.f32 %v1420, %v1612
    %v1645 = vsub.f32 %v1421, %v1613
    %v1646 = vsub.f32 %v1422, %v1614
    %v1647 = vsub.f32 %v1423, %v1615
    %v1648 = vsub.f32 %v1424, %v1616
    %v1649 = vsub.f32 %v1425, %v1617
    %v1650 = vsub.f32 %v1426, %v1618
    %v1651 = vsub.f32 %v1427, %v1619
    %v1652 = vsub.f32 %v1428, %v1620
    %v1653 = vsub.f32 %v1429, %v1621
    %v1654 = vsub.f32 %v1430, %v1622
    %v1655 = vsub.f32 %v1431, %v1623
    %v1656 = vsub.f32 %v1432, %v1624
    %v1657 = vsub.f32 %v1433, %v1625
    %v1658 = vsub.f32 %v1434, %v1626
    %v1659 = vsub.f32 %v1435, %v1627
    %v1660 = vsub.f32 %v1436, %v1628
    %v1661 = vsub.f32 %v1437, %v1629
    %v1662 = vsub.f32 %v1438, %v1630
    %v1663 = vsub.f32 %v1439, %v1631
    %v1664 = vsub.f32 %v1440, %v1632
    %v1665 = vld [vmem:[#allocation2] sm:$0xff]
    %v1666 = vld [vmem:[#allocation2 + $0x8] sm:$0xff]
    %v1668 = vsel %vm248, %v1633, 0
    %v1671 = vsel %vm248, %v1634, 0
    %v1674 = vsel %vm248, %v1635, 0
    %v1677 = vsel %vm248, %v1636, 0
    %v1680 = vsel %vm248, %v1637, 0
    %v1683 = vsel %vm248, %v1638, 0
    %v1686 = vsel %vm248, %v1639, 0
    %v1689 = vsel %vm248, %v1640, 0
    %v1692 = vsel %vm248, %v1641, 0
    %v1695 = vsel %vm248, %v1642, 0
    %v1698 = vsel %vm248, %v1643, 0
    %v1701 = vsel %vm248, %v1644, 0
    %v1704 = vsel %vm248, %v1645, 0
    %v1707 = vsel %vm248, %v1646, 0
    %v1710 = vsel %vm248, %v1647, 0
    %v1713 = vsel %vm248, %v1648, 0
    %v1716 = vsel %vm248, %v1649, 0
    %v1719 = vsel %vm248, %v1650, 0
    %v1722 = vsel %vm248, %v1651, 0
    %v1725 = vsel %vm248, %v1652, 0
    %v1728 = vsel %vm248, %v1653, 0
    %v1731 = vsel %vm248, %v1654, 0
    %v1734 = vsel %vm248, %v1655, 0
    %v1737 = vsel %vm248, %v1656, 0
    %v1740 = vsel %vm248, %v1657, 0
    %v1743 = vsel %vm248, %v1658, 0
    %v1746 = vsel %vm248, %v1659, 0
    %v1749 = vsel %vm248, %v1660, 0
    %v1752 = vsel %vm248, %v1661, 0
    %v1755 = vsel %vm248, %v1662, 0
    %v1758 = vsel %vm248, %v1663, 0
    %v1761 = vsel %vm248, %v1664, 0
    %1763 = vmatprep.subr.mxu0 0.0
    %1764 = vmatpush1.msra.mxu0 0.0
    %1765 = vmatprep.subr.mxu0 0.0
    %1766 = vmatpush1.msra.mxu0 0.0
    %1767 = vmatprep.subr.mxu0 0.0
    %1768 = vmatpush1.msra.mxu0 0.0
    %1769 = vmatprep.subr.mxu0 0.0
    %1770 = vmatpush1.msra.mxu0 0.0
    %1771 = vmatprep.subr.mxu0 0.0
    %1772 = vmatpush1.msra.mxu0 0.0
    %1773 = vmatprep.subr.mxu0 0.0
    %1774 = vmatpush1.msra.mxu0 0.0
    %1775 = vmatprep.subr.mxu0 0.0
    %1776 = vmatpush1.msra.mxu0 0.0
    %1777 = vmatprep.subr.mxu0 0.0
    %1778 = vmatpush1.msra.mxu0 0.0
    %1779 = vmatprep.subr.mxu0 0.0
    %1780 = vmatpush1.msra.mxu0 0.0
    %1781 = vmatprep.subr.mxu0 0.0
    %1782 = vmatpush1.msra.mxu0 0.0
    %1783 = vmatprep.subr.mxu0 0.0
    %1784 = vmatpush1.msra.mxu0 0.0
    %1785 = vmatprep.subr.mxu0 0.0
    %1786 = vmatpush1.msra.mxu0 0.0
    %1787 = vmatprep.subr.mxu0 0.0
    %1788 = vmatpush1.msra.mxu0 0.0
    %1789 = vmatprep.subr.mxu0 0.0
    %1790 = vmatpush1.msra.mxu0 0.0
    %1791 = vmatprep.subr.mxu0 0.0
    %1792 = vmatpush1.msra.mxu0 %v1666
    %1793 = vmatprep.subr.mxu0 0.0
    %1794 = vmatpush1.msra.mxu0 %v1665
    %1795 = vmatprep.subr.mxu0 0.0
    %1796 = vmatpush2.msra.mxu0 0.0
    %1797 = vmatprep.subr.mxu0 0.0
    %1798 = vmatpush2.msra.mxu0 0.0
    %1799 = vmatprep.subr.mxu0 0.0
    %1800 = vmatpush2.msra.mxu0 0.0
    %1801 = vmatprep.subr.mxu0 0.0
    %1802 = vmatpush2.msra.mxu0 0.0
    %1803 = vmatprep.subr.mxu0 0.0
    %1804 = vmatpush2.msra.mxu0 0.0
    %1805 = vmatprep.subr.mxu0 0.0
    %1806 = vmatpush2.msra.mxu0 0.0
    %1807 = vmatprep.subr.mxu0 0.0
    %1808 = vmatpush2.msra.mxu0 0.0
    %1809 = vmatprep.subr.mxu0 0.0
    %1810 = vmatpush2.msra.mxu0 0.0
    %1811 = vmatprep.subr.mxu0 0.0
    %1812 = vmatpush2.msra.mxu0 0.0
    %1813 = vmatprep.subr.mxu0 0.0
    %1814 = vmatpush2.msra.mxu0 0.0
    %1815 = vmatprep.subr.mxu0 0.0
    %1816 = vmatpush2.msra.mxu0 0.0
    %1817 = vmatprep.subr.mxu0 0.0
    %1818 = vmatpush2.msra.mxu0 0.0
    %1819 = vmatprep.subr.mxu0 0.0
    %1820 = vmatpush2.msra.mxu0 0.0
    %1821 = vmatprep.subr.mxu0 0.0
    %1822 = vmatpush2.msra.mxu0 0.0
    %1823 = vmatprep.subr.mxu0 0.0
    %1824 = vmatpush2.msra.mxu0 0.0
    %1825 = vmatprep.subr.mxu0 0.0
    %1826 = vmatpush2.msra.mxu0 0.0
    %1827 = vmatprep.mubr.f32.mxu0 0.0
    %1828 = vmatmul.mubr.f32.gmra.mxu0 %v1668
    %v1829 = vpop.f32.mrf.mxu0
    %v1830 = vadd.f32 0.0, %v1829
    %v1831 = vpop.f32.mrf.mxu0
    %1832 = vmatprep.mubr.f32.mxu0 0.0
    %1833 = vmatmul.mubr.f32.gmra.mxu0 %v1671
    %v1834 = vpop.f32.mrf.mxu0
    %v1835 = vadd.f32 0.0, %v1834
    %v1836 = vpop.f32.mrf.mxu0
    %1837 = vmatprep.mubr.f32.mxu0 0.0
    %1838 = vmatmul.mubr.f32.gmra.mxu0 %v1674
    %v1839 = vpop.f32.mrf.mxu0
    %v1840 = vadd.f32 0.0, %v1839
    %v1841 = vpop.f32.mrf.mxu0
    %1842 = vmatprep.mubr.f32.mxu0 0.0
    %1843 = vmatmul.mubr.f32.gmra.mxu0 %v1677
    %v1844 = vpop.f32.mrf.mxu0
    %v1845 = vadd.f32 0.0, %v1844
    %v1846 = vpop.f32.mrf.mxu0
    %1847 = vmatprep.mubr.f32.mxu0 0.0
    %1848 = vmatmul.mubr.f32.gmra.mxu0 %v1680
    %v1849 = vpop.f32.mrf.mxu0
    %v1850 = vadd.f32 0.0, %v1849
    %v1851 = vpop.f32.mrf.mxu0
    %1852 = vmatprep.mubr.f32.mxu0 0.0
    %1853 = vmatmul.mubr.f32.gmra.mxu0 %v1683
    %v1854 = vpop.f32.mrf.mxu0
    %v1855 = vadd.f32 0.0, %v1854
    %v1856 = vpop.f32.mrf.mxu0
    %1857 = vmatprep.mubr.f32.mxu0 0.0
    %1858 = vmatmul.mubr.f32.gmra.mxu0 %v1686
    %v1859 = vpop.f32.mrf.mxu0
    %v1860 = vadd.f32 0.0, %v1859
    %v1861 = vpop.f32.mrf.mxu0
    %1862 = vmatprep.mubr.f32.mxu0 0.0
    %1863 = vmatmul.mubr.f32.gmra.mxu0 %v1689
    %v1864 = vpop.f32.mrf.mxu0
    %v1865 = vadd.f32 0.0, %v1864
    %v1866 = vpop.f32.mrf.mxu0
    %1867 = vmatprep.mubr.f32.mxu0 0.0
    %1868 = vmatmul.mubr.f32.gmra.mxu0 %v1692
    %v1869 = vpop.f32.mrf.mxu0
    %v1870 = vadd.f32 0.0, %v1869
    %v1871 = vpop.f32.mrf.mxu0
    %1872 = vmatprep.mubr.f32.mxu0 0.0
    %1873 = vmatmul.mubr.f32.gmra.mxu0 %v1695
    %v1874 = vpop.f32.mrf.mxu0
    %v1875 = vadd.f32 0.0, %v1874
    %v1876 = vpop.f32.mrf.mxu0
    %1877 = vmatprep.mubr.f32.mxu0 0.0
    %1878 = vmatmul.mubr.f32.gmra.mxu0 %v1698
    %v1879 = vpop.f32.mrf.mxu0
    %v1880 = vadd.f32 0.0, %v1879
    %v1881 = vpop.f32.mrf.mxu0
    %1882 = vmatprep.mubr.f32.mxu0 0.0
    %1883 = vmatmul.mubr.f32.gmra.mxu0 %v1701
    %v1884 = vpop.f32.mrf.mxu0
    %v1885 = vadd.f32 0.0, %v1884
    %v1886 = vpop.f32.mrf.mxu0
    %1887 = vmatprep.mubr.f32.mxu0 0.0
    %1888 = vmatmul.mubr.f32.gmra.mxu0 %v1704
    %v1889 = vpop.f32.mrf.mxu0
    %v1890 = vadd.f32 0.0, %v1889
    %v1891 = vpop.f32.mrf.mxu0
    %1892 = vmatprep.mubr.f32.mxu0 0.0
    %1893 = vmatmul.mubr.f32.gmra.mxu0 %v1707
    %v1894 = vpop.f32.mrf.mxu0
    %v1895 = vadd.f32 0.0, %v1894
    %v1896 = vpop.f32.mrf.mxu0
    %1897 = vmatprep.mubr.f32.mxu0 0.0
    %1898 = vmatmul.mubr.f32.gmra.mxu0 %v1710
    %v1899 = vpop.f32.mrf.mxu0
    %v1900 = vadd.f32 0.0, %v1899
    %v1901 = vpop.f32.mrf.mxu0
    %1902 = vmatprep.mubr.f32.mxu0 0.0
    %1903 = vmatmul.mubr.f32.gmra.mxu0 %v1713
    %v1904 = vpop.f32.mrf.mxu0
    %v1905 = vadd.f32 0.0, %v1904
    %v1906 = vpop.f32.mrf.mxu0
    %1907 = vmatprep.mubr.f32.mxu0 0.0
    %1908 = vmatmul.mubr.f32.gmra.mxu0 %v1716
    %v1909 = vpop.f32.mrf.mxu0
    %v1910 = vadd.f32 0.0, %v1909
    %v1911 = vpop.f32.mrf.mxu0
    %1912 = vmatprep.mubr.f32.mxu0 0.0
    %1913 = vmatmul.mubr.f32.gmra.mxu0 %v1719
    %v1914 = vpop.f32.mrf.mxu0
    %v1915 = vadd.f32 0.0, %v1914
    %v1916 = vpop.f32.mrf.mxu0
    %1917 = vmatprep.mubr.f32.mxu0 0.0
    %1918 = vmatmul.mubr.f32.gmra.mxu0 %v1722
    %v1919 = vpop.f32.mrf.mxu0
    %v1920 = vadd.f32 0.0, %v1919
    %v1921 = vpop.f32.mrf.mxu0
    %1922 = vmatprep.mubr.f32.mxu0 0.0
    %1923 = vmatmul.mubr.f32.gmra.mxu0 %v1725
    %v1924 = vpop.f32.mrf.mxu0
    %v1925 = vadd.f32 0.0, %v1924
    %v1926 = vpop.f32.mrf.mxu0
    %1927 = vmatprep.mubr.f32.mxu0 0.0
    %1928 = vmatmul.mubr.f32.gmra.mxu0 %v1728
    %v1929 = vpop.f32.mrf.mxu0
    %v1930 = vadd.f32 0.0, %v1929
    %v1931 = vpop.f32.mrf.mxu0
    %1932 = vmatprep.mubr.f32.mxu0 0.0
    %1933 = vmatmul.mubr.f32.gmra.mxu0 %v1731
    %v1934 = vpop.f32.mrf.mxu0
    %v1935 = vadd.f32 0.0, %v1934
    %v1936 = vpop.f32.mrf.mxu0
    %1937 = vmatprep.mubr.f32.mxu0 0.0
    %1938 = vmatmul.mubr.f32.gmra.mxu0 %v1734
    %v1939 = vpop.f32.mrf.mxu0
    %v1940 = vadd.f32 0.0, %v1939
    %v1941 = vpop.f32.mrf.mxu0
    %1942 = vmatprep.mubr.f32.mxu0 0.0
    %1943 = vmatmul.mubr.f32.gmra.mxu0 %v1737
    %v1944 = vpop.f32.mrf.mxu0
    %v1945 = vadd.f32 0.0, %v1944
    %v1946 = vpop.f32.mrf.mxu0
    %1947 = vmatprep.mubr.f32.mxu0 0.0
    %1948 = vmatmul.mubr.f32.gmra.mxu0 %v1740
    %v1949 = vpop.f32.mrf.mxu0
    %v1950 = vadd.f32 0.0, %v1949
    %v1951 = vpop.f32.mrf.mxu0
    %1952 = vmatprep.mubr.f32.mxu0 0.0
    %1953 = vmatmul.mubr.f32.gmra.mxu0 %v1743
    %v1954 = vpop.f32.mrf.mxu0
    %v1955 = vadd.f32 0.0, %v1954
    %v1956 = vpop.f32.mrf.mxu0
    %1957 = vmatprep.mubr.f32.mxu0 0.0
    %1958 = vmatmul.mubr.f32.gmra.mxu0 %v1746
    %v1959 = vpop.f32.mrf.mxu0
    %v1960 = vadd.f32 0.0, %v1959
    %v1961 = vpop.f32.mrf.mxu0
    %1962 = vmatprep.mubr.f32.mxu0 0.0
    %1963 = vmatmul.mubr.f32.gmra.mxu0 %v1749
    %v1964 = vpop.f32.mrf.mxu0
    %v1965 = vadd.f32 0.0, %v1964
    %v1966 = vpop.f32.mrf.mxu0
    %1967 = vmatprep.mubr.f32.mxu0 0.0
    %1968 = vmatmul.mubr.f32.gmra.mxu0 %v1752
    %v1969 = vpop.f32.mrf.mxu0
    %v1970 = vadd.f32 0.0, %v1969
    %v1971 = vpop.f32.mrf.mxu0
    %1972 = vmatprep.mubr.f32.mxu0 0.0
    %1973 = vmatmul.mubr.f32.gmra.mxu0 %v1755
    %v1974 = vpop.f32.mrf.mxu0
    %v1975 = vadd.f32 0.0, %v1974
    %v1976 = vpop.f32.mrf.mxu0
    %1977 = vmatprep.mubr.f32.mxu0 0.0
    %1978 = vmatmul.mubr.f32.gmra.mxu0 %v1758
    %v1979 = vpop.f32.mrf.mxu0
    %v1980 = vadd.f32 0.0, %v1979
    %v1981 = vpop.f32.mrf.mxu0
    %1982 = vmatprep.mubr.f32.mxu0 0.0
    %1983 = vmatmul.mubr.f32.gmra.mxu0 %v1761
    %v1984 = vpop.f32.mrf.mxu0
    %v1985 = vadd.f32 0.0, %v1984
    %v1986 = vpop.f32.mrf.mxu0
    %1987 = vdwg.mxu0
    %v1988 = vlaneseq
    %v1989 = vshrl.u32 %v1988, 7
    %v1990 = vadd.s32 %v1989, 8
    %v1991 = vadd.s32 %v1989, 16
    %v1992 = vadd.s32 %v1989, 24
    %v1993 = vadd.s32 %v1989, 32
    %v1994 = vadd.s32 %v1989, 40
    %v1995 = vadd.s32 %v1989, 48
    %v1996 = vadd.s32 %v1989, 56
    %v1997 = vadd.s32 %v1989, 64
    %v1998 = vadd.s32 %v1989, 72
    %v1999 = vadd.s32 %v1989, 80
    %v2000 = vadd.s32 %v1989, 88
    %v2001 = vadd.s32 %v1989, 96
    %v2002 = vadd.s32 %v1989, 104
    %v2003 = vadd.s32 %v1989, 112
    %v2004 = vadd.s32 %v1989, 120
    %v2005 = vadd.s32 %v1989, 128
    %v2006 = vadd.s32 %v1989, 136
    %v2007 = vadd.s32 %v1989, 144
    %v2008 = vadd.s32 %v1989, 152
    %v2009 = vadd.s32 %v1989, 160
    %v2010 = vadd.s32 %v1989, 168
    %v2011 = vadd.s32 %v1989, 176
    %v2012 = vadd.s32 %v1989, 184
    %v2013 = vadd.s32 %v1989, 192
    %v2014 = vadd.s32 %v1989, 200
    %v2015 = vadd.s32 %v1989, 208
    %v2016 = vadd.s32 %v1989, 216
    %v2017 = vadd.s32 %v1989, 224
    %v2018 = vadd.s32 %v1989, 232
    %v2019 = vadd.s32 %v1989, 240
    %v2020 = vadd.s32 %v1989, 248
    %v2021 = vmul.u32 %v96, 16
    %vm2022 = vcmp.ge.s32.totalorder %v1989, %v2021
    %vm2023 = vcmp.ge.s32.totalorder %v1990, %v2021
    %vm2024 = vcmp.ge.s32.totalorder %v1991, %v2021
    %vm2025 = vcmp.ge.s32.totalorder %v1992, %v2021
    %vm2026 = vcmp.ge.s32.totalorder %v1993, %v2021
    %vm2027 = vcmp.ge.s32.totalorder %v1994, %v2021
    %vm2028 = vcmp.ge.s32.totalorder %v1995, %v2021
    %vm2029 = vcmp.ge.s32.totalorder %v1996, %v2021
    %vm2030 = vcmp.ge.s32.totalorder %v1997, %v2021
    %vm2031 = vcmp.ge.s32.totalorder %v1998, %v2021
    %vm2032 = vcmp.ge.s32.totalorder %v1999, %v2021
    %vm2033 = vcmp.ge.s32.totalorder %v2000, %v2021
    %vm2034 = vcmp.ge.s32.totalorder %v2001, %v2021
    %vm2035 = vcmp.ge.s32.totalorder %v2002, %v2021
    %vm2036 = vcmp.ge.s32.totalorder %v2003, %v2021
    %vm2037 = vcmp.ge.s32.totalorder %v2004, %v2021
    %vm2038 = vcmp.ge.s32.totalorder %v2005, %v2021
    %vm2039 = vcmp.ge.s32.totalorder %v2006, %v2021
    %vm2040 = vcmp.ge.s32.totalorder %v2007, %v2021
    %vm2041 = vcmp.ge.s32.totalorder %v2008, %v2021
    %vm2042 = vcmp.ge.s32.totalorder %v2009, %v2021
    %vm2043 = vcmp.ge.s32.totalorder %v2010, %v2021
    %vm2044 = vcmp.ge.s32.totalorder %v2011, %v2021
    %vm2045 = vcmp.ge.s32.totalorder %v2012, %v2021
    %vm2046 = vcmp.ge.s32.totalorder %v2013, %v2021
    %vm2047 = vcmp.ge.s32.totalorder %v2014, %v2021
    %vm2048 = vcmp.ge.s32.totalorder %v2015, %v2021
    %vm2049 = vcmp.ge.s32.totalorder %v2016, %v2021
    %vm2050 = vcmp.ge.s32.totalorder %v2017, %v2021
    %vm2051 = vcmp.ge.s32.totalorder %v2018, %v2021
    %vm2052 = vcmp.ge.s32.totalorder %v2019, %v2021
    %vm2053 = vcmp.ge.s32.totalorder %v2020, %v2021
    %v2054 = vadd.s32 %v2021, 16
    %vm2055 = vcmp.lt.s32.totalorder %v1989, %v2054
    %vm2056 = vcmp.lt.s32.totalorder %v1990, %v2054
    %vm2057 = vcmp.lt.s32.totalorder %v1991, %v2054
    %vm2058 = vcmp.lt.s32.totalorder %v1992, %v2054
    %vm2059 = vcmp.lt.s32.totalorder %v1993, %v2054
    %vm2060 = vcmp.lt.s32.totalorder %v1994, %v2054
    %vm2061 = vcmp.lt.s32.totalorder %v1995, %v2054
    %vm2062 = vcmp.lt.s32.totalorder %v1996, %v2054
    %vm2063 = vcmp.lt.s32.totalorder %v1997, %v2054
    %vm2064 = vcmp.lt.s32.totalorder %v1998, %v2054
    %vm2065 = vcmp.lt.s32.totalorder %v1999, %v2054
    %vm2066 = vcmp.lt.s32.totalorder %v2000, %v2054
    %vm2067 = vcmp.lt.s32.totalorder %v2001, %v2054
    %vm2068 = vcmp.lt.s32.totalorder %v2002, %v2054
    %vm2069 = vcmp.lt.s32.totalorder %v2003, %v2054
    %vm2070 = vcmp.lt.s32.totalorder %v2004, %v2054
    %vm2071 = vcmp.lt.s32.totalorder %v2005, %v2054
    %vm2072 = vcmp.lt.s32.totalorder %v2006, %v2054
    %vm2073 = vcmp.lt.s32.totalorder %v2007, %v2054
    %vm2074 = vcmp.lt.s32.totalorder %v2008, %v2054
    %vm2075 = vcmp.lt.s32.totalorder %v2009, %v2054
    %vm2076 = vcmp.lt.s32.totalorder %v2010, %v2054
    %vm2077 = vcmp.lt.s32.totalorder %v2011, %v2054
    %vm2078 = vcmp.lt.s32.totalorder %v2012, %v2054
    %vm2079 = vcmp.lt.s32.totalorder %v2013, %v2054
    %vm2080 = vcmp.lt.s32.totalorder %v2014, %v2054
    %vm2081 = vcmp.lt.s32.totalorder %v2015, %v2054
    %vm2082 = vcmp.lt.s32.totalorder %v2016, %v2054
    %vm2083 = vcmp.lt.s32.totalorder %v2017, %v2054
    %vm2084 = vcmp.lt.s32.totalorder %v2018, %v2054
    %vm2085 = vcmp.lt.s32.totalorder %v2019, %v2054
    %vm2086 = vcmp.lt.s32.totalorder %v2020, %v2054
    %vm2087 = vmand %vm2022, %vm2055
    %vm2088 = vmand %vm2023, %vm2056
    %vm2089 = vmand %vm2024, %vm2057
    %vm2090 = vmand %vm2025, %vm2058
    %vm2091 = vmand %vm2026, %vm2059
    %vm2092 = vmand %vm2027, %vm2060
    %vm2093 = vmand %vm2028, %vm2061
    %vm2094 = vmand %vm2029, %vm2062
    %vm2095 = vmand %vm2030, %vm2063
    %vm2096 = vmand %vm2031, %vm2064
    %vm2097 = vmand %vm2032, %vm2065
    %vm2098 = vmand %vm2033, %vm2066
    %vm2099 = vmand %vm2034, %vm2067
    %vm2100 = vmand %vm2035, %vm2068
    %vm2101 = vmand %vm2036, %vm2069
    %vm2102 = vmand %vm2037, %vm2070
    %vm2103 = vmand %vm2038, %vm2071
    %vm2104 = vmand %vm2039, %vm2072
    %vm2105 = vmand %vm2040, %vm2073
    %vm2106 = vmand %vm2041, %vm2074
    %vm2107 = vmand %vm2042, %vm2075
    %vm2108 = vmand %vm2043, %vm2076
    %vm2109 = vmand %vm2044, %vm2077
    %vm2110 = vmand %vm2045, %vm2078
    %vm2111 = vmand %vm2046, %vm2079
    %vm2112 = vmand %vm2047, %vm2080
    %vm2113 = vmand %vm2048, %vm2081
    %vm2114 = vmand %vm2049, %vm2082
    %vm2115 = vmand %vm2050, %vm2083
    %vm2116 = vmand %vm2051, %vm2084
    %vm2117 = vmand %vm2052, %vm2085
    %vm2118 = vmand %vm2053, %vm2086
    %v2119 = vsel %vm2087, 1, 0
    %v2120 = vsel %vm2088, 1, 0
    %v2121 = vsel %vm2089, 1, 0
    %v2122 = vsel %vm2090, 1, 0
    %v2123 = vsel %vm2091, 1, 0
    %v2124 = vsel %vm2092, 1, 0
    %v2125 = vsel %vm2093, 1, 0
    %v2126 = vsel %vm2094, 1, 0
    %v2127 = vsel %vm2095, 1, 0
    %v2128 = vsel %vm2096, 1, 0
    %v2129 = vsel %vm2097, 1, 0
    %v2130 = vsel %vm2098, 1, 0
    %v2131 = vsel %vm2099, 1, 0
    %v2132 = vsel %vm2100, 1, 0
    %v2133 = vsel %vm2101, 1, 0
    %v2134 = vsel %vm2102, 1, 0
    %v2135 = vsel %vm2103, 1, 0
    %v2136 = vsel %vm2104, 1, 0
    %v2137 = vsel %vm2105, 1, 0
    %v2138 = vsel %vm2106, 1, 0
    %v2139 = vsel %vm2107, 1, 0
    %v2140 = vsel %vm2108, 1, 0
    %v2141 = vsel %vm2109, 1, 0
    %v2142 = vsel %vm2110, 1, 0
    %v2143 = vsel %vm2111, 1, 0
    %v2144 = vsel %vm2112, 1, 0
    %v2145 = vsel %vm2113, 1, 0
    %v2146 = vsel %vm2114, 1, 0
    %v2147 = vsel %vm2115, 1, 0
    %v2148 = vsel %vm2116, 1, 0
    %v2149 = vsel %vm2117, 1, 0
    %v2150 = vsel %vm2118, 1, 0
    %v2151 = vcvt.s32.f32 %v2119
    %v2152 = vcvt.s32.f32 %v2120
    %v2153 = vcvt.s32.f32 %v2121
    %v2154 = vcvt.s32.f32 %v2122
    %v2155 = vcvt.s32.f32 %v2123
    %v2156 = vcvt.s32.f32 %v2124
    %v2157 = vcvt.s32.f32 %v2125
    %v2158 = vcvt.s32.f32 %v2126
    %v2159 = vcvt.s32.f32 %v2127
    %v2160 = vcvt.s32.f32 %v2128
    %v2161 = vcvt.s32.f32 %v2129
    %v2162 = vcvt.s32.f32 %v2130
    %v2163 = vcvt.s32.f32 %v2131
    %v2164 = vcvt.s32.f32 %v2132
    %v2165 = vcvt.s32.f32 %v2133
    %v2166 = vcvt.s32.f32 %v2134
    %v2167 = vcvt.s32.f32 %v2135
    %v2168 = vcvt.s32.f32 %v2136
    %v2169 = vcvt.s32.f32 %v2137
    %v2170 = vcvt.s32.f32 %v2138
    %v2171 = vcvt.s32.f32 %v2139
    %v2172 = vcvt.s32.f32 %v2140
    %v2173 = vcvt.s32.f32 %v2141
    %v2174 = vcvt.s32.f32 %v2142
    %v2175 = vcvt.s32.f32 %v2143
    %v2176 = vcvt.s32.f32 %v2144
    %v2177 = vcvt.s32.f32 %v2145
    %v2178 = vcvt.s32.f32 %v2146
    %v2179 = vcvt.s32.f32 %v2147
    %v2180 = vcvt.s32.f32 %v2148
    %v2181 = vcvt.s32.f32 %v2149
    %v2182 = vcvt.s32.f32 %v2150
    %v2184 = vsel %vm248, %v2151, 0
    %v2187 = vsel %vm248, %v2152, 0
    %v2190 = vsel %vm248, %v2153, 0
    %v2193 = vsel %vm248, %v2154, 0
    %v2196 = vsel %vm248, %v2155, 0
    %v2199 = vsel %vm248, %v2156, 0
    %v2202 = vsel %vm248, %v2157, 0
    %v2205 = vsel %vm248, %v2158, 0
    %v2208 = vsel %vm248, %v2159, 0
    %v2211 = vsel %vm248, %v2160, 0
    %v2214 = vsel %vm248, %v2161, 0
    %v2217 = vsel %vm248, %v2162, 0
    %v2220 = vsel %vm248, %v2163, 0
    %v2223 = vsel %vm248, %v2164, 0
    %v2226 = vsel %vm248, %v2165, 0
    %v2229 = vsel %vm248, %v2166, 0
    %v2232 = vsel %vm248, %v2167, 0
    %v2235 = vsel %vm248, %v2168, 0
    %v2238 = vsel %vm248, %v2169, 0
    %v2241 = vsel %vm248, %v2170, 0
    %v2244 = vsel %vm248, %v2171, 0
    %v2247 = vsel %vm248, %v2172, 0
    %v2250 = vsel %vm248, %v2173, 0
    %v2253 = vsel %vm248, %v2174, 0
    %v2256 = vsel %vm248, %v2175, 0
    %v2259 = vsel %vm248, %v2176, 0
    %v2262 = vsel %vm248, %v2177, 0
    %v2265 = vsel %vm248, %v2178, 0
    %v2268 = vsel %vm248, %v2179, 0
    %v2271 = vsel %vm248, %v2180, 0
    %v2274 = vsel %vm248, %v2181, 0
    %v2277 = vsel %vm248, %v2182, 0
    %2279 = vmatprep.subr.mxu0 0.0
    %2280 = vmatpush1.msra.mxu0 0.0
    %2281 = vmatprep.subr.mxu0 0.0
    %2282 = vmatpush1.msra.mxu0 0.0
    %2283 = vmatprep.subr.mxu0 0.0
    %2284 = vmatpush1.msra.mxu0 0.0
    %2285 = vmatprep.subr.mxu0 0.0
    %2286 = vmatpush1.msra.mxu0 0.0
    %2287 = vmatprep.subr.mxu0 0.0
    %2288 = vmatpush1.msra.mxu0 0.0
    %2289 = vmatprep.subr.mxu0 0.0
    %2290 = vmatpush1.msra.mxu0 0.0
    %2291 = vmatprep.subr.mxu0 0.0
    %2292 = vmatpush1.msra.mxu0 0.0
    %2293 = vmatprep.subr.mxu0 0.0
    %2294 = vmatpush1.msra.mxu0 0.0
    %2295 = vmatprep.subr.mxu0 0.0
    %2296 = vmatpush1.msra.mxu0 0.0
    %2297 = vmatprep.subr.mxu0 0.0
    %2298 = vmatpush1.msra.mxu0 0.0
    %2299 = vmatprep.subr.mxu0 0.0
    %2300 = vmatpush1.msra.mxu0 0.0
    %2301 = vmatprep.subr.mxu0 0.0
    %2302 = vmatpush1.msra.mxu0 0.0
    %2303 = vmatprep.subr.mxu0 0.0
    %2304 = vmatpush1.msra.mxu0 0.0
    %2305 = vmatprep.subr.mxu0 0.0
    %2306 = vmatpush1.msra.mxu0 0.0
    %2307 = vmatprep.subr.mxu0 %v197
    %2308 = vmatpush1.msra.mxu0 %v1028
    %2309 = vmatprep.subr.mxu0 %v191
    %2310 = vmatpush1.msra.mxu0 %v1027
    %2311 = vmatprep.subr.mxu0 0.0
    %2312 = vmatpush2.msra.mxu0 0.0
    %2313 = vmatprep.subr.mxu0 0.0
    %2314 = vmatpush2.msra.mxu0 0.0
    %2315 = vmatprep.subr.mxu0 0.0
    %2316 = vmatpush2.msra.mxu0 0.0
    %2317 = vmatprep.subr.mxu0 0.0
    %2318 = vmatpush2.msra.mxu0 0.0
    %2319 = vmatprep.subr.mxu0 0.0
    %2320 = vmatpush2.msra.mxu0 0.0
    %2321 = vmatprep.subr.mxu0 0.0
    %2322 = vmatpush2.msra.mxu0 0.0
    %2323 = vmatprep.subr.mxu0 0.0
    %2324 = vmatpush2.msra.mxu0 0.0
    %2325 = vmatprep.subr.mxu0 0.0
    %2326 = vmatpush2.msra.mxu0 0.0
    %2327 = vmatprep.subr.mxu0 0.0
    %2328 = vmatpush2.msra.mxu0 0.0
    %2329 = vmatprep.subr.mxu0 0.0
    %2330 = vmatpush2.msra.mxu0 0.0
    %2331 = vmatprep.subr.mxu0 0.0
    %2332 = vmatpush2.msra.mxu0 0.0
    %2333 = vmatprep.subr.mxu0 0.0
    %2334 = vmatpush2.msra.mxu0 0.0
    %2335 = vmatprep.subr.mxu0 0.0
    %2336 = vmatpush2.msra.mxu0 0.0
    %2337 = vmatprep.subr.mxu0 0.0
    %2338 = vmatpush2.msra.mxu0 0.0
    %2339 = vmatprep.subr.mxu0 0.0
    %2340 = vmatpush2.msra.mxu0 0.0
    %2341 = vmatprep.subr.mxu0 0.0
    %2342 = vmatpush2.msra.mxu0 0.0
    %2343 = vmatprep.mubr.f32.mxu0 0.0
    %2344 = vmatmul.mubr.f32.gmra.mxu0 %v2184
    %v2345 = vpop.f32.mrf.mxu0
    %v2346 = vadd.f32 0.0, %v2345
    %v2347 = vpop.f32.mrf.mxu0
    %v2348 = vadd.f32 0.0, %v2347
    %2349 = vmatprep.mubr.f32.mxu0 0.0
    %2350 = vmatmul.mubr.f32.gmra.mxu0 %v2187
    %v2351 = vpop.f32.mrf.mxu0
    %v2352 = vadd.f32 0.0, %v2351
    %v2353 = vpop.f32.mrf.mxu0
    %v2354 = vadd.f32 0.0, %v2353
    %2355 = vmatprep.mubr.f32.mxu0 0.0
    %2356 = vmatmul.mubr.f32.gmra.mxu0 %v2190
    %v2357 = vpop.f32.mrf.mxu0
    %v2358 = vadd.f32 0.0, %v2357
    %v2359 = vpop.f32.mrf.mxu0
    %v2360 = vadd.f32 0.0, %v2359
    %2361 = vmatprep.mubr.f32.mxu0 0.0
    %2362 = vmatmul.mubr.f32.gmra.mxu0 %v2193
    %v2363 = vpop.f32.mrf.mxu0
    %v2364 = vadd.f32 0.0, %v2363
    %v2365 = vpop.f32.mrf.mxu0
    %v2366 = vadd.f32 0.0, %v2365
    %2367 = vmatprep.mubr.f32.mxu0 0.0
    %2368 = vmatmul.mubr.f32.gmra.mxu0 %v2196
    %v2369 = vpop.f32.mrf.mxu0
    %v2370 = vadd.f32 0.0, %v2369
    %v2371 = vpop.f32.mrf.mxu0
    %v2372 = vadd.f32 0.0, %v2371
    %2373 = vmatprep.mubr.f32.mxu0 0.0
    %2374 = vmatmul.mubr.f32.gmra.mxu0 %v2199
    %v2375 = vpop.f32.mrf.mxu0
    %v2376 = vadd.f32 0.0, %v2375
    %v2377 = vpop.f32.mrf.mxu0
    %v2378 = vadd.f32 0.0, %v2377
    %2379 = vmatprep.mubr.f32.mxu0 0.0
    %2380 = vmatmul.mubr.f32.gmra.mxu0 %v2202
    %v2381 = vpop.f32.mrf.mxu0
    %v2382 = vadd.f32 0.0, %v2381
    %v2383 = vpop.f32.mrf.mxu0
    %v2384 = vadd.f32 0.0, %v2383
    %2385 = vmatprep.mubr.f32.mxu0 0.0
    %2386 = vmatmul.mubr.f32.gmra.mxu0 %v2205
    %v2387 = vpop.f32.mrf.mxu0
    %v2388 = vadd.f32 0.0, %v2387
    %v2389 = vpop.f32.mrf.mxu0
    %v2390 = vadd.f32 0.0, %v2389
    %2391 = vmatprep.mubr.f32.mxu0 0.0
    %2392 = vmatmul.mubr.f32.gmra.mxu0 %v2208
    %v2393 = vpop.f32.mrf.mxu0
    %v2394 = vadd.f32 0.0, %v2393
    %v2395 = vpop.f32.mrf.mxu0
    %v2396 = vadd.f32 0.0, %v2395
    %2397 = vmatprep.mubr.f32.mxu0 0.0
    %2398 = vmatmul.mubr.f32.gmra.mxu0 %v2211
    %v2399 = vpop.f32.mrf.mxu0
    %v2400 = vadd.f32 0.0, %v2399
    %v2401 = vpop.f32.mrf.mxu0
    %v2402 = vadd.f32 0.0, %v2401
    %2403 = vmatprep.mubr.f32.mxu0 0.0
    %2404 = vmatmul.mubr.f32.gmra.mxu0 %v2214
    %v2405 = vpop.f32.mrf.mxu0
    %v2406 = vadd.f32 0.0, %v2405
    %v2407 = vpop.f32.mrf.mxu0
    %v2408 = vadd.f32 0.0, %v2407
    %2409 = vmatprep.mubr.f32.mxu0 0.0
    %2410 = vmatmul.mubr.f32.gmra.mxu0 %v2217
    %v2411 = vpop.f32.mrf.mxu0
    %v2412 = vadd.f32 0.0, %v2411
    %v2413 = vpop.f32.mrf.mxu0
    %v2414 = vadd.f32 0.0, %v2413
    %2415 = vmatprep.mubr.f32.mxu0 0.0
    %2416 = vmatmul.mubr.f32.gmra.mxu0 %v2220
    %v2417 = vpop.f32.mrf.mxu0
    %v2418 = vadd.f32 0.0, %v2417
    %v2419 = vpop.f32.mrf.mxu0
    %v2420 = vadd.f32 0.0, %v2419
    %2421 = vmatprep.mubr.f32.mxu0 0.0
    %2422 = vmatmul.mubr.f32.gmra.mxu0 %v2223
    %v2423 = vpop.f32.mrf.mxu0
    %v2424 = vadd.f32 0.0, %v2423
    %v2425 = vpop.f32.mrf.mxu0
    %v2426 = vadd.f32 0.0, %v2425
    %2427 = vmatprep.mubr.f32.mxu0 0.0
    %2428 = vmatmul.mubr.f32.gmra.mxu0 %v2226
    %v2429 = vpop.f32.mrf.mxu0
    %v2430 = vadd.f32 0.0, %v2429
    %v2431 = vpop.f32.mrf.mxu0
    %v2432 = vadd.f32 0.0, %v2431
    %2433 = vmatprep.mubr.f32.mxu0 0.0
    %2434 = vmatmul.mubr.f32.gmra.mxu0 %v2229
    %v2435 = vpop.f32.mrf.mxu0
    %v2436 = vadd.f32 0.0, %v2435
    %v2437 = vpop.f32.mrf.mxu0
    %v2438 = vadd.f32 0.0, %v2437
    %2439 = vmatprep.mubr.f32.mxu0 0.0
    %2440 = vmatmul.mubr.f32.gmra.mxu0 %v2232
    %v2441 = vpop.f32.mrf.mxu0
    %v2442 = vadd.f32 0.0, %v2441
    %v2443 = vpop.f32.mrf.mxu0
    %v2444 = vadd.f32 0.0, %v2443
    %2445 = vmatprep.mubr.f32.mxu0 0.0
    %2446 = vmatmul.mubr.f32.gmra.mxu0 %v2235
    %v2447 = vpop.f32.mrf.mxu0
    %v2448 = vadd.f32 0.0, %v2447
    %v2449 = vpop.f32.mrf.mxu0
    %v2450 = vadd.f32 0.0, %v2449
    %2451 = vmatprep.mubr.f32.mxu0 0.0
    %2452 = vmatmul.mubr.f32.gmra.mxu0 %v2238
    %v2453 = vpop.f32.mrf.mxu0
    %v2454 = vadd.f32 0.0, %v2453
    %v2455 = vpop.f32.mrf.mxu0
    %v2456 = vadd.f32 0.0, %v2455
    %2457 = vmatprep.mubr.f32.mxu0 0.0
    %2458 = vmatmul.mubr.f32.gmra.mxu0 %v2241
    %v2459 = vpop.f32.mrf.mxu0
    %v2460 = vadd.f32 0.0, %v2459
    %v2461 = vpop.f32.mrf.mxu0
    %v2462 = vadd.f32 0.0, %v2461
    %2463 = vmatprep.mubr.f32.mxu0 0.0
    %2464 = vmatmul.mubr.f32.gmra.mxu0 %v2244
    %v2465 = vpop.f32.mrf.mxu0
    %v2466 = vadd.f32 0.0, %v2465
    %v2467 = vpop.f32.mrf.mxu0
    %v2468 = vadd.f32 0.0, %v2467
    %2469 = vmatprep.mubr.f32.mxu0 0.0
    %2470 = vmatmul.mubr.f32.gmra.mxu0 %v2247
    %v2471 = vpop.f32.mrf.mxu0
    %v2472 = vadd.f32 0.0, %v2471
    %v2473 = vpop.f32.mrf.mxu0
    %v2474 = vadd.f32 0.0, %v2473
    %2475 = vmatprep.mubr.f32.mxu0 0.0
    %2476 = vmatmul.mubr.f32.gmra.mxu0 %v2250
    %v2477 = vpop.f32.mrf.mxu0
    %v2478 = vadd.f32 0.0, %v2477
    %v2479 = vpop.f32.mrf.mxu0
    %v2480 = vadd.f32 0.0, %v2479
    %2481 = vmatprep.mubr.f32.mxu0 0.0
    %2482 = vmatmul.mubr.f32.gmra.mxu0 %v2253
    %v2483 = vpop.f32.mrf.mxu0
    %v2484 = vadd.f32 0.0, %v2483
    %v2485 = vpop.f32.mrf.mxu0
    %v2486 = vadd.f32 0.0, %v2485
    %2487 = vmatprep.mubr.f32.mxu0 0.0
    %2488 = vmatmul.mubr.f32.gmra.mxu0 %v2256
    %v2489 = vpop.f32.mrf.mxu0
    %v2490 = vadd.f32 0.0, %v2489
    %v2491 = vpop.f32.mrf.mxu0
    %v2492 = vadd.f32 0.0, %v2491
    %2493 = vmatprep.mubr.f32.mxu0 0.0
    %2494 = vmatmul.mubr.f32.gmra.mxu0 %v2259
    %v2495 = vpop.f32.mrf.mxu0
    %v2496 = vadd.f32 0.0, %v2495
    %v2497 = vpop.f32.mrf.mxu0
    %v2498 = vadd.f32 0.0, %v2497
    %2499 = vmatprep.mubr.f32.mxu0 0.0
    %2500 = vmatmul.mubr.f32.gmra.mxu0 %v2262
    %v2501 = vpop.f32.mrf.mxu0
    %v2502 = vadd.f32 0.0, %v2501
    %v2503 = vpop.f32.mrf.mxu0
    %v2504 = vadd.f32 0.0, %v2503
    %2505 = vmatprep.mubr.f32.mxu0 0.0
    %2506 = vmatmul.mubr.f32.gmra.mxu0 %v2265
    %v2507 = vpop.f32.mrf.mxu0
    %v2508 = vadd.f32 0.0, %v2507
    %v2509 = vpop.f32.mrf.mxu0
    %v2510 = vadd.f32 0.0, %v2509
    %2511 = vmatprep.mubr.f32.mxu0 0.0
    %2512 = vmatmul.mubr.f32.gmra.mxu0 %v2268
    %v2513 = vpop.f32.mrf.mxu0
    %v2514 = vadd.f32 0.0, %v2513
    %v2515 = vpop.f32.mrf.mxu0
    %v2516 = vadd.f32 0.0, %v2515
    %2517 = vmatprep.mubr.f32.mxu0 0.0
    %2518 = vmatmul.mubr.f32.gmra.mxu0 %v2271
    %v2519 = vpop.f32.mrf.mxu0
    %v2520 = vadd.f32 0.0, %v2519
    %v2521 = vpop.f32.mrf.mxu0
    %v2522 = vadd.f32 0.0, %v2521
    %2523 = vmatprep.mubr.f32.mxu0 0.0
    %2524 = vmatmul.mubr.f32.gmra.mxu0 %v2274
    %v2525 = vpop.f32.mrf.mxu0
    %v2526 = vadd.f32 0.0, %v2525
    %v2527 = vpop.f32.mrf.mxu0
    %v2528 = vadd.f32 0.0, %v2527
    %2529 = vmatprep.mubr.f32.mxu0 0.0
    %2530 = vmatmul.mubr.f32.gmra.mxu0 %v2277
    %v2531 = vpop.f32.mrf.mxu0
    %v2532 = vadd.f32 0.0, %v2531
    %v2533 = vpop.f32.mrf.mxu0
    %v2534 = vadd.f32 0.0, %v2533
    %2535 = vdwg.mxu0
    %2536 = vmatprep.subr.mxu0 0.0
    %2537 = vmatpush1.msra.mxu0 0.0
    %2538 = vmatprep.subr.mxu0 0.0
    %2539 = vmatpush1.msra.mxu0 0.0
    %2540 = vmatprep.subr.mxu0 0.0
    %2541 = vmatpush1.msra.mxu0 0.0
    %2542 = vmatprep.subr.mxu0 0.0
    %2543 = vmatpush1.msra.mxu0 0.0
    %2544 = vmatprep.subr.mxu0 0.0
    %2545 = vmatpush1.msra.mxu0 0.0
    %2546 = vmatprep.subr.mxu0 0.0
    %2547 = vmatpush1.msra.mxu0 0.0
    %2548 = vmatprep.subr.mxu0 0.0
    %2549 = vmatpush1.msra.mxu0 0.0
    %2550 = vmatprep.subr.mxu0 0.0
    %2551 = vmatpush1.msra.mxu0 0.0
    %2552 = vmatprep.subr.mxu0 0.0
    %2553 = vmatpush1.msra.mxu0 0.0
    %2554 = vmatprep.subr.mxu0 0.0
    %2555 = vmatpush1.msra.mxu0 0.0
    %2556 = vmatprep.subr.mxu0 0.0
    %2557 = vmatpush1.msra.mxu0 0.0
    %2558 = vmatprep.subr.mxu0 0.0
    %2559 = vmatpush1.msra.mxu0 0.0
    %2560 = vmatprep.subr.mxu0 0.0
    %2561 = vmatpush1.msra.mxu0 0.0
    %2562 = vmatprep.subr.mxu0 0.0
    %2563 = vmatpush1.msra.mxu0 0.0
    %2564 = vmatprep.subr.mxu0 0.0
    %2565 = vmatpush1.msra.mxu0 %v1056
    %2566 = vmatprep.subr.mxu0 0.0
    %2567 = vmatpush1.msra.mxu0 %v1055
    %2568 = vmatprep.subr.mxu0 0.0
    %2569 = vmatpush2.msra.mxu0 0.0
    %2570 = vmatprep.subr.mxu0 0.0
    %2571 = vmatpush2.msra.mxu0 0.0
    %2572 = vmatprep.subr.mxu0 0.0
    %2573 = vmatpush2.msra.mxu0 0.0
    %2574 = vmatprep.subr.mxu0 0.0
    %2575 = vmatpush2.msra.mxu0 0.0
    %2576 = vmatprep.subr.mxu0 0.0
    %2577 = vmatpush2.msra.mxu0 0.0
    %2578 = vmatprep.subr.mxu0 0.0
    %2579 = vmatpush2.msra.mxu0 0.0
    %2580 = vmatprep.subr.mxu0 0.0
    %2581 = vmatpush2.msra.mxu0 0.0
    %2582 = vmatprep.subr.mxu0 0.0
    %2583 = vmatpush2.msra.mxu0 0.0
    %2584 = vmatprep.subr.mxu0 0.0
    %2585 = vmatpush2.msra.mxu0 0.0
    %2586 = vmatprep.subr.mxu0 0.0
    %2587 = vmatpush2.msra.mxu0 0.0
    %2588 = vmatprep.subr.mxu0 0.0
    %2589 = vmatpush2.msra.mxu0 0.0
    %2590 = vmatprep.subr.mxu0 0.0
    %2591 = vmatpush2.msra.mxu0 0.0
    %2592 = vmatprep.subr.mxu0 0.0
    %2593 = vmatpush2.msra.mxu0 0.0
    %2594 = vmatprep.subr.mxu0 0.0
    %2595 = vmatpush2.msra.mxu0 0.0
    %2596 = vmatprep.subr.mxu0 0.0
    %2597 = vmatpush2.msra.mxu0 0.0
    %2598 = vmatprep.subr.mxu0 0.0
    %2599 = vmatpush2.msra.mxu0 0.0
    %2600 = vmatprep.mubr.f32.mxu0 0.0
    %2601 = vmatmul.mubr.f32.gmra.mxu0 %v2184
    %v2602 = vpop.f32.mrf.mxu0
    %v2603 = vadd.f32 0.0, %v2602
    %v2604 = vpop.f32.mrf.mxu0
    %2605 = vmatprep.mubr.f32.mxu0 0.0
    %2606 = vmatmul.mubr.f32.gmra.mxu0 %v2187
    %v2607 = vpop.f32.mrf.mxu0
    %v2608 = vadd.f32 0.0, %v2607
    %v2609 = vpop.f32.mrf.mxu0
    %2610 = vmatprep.mubr.f32.mxu0 0.0
    %2611 = vmatmul.mubr.f32.gmra.mxu0 %v2190
    %v2612 = vpop.f32.mrf.mxu0
    %v2613 = vadd.f32 0.0, %v2612
    %v2614 = vpop.f32.mrf.mxu0
    %2615 = vmatprep.mubr.f32.mxu0 0.0
    %2616 = vmatmul.mubr.f32.gmra.mxu0 %v2193
    %v2617 = vpop.f32.mrf.mxu0
    %v2618 = vadd.f32 0.0, %v2617
    %v2619 = vpop.f32.mrf.mxu0
    %2620 = vmatprep.mubr.f32.mxu0 0.0
    %2621 = vmatmul.mubr.f32.gmra.mxu0 %v2196
    %v2622 = vpop.f32.mrf.mxu0
    %v2623 = vadd.f32 0.0, %v2622
    %v2624 = vpop.f32.mrf.mxu0
    %2625 = vmatprep.mubr.f32.mxu0 0.0
    %2626 = vmatmul.mubr.f32.gmra.mxu0 %v2199
    %v2627 = vpop.f32.mrf.mxu0
    %v2628 = vadd.f32 0.0, %v2627
    %v2629 = vpop.f32.mrf.mxu0
    %2630 = vmatprep.mubr.f32.mxu0 0.0
    %2631 = vmatmul.mubr.f32.gmra.mxu0 %v2202
    %v2632 = vpop.f32.mrf.mxu0
    %v2633 = vadd.f32 0.0, %v2632
    %v2634 = vpop.f32.mrf.mxu0
    %2635 = vmatprep.mubr.f32.mxu0 0.0
    %2636 = vmatmul.mubr.f32.gmra.mxu0 %v2205
    %v2637 = vpop.f32.mrf.mxu0
    %v2638 = vadd.f32 0.0, %v2637
    %v2639 = vpop.f32.mrf.mxu0
    %2640 = vmatprep.mubr.f32.mxu0 0.0
    %2641 = vmatmul.mubr.f32.gmra.mxu0 %v2208
    %v2642 = vpop.f32.mrf.mxu0
    %v2643 = vadd.f32 0.0, %v2642
    %v2644 = vpop.f32.mrf.mxu0
    %2645 = vmatprep.mubr.f32.mxu0 0.0
    %2646 = vmatmul.mubr.f32.gmra.mxu0 %v2211
    %v2647 = vpop.f32.mrf.mxu0
    %v2648 = vadd.f32 0.0, %v2647
    %v2649 = vpop.f32.mrf.mxu0
    %2650 = vmatprep.mubr.f32.mxu0 0.0
    %2651 = vmatmul.mubr.f32.gmra.mxu0 %v2214
    %v2652 = vpop.f32.mrf.mxu0
    %v2653 = vadd.f32 0.0, %v2652
    %v2654 = vpop.f32.mrf.mxu0
    %2655 = vmatprep.mubr.f32.mxu0 0.0
    %2656 = vmatmul.mubr.f32.gmra.mxu0 %v2217
    %v2657 = vpop.f32.mrf.mxu0
    %v2658 = vadd.f32 0.0, %v2657
    %v2659 = vpop.f32.mrf.mxu0
    %2660 = vmatprep.mubr.f32.mxu0 0.0
    %2661 = vmatmul.mubr.f32.gmra.mxu0 %v2220
    %v2662 = vpop.f32.mrf.mxu0
    %v2663 = vadd.f32 0.0, %v2662
    %v2664 = vpop.f32.mrf.mxu0
    %2665 = vmatprep.mubr.f32.mxu0 0.0
    %2666 = vmatmul.mubr.f32.gmra.mxu0 %v2223
    %v2667 = vpop.f32.mrf.mxu0
    %v2668 = vadd.f32 0.0, %v2667
    %v2669 = vpop.f32.mrf.mxu0
    %2670 = vmatprep.mubr.f32.mxu0 0.0
    %2671 = vmatmul.mubr.f32.gmra.mxu0 %v2226
    %v2672 = vpop.f32.mrf.mxu0
    %v2673 = vadd.f32 0.0, %v2672
    %v2674 = vpop.f32.mrf.mxu0
    %2675 = vmatprep.mubr.f32.mxu0 0.0
    %2676 = vmatmul.mubr.f32.gmra.mxu0 %v2229
    %v2677 = vpop.f32.mrf.mxu0
    %v2678 = vadd.f32 0.0, %v2677
    %v2679 = vpop.f32.mrf.mxu0
    %2680 = vmatprep.mubr.f32.mxu0 0.0
    %2681 = vmatmul.mubr.f32.gmra.mxu0 %v2232
    %v2682 = vpop.f32.mrf.mxu0
    %v2683 = vadd.f32 0.0, %v2682
    %v2684 = vpop.f32.mrf.mxu0
    %2685 = vmatprep.mubr.f32.mxu0 0.0
    %2686 = vmatmul.mubr.f32.gmra.mxu0 %v2235
    %v2687 = vpop.f32.mrf.mxu0
    %v2688 = vadd.f32 0.0, %v2687
    %v2689 = vpop.f32.mrf.mxu0
    %2690 = vmatprep.mubr.f32.mxu0 0.0
    %2691 = vmatmul.mubr.f32.gmra.mxu0 %v2238
    %v2692 = vpop.f32.mrf.mxu0
    %v2693 = vadd.f32 0.0, %v2692
    %v2694 = vpop.f32.mrf.mxu0
    %2695 = vmatprep.mubr.f32.mxu0 0.0
    %2696 = vmatmul.mubr.f32.gmra.mxu0 %v2241
    %v2697 = vpop.f32.mrf.mxu0
    %v2698 = vadd.f32 0.0, %v2697
    %v2699 = vpop.f32.mrf.mxu0
    %2700 = vmatprep.mubr.f32.mxu0 0.0
    %2701 = vmatmul.mubr.f32.gmra.mxu0 %v2244
    %v2702 = vpop.f32.mrf.mxu0
    %v2703 = vadd.f32 0.0, %v2702
    %v2704 = vpop.f32.mrf.mxu0
    %2705 = vmatprep.mubr.f32.mxu0 0.0
    %2706 = vmatmul.mubr.f32.gmra.mxu0 %v2247
    %v2707 = vpop.f32.mrf.mxu0
    %v2708 = vadd.f32 0.0, %v2707
    %v2709 = vpop.f32.mrf.mxu0
    %2710 = vmatprep.mubr.f32.mxu0 0.0
    %2711 = vmatmul.mubr.f32.gmra.mxu0 %v2250
    %v2712 = vpop.f32.mrf.mxu0
    %v2713 = vadd.f32 0.0, %v2712
    %v2714 = vpop.f32.mrf.mxu0
    %2715 = vmatprep.mubr.f32.mxu0 0.0
    %2716 = vmatmul.mubr.f32.gmra.mxu0 %v2253
    %v2717 = vpop.f32.mrf.mxu0
    %v2718 = vadd.f32 0.0, %v2717
    %v2719 = vpop.f32.mrf.mxu0
    %2720 = vmatprep.mubr.f32.mxu0 0.0
    %2721 = vmatmul.mubr.f32.gmra.mxu0 %v2256
    %v2722 = vpop.f32.mrf.mxu0
    %v2723 = vadd.f32 0.0, %v2722
    %v2724 = vpop.f32.mrf.mxu0
    %2725 = vmatprep.mubr.f32.mxu0 0.0
    %2726 = vmatmul.mubr.f32.gmra.mxu0 %v2259
    %v2727 = vpop.f32.mrf.mxu0
    %v2728 = vadd.f32 0.0, %v2727
    %v2729 = vpop.f32.mrf.mxu0
    %2730 = vmatprep.mubr.f32.mxu0 0.0
    %2731 = vmatmul.mubr.f32.gmra.mxu0 %v2262
    %v2732 = vpop.f32.mrf.mxu0
    %v2733 = vadd.f32 0.0, %v2732
    %v2734 = vpop.f32.mrf.mxu0
    %2735 = vmatprep.mubr.f32.mxu0 0.0
    %2736 = vmatmul.mubr.f32.gmra.mxu0 %v2265
    %v2737 = vpop.f32.mrf.mxu0
    %v2738 = vadd.f32 0.0, %v2737
    %v2739 = vpop.f32.mrf.mxu0
    %2740 = vmatprep.mubr.f32.mxu0 0.0
    %2741 = vmatmul.mubr.f32.gmra.mxu0 %v2268
    %v2742 = vpop.f32.mrf.mxu0
    %v2743 = vadd.f32 0.0, %v2742
    %v2744 = vpop.f32.mrf.mxu0
    %2745 = vmatprep.mubr.f32.mxu0 0.0
    %2746 = vmatmul.mubr.f32.gmra.mxu0 %v2271
    %v2747 = vpop.f32.mrf.mxu0
    %v2748 = vadd.f32 0.0, %v2747
    %v2749 = vpop.f32.mrf.mxu0
    %2750 = vmatprep.mubr.f32.mxu0 0.0
    %2751 = vmatmul.mubr.f32.gmra.mxu0 %v2274
    %v2752 = vpop.f32.mrf.mxu0
    %v2753 = vadd.f32 0.0, %v2752
    %v2754 = vpop.f32.mrf.mxu0
    %2755 = vmatprep.mubr.f32.mxu0 0.0
    %2756 = vmatmul.mubr.f32.gmra.mxu0 %v2277
    %v2757 = vpop.f32.mrf.mxu0
    %v2758 = vadd.f32 0.0, %v2757
    %v2759 = vpop.f32.mrf.mxu0
    %2760 = vdwg.mxu0
    %v2761 = vmul.f32 %v1830, %v2346
    %v2762 = vmul.f32 %v1835, %v2352
    %v2763 = vmul.f32 %v1840, %v2358
    %v2764 = vmul.f32 %v1845, %v2364
    %v2765 = vmul.f32 %v1850, %v2370
    %v2766 = vmul.f32 %v1855, %v2376
    %v2767 = vmul.f32 %v1860, %v2382
    %v2768 = vmul.f32 %v1865, %v2388
    %v2769 = vmul.f32 %v1870, %v2394
    %v2770 = vmul.f32 %v1875, %v2400
    %v2771 = vmul.f32 %v1880, %v2406
    %v2772 = vmul.f32 %v1885, %v2412
    %v2773 = vmul.f32 %v1890, %v2418
    %v2774 = vmul.f32 %v1895, %v2424
    %v2775 = vmul.f32 %v1900, %v2430
    %v2776 = vmul.f32 %v1905, %v2436
    %v2777 = vmul.f32 %v1910, %v2442
    %v2778 = vmul.f32 %v1915, %v2448
    %v2779 = vmul.f32 %v1920, %v2454
    %v2780 = vmul.f32 %v1925, %v2460
    %v2781 = vmul.f32 %v1930, %v2466
    %v2782 = vmul.f32 %v1935, %v2472
    %v2783 = vmul.f32 %v1940, %v2478
    %v2784 = vmul.f32 %v1945, %v2484
    %v2785 = vmul.f32 %v1950, %v2490
    %v2786 = vmul.f32 %v1955, %v2496
    %v2787 = vmul.f32 %v1960, %v2502
    %v2788 = vmul.f32 %v1965, %v2508
    %v2789 = vmul.f32 %v1970, %v2514
    %v2790 = vmul.f32 %v1975, %v2520
    %v2791 = vmul.f32 %v1980, %v2526
    %v2792 = vmul.f32 %v1985, %v2532
    %2793 = vadd.xlane.f32.xlu0 %v2761
    %v2794 = vpop.xlane.xlu0 %2793
    %2795 = vadd.xlane.f32.xlu0 %v2762
    %v2796 = vpop.xlane.xlu0 %2795
    %2797 = vadd.xlane.f32.xlu0 %v2763
    %v2798 = vpop.xlane.xlu0 %2797
    %2799 = vadd.xlane.f32.xlu0 %v2764
    %v2800 = vpop.xlane.xlu0 %2799
    %2801 = vadd.xlane.f32.xlu0 %v2765
    %v2802 = vpop.xlane.xlu0 %2801
    %2803 = vadd.xlane.f32.xlu0 %v2766
    %v2804 = vpop.xlane.xlu0 %2803
    %2805 = vadd.xlane.f32.xlu0 %v2767
    %v2806 = vpop.xlane.xlu0 %2805
    %2807 = vadd.xlane.f32.xlu0 %v2768
    %v2808 = vpop.xlane.xlu0 %2807
    %2809 = vadd.xlane.f32.xlu0 %v2769
    %v2810 = vpop.xlane.xlu0 %2809
    %2811 = vadd.xlane.f32.xlu0 %v2770
    %v2812 = vpop.xlane.xlu0 %2811
    %2813 = vadd.xlane.f32.xlu0 %v2771
    %v2814 = vpop.xlane.xlu0 %2813
    %2815 = vadd.xlane.f32.xlu0 %v2772
    %v2816 = vpop.xlane.xlu0 %2815
    %2817 = vadd.xlane.f32.xlu0 %v2773
    %v2818 = vpop.xlane.xlu0 %2817
    %2819 = vadd.xlane.f32.xlu0 %v2774
    %v2820 = vpop.xlane.xlu0 %2819
    %2821 = vadd.xlane.f32.xlu0 %v2775
    %v2822 = vpop.xlane.xlu0 %2821
    %2823 = vadd.xlane.f32.xlu0 %v2776
    %v2824 = vpop.xlane.xlu0 %2823
    %2825 = vadd.xlane.f32.xlu0 %v2777
    %v2826 = vpop.xlane.xlu0 %2825
    %2827 = vadd.xlane.f32.xlu0 %v2778
    %v2828 = vpop.xlane.xlu0 %2827
    %2829 = vadd.xlane.f32.xlu0 %v2779
    %v2830 = vpop.xlane.xlu0 %2829
    %2831 = vadd.xlane.f32.xlu0 %v2780
    %v2832 = vpop.xlane.xlu0 %2831
    %2833 = vadd.xlane.f32.xlu0 %v2781
    %v2834 = vpop.xlane.xlu0 %2833
    %2835 = vadd.xlane.f32.xlu0 %v2782
    %v2836 = vpop.xlane.xlu0 %2835
    %2837 = vadd.xlane.f32.xlu0 %v2783
    %v2838 = vpop.xlane.xlu0 %2837
    %2839 = vadd.xlane.f32.xlu0 %v2784
    %v2840 = vpop.xlane.xlu0 %2839
    %2841 = vadd.xlane.f32.xlu0 %v2785
    %v2842 = vpop.xlane.xlu0 %2841
    %2843 = vadd.xlane.f32.xlu0 %v2786
    %v2844 = vpop.xlane.xlu0 %2843
    %2845 = vadd.xlane.f32.xlu0 %v2787
    %v2846 = vpop.xlane.xlu0 %2845
    %2847 = vadd.xlane.f32.xlu0 %v2788
    %v2848 = vpop.xlane.xlu0 %2847
    %2849 = vadd.xlane.f32.xlu0 %v2789
    %v2850 = vpop.xlane.xlu0 %2849
    %2851 = vadd.xlane.f32.xlu0 %v2790
    %v2852 = vpop.xlane.xlu0 %2851
    %2853 = vadd.xlane.f32.xlu0 %v2791
    %v2854 = vpop.xlane.xlu0 %2853
    %2855 = vadd.xlane.f32.xlu0 %v2792
    %v2856 = vpop.xlane.xlu0 %2855
    %v2857 = vmul.f32 %v1830, %v2348
    %v2858 = vmul.f32 %v1835, %v2354
    %v2859 = vmul.f32 %v1840, %v2360
    %v2860 = vmul.f32 %v1845, %v2366
    %v2861 = vmul.f32 %v1850, %v2372
    %v2862 = vmul.f32 %v1855, %v2378
    %v2863 = vmul.f32 %v1860, %v2384
    %v2864 = vmul.f32 %v1865, %v2390
    %v2865 = vmul.f32 %v1870, %v2396
    %v2866 = vmul.f32 %v1875, %v2402
    %v2867 = vmul.f32 %v1880, %v2408
    %v2868 = vmul.f32 %v1885, %v2414
    %v2869 = vmul.f32 %v1890, %v2420
    %v2870 = vmul.f32 %v1895, %v2426
    %v2871 = vmul.f32 %v1900, %v2432
    %v2872 = vmul.f32 %v1905, %v2438
    %v2873 = vmul.f32 %v1910, %v2444
    %v2874 = vmul.f32 %v1915, %v2450
    %v2875 = vmul.f32 %v1920, %v2456
    %v2876 = vmul.f32 %v1925, %v2462
    %v2877 = vmul.f32 %v1930, %v2468
    %v2878 = vmul.f32 %v1935, %v2474
    %v2879 = vmul.f32 %v1940, %v2480
    %v2880 = vmul.f32 %v1945, %v2486
    %v2881 = vmul.f32 %v1950, %v2492
    %v2882 = vmul.f32 %v1955, %v2498
    %v2883 = vmul.f32 %v1960, %v2504
    %v2884 = vmul.f32 %v1965, %v2510
    %v2885 = vmul.f32 %v1970, %v2516
    %v2886 = vmul.f32 %v1975, %v2522
    %v2887 = vmul.f32 %v1980, %v2528
    %v2888 = vmul.f32 %v1985, %v2534
    %2889 = vadd.xlane.f32.xlu0 %v2857
    %v2890 = vpop.xlane.xlu0 %2889
    %2891 = vadd.xlane.f32.xlu0 %v2858
    %v2892 = vpop.xlane.xlu0 %2891
    %2893 = vadd.xlane.f32.xlu0 %v2859
    %v2894 = vpop.xlane.xlu0 %2893
    %2895 = vadd.xlane.f32.xlu0 %v2860
    %v2896 = vpop.xlane.xlu0 %2895
    %2897 = vadd.xlane.f32.xlu0 %v2861
    %v2898 = vpop.xlane.xlu0 %2897
    %2899 = vadd.xlane.f32.xlu0 %v2862
    %v2900 = vpop.xlane.xlu0 %2899
    %2901 = vadd.xlane.f32.xlu0 %v2863
    %v2902 = vpop.xlane.xlu0 %2901
    %2903 = vadd.xlane.f32.xlu0 %v2864
    %v2904 = vpop.xlane.xlu0 %2903
    %2905 = vadd.xlane.f32.xlu0 %v2865
    %v2906 = vpop.xlane.xlu0 %2905
    %2907 = vadd.xlane.f32.xlu0 %v2866
    %v2908 = vpop.xlane.xlu0 %2907
    %2909 = vadd.xlane.f32.xlu0 %v2867
    %v2910 = vpop.xlane.xlu0 %2909
    %2911 = vadd.xlane.f32.xlu0 %v2868
    %v2912 = vpop.xlane.xlu0 %2911
    %2913 = vadd.xlane.f32.xlu0 %v2869
    %v2914 = vpop.xlane.xlu0 %2913
    %2915 = vadd.xlane.f32.xlu0 %v2870
    %v2916 = vpop.xlane.xlu0 %2915
    %2917 = vadd.xlane.f32.xlu0 %v2871
    %v2918 = vpop.xlane.xlu0 %2917
    %2919 = vadd.xlane.f32.xlu0 %v2872
    %v2920 = vpop.xlane.xlu0 %2919
    %2921 = vadd.xlane.f32.xlu0 %v2873
    %v2922 = vpop.xlane.xlu0 %2921
    %2923 = vadd.xlane.f32.xlu0 %v2874
    %v2924 = vpop.xlane.xlu0 %2923
    %2925 = vadd.xlane.f32.xlu0 %v2875
    %v2926 = vpop.xlane.xlu0 %2925
    %2927 = vadd.xlane.f32.xlu0 %v2876
    %v2928 = vpop.xlane.xlu0 %2927
    %2929 = vadd.xlane.f32.xlu0 %v2877
    %v2930 = vpop.xlane.xlu0 %2929
    %2931 = vadd.xlane.f32.xlu0 %v2878
    %v2932 = vpop.xlane.xlu0 %2931
    %2933 = vadd.xlane.f32.xlu0 %v2879
    %v2934 = vpop.xlane.xlu0 %2933
    %2935 = vadd.xlane.f32.xlu0 %v2880
    %v2936 = vpop.xlane.xlu0 %2935
    %2937 = vadd.xlane.f32.xlu0 %v2881
    %v2938 = vpop.xlane.xlu0 %2937
    %2939 = vadd.xlane.f32.xlu0 %v2882
    %v2940 = vpop.xlane.xlu0 %2939
    %2941 = vadd.xlane.f32.xlu0 %v2883
    %v2942 = vpop.xlane.xlu0 %2941
    %2943 = vadd.xlane.f32.xlu0 %v2884
    %v2944 = vpop.xlane.xlu0 %2943
    %2945 = vadd.xlane.f32.xlu0 %v2885
    %v2946 = vpop.xlane.xlu0 %2945
    %2947 = vadd.xlane.f32.xlu0 %v2886
    %v2948 = vpop.xlane.xlu0 %2947
    %2949 = vadd.xlane.f32.xlu0 %v2887
    %v2950 = vpop.xlane.xlu0 %2949
    %2951 = vadd.xlane.f32.xlu0 %v2888
    %v2952 = vpop.xlane.xlu0 %2951
    %v2953 = vmul.f32 %v2794, %v2346
    %v2954 = vmul.f32 %v2796, %v2352
    %v2955 = vmul.f32 %v2798, %v2358
    %v2956 = vmul.f32 %v2800, %v2364
    %v2957 = vmul.f32 %v2802, %v2370
    %v2958 = vmul.f32 %v2804, %v2376
    %v2959 = vmul.f32 %v2806, %v2382
    %v2960 = vmul.f32 %v2808, %v2388
    %v2961 = vmul.f32 %v2810, %v2394
    %v2962 = vmul.f32 %v2812, %v2400
    %v2963 = vmul.f32 %v2814, %v2406
    %v2964 = vmul.f32 %v2816, %v2412
    %v2965 = vmul.f32 %v2818, %v2418
    %v2966 = vmul.f32 %v2820, %v2424
    %v2967 = vmul.f32 %v2822, %v2430
    %v2968 = vmul.f32 %v2824, %v2436
    %v2969 = vmul.f32 %v2826, %v2442
    %v2970 = vmul.f32 %v2828, %v2448
    %v2971 = vmul.f32 %v2830, %v2454
    %v2972 = vmul.f32 %v2832, %v2460
    %v2973 = vmul.f32 %v2834, %v2466
    %v2974 = vmul.f32 %v2836, %v2472
    %v2975 = vmul.f32 %v2838, %v2478
    %v2976 = vmul.f32 %v2840, %v2484
    %v2977 = vmul.f32 %v2842, %v2490
    %v2978 = vmul.f32 %v2844, %v2496
    %v2979 = vmul.f32 %v2846, %v2502
    %v2980 = vmul.f32 %v2848, %v2508
    %v2981 = vmul.f32 %v2850, %v2514
    %v2982 = vmul.f32 %v2852, %v2520
    %v2983 = vmul.f32 %v2854, %v2526
    %v2984 = vmul.f32 %v2856, %v2532
    %v2985 = vmul.f32 %v2890, %v2348
    %v2986 = vmul.f32 %v2892, %v2354
    %v2987 = vmul.f32 %v2894, %v2360
    %v2988 = vmul.f32 %v2896, %v2366
    %v2989 = vmul.f32 %v2898, %v2372
    %v2990 = vmul.f32 %v2900, %v2378
    %v2991 = vmul.f32 %v2902, %v2384
    %v2992 = vmul.f32 %v2904, %v2390
    %v2993 = vmul.f32 %v2906, %v2396
    %v2994 = vmul.f32 %v2908, %v2402
    %v2995 = vmul.f32 %v2910, %v2408
    %v2996 = vmul.f32 %v2912, %v2414
    %v2997 = vmul.f32 %v2914, %v2420
    %v2998 = vmul.f32 %v2916, %v2426
    %v2999 = vmul.f32 %v2918, %v2432
    %v3000 = vmul.f32 %v2920, %v2438
    %v3001 = vmul.f32 %v2922, %v2444
    %v3002 = vmul.f32 %v2924, %v2450
    %v3003 = vmul.f32 %v2926, %v2456
    %v3004 = vmul.f32 %v2928, %v2462
    %v3005 = vmul.f32 %v2930, %v2468
    %v3006 = vmul.f32 %v2932, %v2474
    %v3007 = vmul.f32 %v2934, %v2480
    %v3008 = vmul.f32 %v2936, %v2486
    %v3009 = vmul.f32 %v2938, %v2492
    %v3010 = vmul.f32 %v2940, %v2498
    %v3011 = vmul.f32 %v2942, %v2504
    %v3012 = vmul.f32 %v2944, %v2510
    %v3013 = vmul.f32 %v2946, %v2516
    %v3014 = vmul.f32 %v2948, %v2522
    %v3015 = vmul.f32 %v2950, %v2528
    %v3016 = vmul.f32 %v2952, %v2534
    %v3017 = vsub.f32 %v2953, %v2985
    %v3018 = vsub.f32 %v2954, %v2986
    %v3019 = vsub.f32 %v2955, %v2987
    %v3020 = vsub.f32 %v2956, %v2988
    %v3021 = vsub.f32 %v2957, %v2989
    %v3022 = vsub.f32 %v2958, %v2990
    %v3023 = vsub.f32 %v2959, %v2991
    %v3024 = vsub.f32 %v2960, %v2992
    %v3025 = vsub.f32 %v2961, %v2993
    %v3026 = vsub.f32 %v2962, %v2994
    %v3027 = vsub.f32 %v2963, %v2995
    %v3028 = vsub.f32 %v2964, %v2996
    %v3029 = vsub.f32 %v2965, %v2997
    %v3030 = vsub.f32 %v2966, %v2998
    %v3031 = vsub.f32 %v2967, %v2999
    %v3032 = vsub.f32 %v2968, %v3000
    %v3033 = vsub.f32 %v2969, %v3001
    %v3034 = vsub.f32 %v2970, %v3002
    %v3035 = vsub.f32 %v2971, %v3003
    %v3036 = vsub.f32 %v2972, %v3004
    %v3037 = vsub.f32 %v2973, %v3005
    %v3038 = vsub.f32 %v2974, %v3006
    %v3039 = vsub.f32 %v2975, %v3007
    %v3040 = vsub.f32 %v2976, %v3008
    %v3041 = vsub.f32 %v2977, %v3009
    %v3042 = vsub.f32 %v2978, %v3010
    %v3043 = vsub.f32 %v2979, %v3011
    %v3044 = vsub.f32 %v2980, %v3012
    %v3045 = vsub.f32 %v2981, %v3013
    %v3046 = vsub.f32 %v2982, %v3014
    %v3047 = vsub.f32 %v2983, %v3015
    %v3048 = vsub.f32 %v2984, %v3016
    %v3049 = vadd.f32 %v3017, %v2603
    %v3050 = vadd.f32 %v3018, %v2608
    %v3051 = vadd.f32 %v3019, %v2613
    %v3052 = vadd.f32 %v3020, %v2618
    %v3053 = vadd.f32 %v3021, %v2623
    %v3054 = vadd.f32 %v3022, %v2628
    %v3055 = vadd.f32 %v3023, %v2633
    %v3056 = vadd.f32 %v3024, %v2638
    %v3057 = vadd.f32 %v3025, %v2643
    %v3058 = vadd.f32 %v3026, %v2648
    %v3059 = vadd.f32 %v3027, %v2653
    %v3060 = vadd.f32 %v3028, %v2658
    %v3061 = vadd.f32 %v3029, %v2663
    %v3062 = vadd.f32 %v3030, %v2668
    %v3063 = vadd.f32 %v3031, %v2673
    %v3064 = vadd.f32 %v3032, %v2678
    %v3065 = vadd.f32 %v3033, %v2683
    %v3066 = vadd.f32 %v3034, %v2688
    %v3067 = vadd.f32 %v3035, %v2693
    %v3068 = vadd.f32 %v3036, %v2698
    %v3069 = vadd.f32 %v3037, %v2703
    %v3070 = vadd.f32 %v3038, %v2708
    %v3071 = vadd.f32 %v3039, %v2713
    %v3072 = vadd.f32 %v3040, %v2718
    %v3073 = vadd.f32 %v3041, %v2723
    %v3074 = vadd.f32 %v3042, %v2728
    %v3075 = vadd.f32 %v3043, %v2733
    %v3076 = vadd.f32 %v3044, %v2738
    %v3077 = vadd.f32 %v3045, %v2743
    %v3078 = vadd.f32 %v3046, %v2748
    %v3079 = vadd.f32 %v3047, %v2753
    %v3080 = vadd.f32 %v3048, %v2758
    %v3081 = vadd.s32 %v96, 128
    %v3082 = vmul.u32 %v1989, 16
    %v3083 = vmul.u32 %v1990, 16
    %vm3084 = vcmp.ge.s32.totalorder %v96, %v3082
    %vm3085 = vcmp.ge.s32.totalorder %v3081, %v3082
    %vm3086 = vcmp.ge.s32.totalorder %v96, %v3083
    %vm3087 = vcmp.ge.s32.totalorder %v3081, %v3083
    %v3088 = vadd.s32 %v3082, 16
    %v3089 = vadd.s32 %v3083, 16
    %vm3090 = vcmp.lt.s32.totalorder %v96, %v3088
    %vm3091 = vcmp.lt.s32.totalorder %v3081, %v3088
    %vm3092 = vcmp.lt.s32.totalorder %v96, %v3089
    %vm3093 = vcmp.lt.s32.totalorder %v3081, %v3089
    %vm3094 = vmand %vm3084, %vm3090
    %vm3095 = vmand %vm3085, %vm3091
    %vm3096 = vmand %vm3086, %vm3092
    %vm3097 = vmand %vm3087, %vm3093
    %v3098 = vsel %vm3094, 1, 0
    %v3099 = vsel %vm3095, 1, 0
    %v3100 = vsel %vm3096, 1, 0
    %v3101 = vsel %vm3097, 1, 0
    %v3102 = vcvt.s32.f32 %v3098
    %v3103 = vcvt.s32.f32 %v3099
    %v3104 = vcvt.s32.f32 %v3100
    %v3105 = vcvt.s32.f32 %v3101
    %v3106 = vmul.f32 %v3049, %v3049
    %v3107 = vmul.f32 %v3050, %v3050
    %v3108 = vmul.f32 %v3051, %v3051
    %v3109 = vmul.f32 %v3052, %v3052
    %v3110 = vmul.f32 %v3053, %v3053
    %v3111 = vmul.f32 %v3054, %v3054
    %v3112 = vmul.f32 %v3055, %v3055
    %v3113 = vmul.f32 %v3056, %v3056
    %v3114 = vmul.f32 %v3057, %v3057
    %v3115 = vmul.f32 %v3058, %v3058
    %v3116 = vmul.f32 %v3059, %v3059
    %v3117 = vmul.f32 %v3060, %v3060
    %v3118 = vmul.f32 %v3061, %v3061
    %v3119 = vmul.f32 %v3062, %v3062
    %v3120 = vmul.f32 %v3063, %v3063
    %v3121 = vmul.f32 %v3064, %v3064
    %v3122 = vmul.f32 %v3065, %v3065
    %v3123 = vmul.f32 %v3066, %v3066
    %v3124 = vmul.f32 %v3067, %v3067
    %v3125 = vmul.f32 %v3068, %v3068
    %v3126 = vmul.f32 %v3069, %v3069
    %v3127 = vmul.f32 %v3070, %v3070
    %v3128 = vmul.f32 %v3071, %v3071
    %v3129 = vmul.f32 %v3072, %v3072
    %v3130 = vmul.f32 %v3073, %v3073
    %v3131 = vmul.f32 %v3074, %v3074
    %v3132 = vmul.f32 %v3075, %v3075
    %v3133 = vmul.f32 %v3076, %v3076
    %v3134 = vmul.f32 %v3077, %v3077
    %v3135 = vmul.f32 %v3078, %v3078
    %v3136 = vmul.f32 %v3079, %v3079
    %v3137 = vmul.f32 %v3080, %v3080
    %3138 = vmatprep.subr.mxu0 0.0
    %3139 = vmatpush1.msra.mxu0 %v3121
    %3140 = vmatprep.subr.mxu0 0.0
    %3141 = vmatpush1.msra.mxu0 %v3120
    %3142 = vmatprep.subr.mxu0 0.0
    %3143 = vmatpush1.msra.mxu0 %v3119
    %3144 = vmatprep.subr.mxu0 0.0
    %3145 = vmatpush1.msra.mxu0 %v3118
    %3146 = vmatprep.subr.mxu0 0.0
    %3147 = vmatpush1.msra.mxu0 %v3117
    %3148 = vmatprep.subr.mxu0 0.0
    %3149 = vmatpush1.msra.mxu0 %v3116
    %3150 = vmatprep.subr.mxu0 0.0
    %3151 = vmatpush1.msra.mxu0 %v3115
    %3152 = vmatprep.subr.mxu0 0.0
    %3153 = vmatpush1.msra.mxu0 %v3114
    %3154 = vmatprep.subr.mxu0 0.0
    %3155 = vmatpush1.msra.mxu0 %v3113
    %3156 = vmatprep.subr.mxu0 0.0
    %3157 = vmatpush1.msra.mxu0 %v3112
    %3158 = vmatprep.subr.mxu0 0.0
    %3159 = vmatpush1.msra.mxu0 %v3111
    %3160 = vmatprep.subr.mxu0 0.0
    %3161 = vmatpush1.msra.mxu0 %v3110
    %3162 = vmatprep.subr.mxu0 0.0
    %3163 = vmatpush1.msra.mxu0 %v3109
    %3164 = vmatprep.subr.mxu0 0.0
    %3165 = vmatpush1.msra.mxu0 %v3108
    %3166 = vmatprep.subr.mxu0 0.0
    %3167 = vmatpush1.msra.mxu0 %v3107
    %3168 = vmatprep.subr.mxu0 0.0
    %3169 = vmatpush1.msra.mxu0 %v3106
    %3170 = vmatprep.subr.mxu0 0.0
    %3171 = vmatpush2.msra.mxu0 %v3137
    %3172 = vmatprep.subr.mxu0 0.0
    %3173 = vmatpush2.msra.mxu0 %v3136
    %3174 = vmatprep.subr.mxu0 0.0
    %3175 = vmatpush2.msra.mxu0 %v3135
    %3176 = vmatprep.subr.mxu0 0.0
    %3177 = vmatpush2.msra.mxu0 %v3134
    %3178 = vmatprep.subr.mxu0 0.0
    %3179 = vmatpush2.msra.mxu0 %v3133
    %3180 = vmatprep.subr.mxu0 0.0
    %3181 = vmatpush2.msra.mxu0 %v3132
    %3182 = vmatprep.subr.mxu0 0.0
    %3183 = vmatpush2.msra.mxu0 %v3131
    %3184 = vmatprep.subr.mxu0 0.0
    %3185 = vmatpush2.msra.mxu0 %v3130
    %3186 = vmatprep.subr.mxu0 0.0
    %3187 = vmatpush2.msra.mxu0 %v3129
    %3188 = vmatprep.subr.mxu0 0.0
    %3189 = vmatpush2.msra.mxu0 %v3128
    %3190 = vmatprep.subr.mxu0 0.0
    %3191 = vmatpush2.msra.mxu0 %v3127
    %3192 = vmatprep.subr.mxu0 0.0
    %3193 = vmatpush2.msra.mxu0 %v3126
    %3194 = vmatprep.subr.mxu0 0.0
    %3195 = vmatpush2.msra.mxu0 %v3125
    %3196 = vmatprep.subr.mxu0 0.0
    %3197 = vmatpush2.msra.mxu0 %v3124
    %3198 = vmatprep.subr.mxu0 0.0
    %3199 = vmatpush2.msra.mxu0 %v3123
    %3200 = vmatprep.subr.mxu0 0.0
    %3201 = vmatpush2.msra.mxu0 %v3122
    %3202 = vmatprep.mubr.f32.mxu0 %v3103
    %3203 = vmatmul.mubr.f32.gmra.mxu0 %v3102
    %v3204 = vpop.f32.mrf.mxu0
    %v3205 = vadd.f32 0.0, %v3204
    %v3206 = vpop.f32.mrf.mxu0
    %3207 = vmatprep.mubr.f32.mxu0 %v3105
    %3208 = vmatmul.mubr.f32.gmra.mxu0 %v3104
    %v3209 = vpop.f32.mrf.mxu0
    %v3210 = vadd.f32 0.0, %v3209
    %v3211 = vpop.f32.mrf.mxu0
    %3212 = vdwg.mxu0
    %3213 = vadd.xlane.f32.xlu0 %v3205
    %v3214 = vpop.xlane.xlu0 %3213
    %3215 = vadd.xlane.f32.xlu0 %v3210
    %v3216 = vpop.xlane.xlu0 %3215
    %v3217 = vsub.f32 0.0, %v3214
    %v3218 = vsub.f32 0.0, %v3216
    %v3219 = vmul.f32 %v3217, 0.0625
    %v3220 = vmul.f32 %v3218, 0.0625
    %3221 = vst [vmem:[#allocation10] sm:$0xff] %v3219
    %3222 = vst [vmem:[#allocation10 + $0x8] sm:$0xff] %v3220
    // Predicated region
    $region66: #{tpu_custom_call.1} parent=1 // pred_check
      _
    $region67: #{tpu_custom_call.1} parent=1 // pred_check_branch
      %3224 = sbr.rel (0) target = $region69
    $region68: #{tpu_custom_call.1} parent=1 // pred_region
      %s3226 = ssub.s32 256, 256
      %3227 = vsyncadd [#allocation4], %s3226
      %s3228 = sshll.u32 [#allocation10], 4
      %s3229 = int_to_ptr.vmem [resolvable:$true] %s3228
      %3234 = dma.vmem_to_hbm [thread:$0]  %s3229, 256, %s12, [#allocation4], 128, 128, 8
    $region69: #{tpu_custom_call.1} parent=1 // pred_fallthru
      _
    // Predicated region
    $region70: #{tpu_custom_call.1} parent=1 // pred_check
      _
    $region71: #{tpu_custom_call.1} parent=1 // pred_check_branch
      %3236 = sbr.rel (0) target = $region73
    $region72: #{tpu_custom_call.1} parent=1 // pred_region
      %3237 = dma.done [#allocation4], 256
    $region73: #{tpu_custom_call.1} parent=1 // pred_fallthru
      _
    %3238 = vsyncpa [#allocation3], 1
    %3239 = vsyncpa [#allocation6], 1
    %3240 = vsyncpa [#allocation9], 1
    %3241 = vsyncpa [#allocation4], 1

</llo_original>
